<compile_context>
chip_gen: v7x
topology: tpu7x:2x2x1
jax: 0.10.0
libtpu: 0.0.40
codegen_flags: <defaults>
</compile_context>

<pallas_src>
import functools
import numpy as np
import jax
import jax.numpy as jnp
from jax.experimental import pallas as pl
from jax.experimental.pallas import tpu as pltpu

EPS_NORM = 1e-8
HI = jax.lax.Precision.HIGHEST


def _round_up(x, m):
    return (x + m - 1) // m * m


# ---------------------------------------------------------------------------
# Pallas kernels (each is the full fused GVP for one row-tile)
# ---------------------------------------------------------------------------

def _gvp_vec_kernel(*refs, scalar_act, vector_act, vector_gate, use_bf16):
    """Fused GVP with vi>0, vo>0.  Coordinate planes stacked along rows."""
    if vector_gate:
        (s_ref, v_ref, whT_ref, wssT_ref, wshT_ref, wsb_ref,
         wvT_ref, wsvT_ref, wsvb_ref, s_out_ref, v_out_ref) = refs
    else:
        (s_ref, v_ref, whT_ref, wssT_ref, wshT_ref, wsb_ref,
         wvT_ref, s_out_ref, v_out_ref) = refs

    tn, vi = v_ref.shape[1], v_ref.shape[2]
    mm_prec = None if use_bf16 else HI

    # (3, tn, vi) -> (3*tn, vi): sublane-aligned merge (tn % 8 == 0), no copy,
    # one MXU pass instead of three tiny ones.
    vflat = v_ref[...].reshape(3 * tn, vi)
    if use_bf16:
        vflat = vflat.astype(jnp.bfloat16)
    hall = jnp.dot(vflat, whT_ref[...],
                   preferred_element_type=jnp.float32, precision=mm_prec)   # (3tn, h)
    h3 = hall.reshape(3, tn, hall.shape[-1])                                # free split

    # _norm_no_nan over the coordinate axis (VPU only)
    vn = jnp.sqrt(jnp.maximum(h3[0] * h3[0] + h3[1] * h3[1] + h3[2] * h3[2],
                              EPS_NORM))                                    # (tn, h)

    # ws(cat([s, vn])) as two split-K matmuls -> no lane-axis concat
    s_new = (jnp.dot(s_ref[...], wssT_ref[...],
                     preferred_element_type=jnp.float32, precision=HI)
             + jnp.dot(vn, wshT_ref[...],
                       preferred_element_type=jnp.float32, precision=HI)
             + wsb_ref[...])                                                # (tn, so)

    hall_mm = hall.astype(jnp.bfloat16) if use_bf16 else hall
    vout = jnp.dot(hall_mm, wvT_ref[...],
                   preferred_element_type=jnp.float32, precision=mm_prec)   # (3tn, vo)
    v3 = vout.reshape(3, tn, vout.shape[-1])

    if vector_gate:
        gate_in = jax.nn.sigmoid(s_new) if vector_act else s_new
        gate = jax.nn.sigmoid(
            jnp.dot(gate_in, wsvT_ref[...],
                    preferred_element_type=jnp.float32, precision=HI)
            + wsvb_ref[...])                                                # (tn, vo)
        v3 = v3 * gate[None]
    elif vector_act:
        nrm = jnp.sqrt(jnp.maximum(v3[0] * v3[0] + v3[1] * v3[1] + v3[2] * v3[2],
                                   EPS_NORM))
        v3 = v3 * jax.nn.sigmoid(nrm)[None]

    if scalar_act:
        s_new = jnp.maximum(s_new, 0.0)

    s_out_ref[...] = s_new
    v_out_ref[...] = v3          # single (3, tn, vo) store (no per-plane stores)


def _gvp_novec_kernel(s_ref, v_ref, whT_ref, wssT_ref, wshT_ref, wsb_ref,
                      s_out_ref, *, scalar_act, use_bf16):
    """Fused GVP with vi>0, vo==0 (scalar output only)."""
    tn, vi = v_ref.shape[1], v_ref.shape[2]
    mm_prec = None if use_bf16 else HI
    vflat = v_ref[...].reshape(3 * tn, vi)
    if use_bf16:
        vflat = vflat.astype(jnp.bfloat16)
    hall = jnp.dot(vflat, whT_ref[...],
                   preferred_element_type=jnp.float32, precision=mm_prec)
    h3 = hall.reshape(3, tn, hall.shape[-1])
    vn = jnp.sqrt(jnp.maximum(h3[0] * h3[0] + h3[1] * h3[1] + h3[2] * h3[2],
                              EPS_NORM))
    s_new = (jnp.dot(s_ref[...], wssT_ref[...],
                     preferred_element_type=jnp.float32, precision=HI)
             + jnp.dot(vn, wshT_ref[...],
                       preferred_element_type=jnp.float32, precision=HI)
             + wsb_ref[...])
    if scalar_act:
        s_new = jnp.maximum(s_new, 0.0)
    s_out_ref[...] = s_new


def _linear_kernel(s_ref, wT_ref, b_ref, out_ref, *, scalar_act):
    """GVP with vi==0: plain Linear (+ optional ReLU)."""
    out = (jnp.dot(s_ref[...], wT_ref[...],
                   preferred_element_type=jnp.float32, precision=HI)
           + b_ref[...])
    if scalar_act:
        out = jnp.maximum(out, 0.0)
    out_ref[...] = out


# ---------------------------------------------------------------------------
# Tiling / VMEM sizing helpers
# ---------------------------------------------------------------------------

def _vmem_limit_bytes():
    # Respect v7x's 64 MiB/TC VMEM; use more of the 128 MiB on v5e/v6e.
    try:
        cap = pltpu.get_tpu_info().vmem_capacity_bytes
    except Exception:
        cap = 64 * 1024 * 1024
    return int(min(cap * 3 // 4, 96 * 1024 * 1024))


def _choose_rows(n, cfg, block_rows, vmem_limit):
    """Row-tile size: footprint-capped, multiple of 8, >=2 grid steps when possible."""
    si, vi, so, vo, h = cfg['si'], cfg['vi'], cfg['so'], cfg['vo'], cfg['h']
    # approximate f32 VMEM bytes per row: double-buffered I/O tiles + in-kernel temps
    row_f32 = (2 * (si + 3 * vi + so + 3 * vo)     # pipelined in/out tiles
               + 3 * h + h + 3 * vo + so + si)     # hall, vn, vout, s_new
    row_bytes = 4 * max(row_f32, 1)
    budget = max(vmem_limit // 2, row_bytes * 8)   # headroom for weights/spills
    max_rows = max(8, (budget // row_bytes) // 8 * 8)
    tn = _round_up(max(pl.cdiv(n, 2), 1), 8)       # >=2 steps -> megacore + pipelining
    return max(8, min(tn, block_rows, max_rows))


# ---------------------------------------------------------------------------
# pallas_call wrapper (row-tiled 1-D grid; ragged last block; no HBM padding)
# ---------------------------------------------------------------------------

def gvp_apply(p, x, *, block_rows=2048, use_bf16=False, planes=False):
    """Pallas GVP forward.

    x = (s, v) with s:(N, si) when vi>0; else x = s:(N, si).
    v layout: (N, vi, 3) like the PyTorch module, or -- if planes=True -- the
    packed-plane layout (3, N, vi) (canonical inter-layer format; avoids the
    per-call HBM transpose).  Vector output uses the same layout as the input.
    """
    c = p['cfg']
    si, vi, so, vo, h = c['si'], c['vi'], c['so'], c['vo'], c['h']
    vmem_limit = _vmem_limit_bytes()
    cparams = pltpu.CompilerParams(
        dimension_semantics=("parallel",),       # megacore split on v7x
        vmem_limit_bytes=vmem_limit)

    if vi:
        s, v = x
        n = s.shape[0]
        s = s.astype(jnp.float32)
        if planes:
            vpl = v.astype(jnp.float32)                            # (3, N, vi)
        else:
            # TODO(synk): when chaining GVPs keep planes=True so this transpose
            # (a full HBM copy of v) happens once per network, not per layer.
            vpl = jnp.transpose(v, (2, 0, 1)).astype(jnp.float32)  # (3, N, vi)

        tn = _choose_rows(n, c, block_rows, vmem_limit)
        grid = (pl.cdiv(n, tn),)   # ragged last block: OOB reads masked by eps
                                   # guard, OOB writes dropped by Pallas.

        whT = p['whT'].astype(jnp.bfloat16) if use_bf16 else p['whT']
        in_specs = [
            pl.BlockSpec((tn, si), lambda i: (i, 0)),
            pl.BlockSpec((3, tn, vi), lambda i: (0, i, 0)),
            pl.BlockSpec((vi, h), lambda i: (0, 0)),
            pl.BlockSpec((si, so), lambda i: (0, 0)),
            pl.BlockSpec((h, so), lambda i: (0, 0)),
            pl.BlockSpec((1, so), lambda i: (0, 0)),
        ]
        args = [s, vpl, whT, p['wssT'], p['wshT'], p['wsb']]

        if vo:
            wvT = p['wvT'].astype(jnp.bfloat16) if use_bf16 else p['wvT']
            in_specs.append(pl.BlockSpec((h, vo), lambda i: (0, 0)))
            args.append(wvT)
            if c['vector_gate']:
                in_specs += [pl.BlockSpec((so, vo), lambda i: (0, 0)),
                             pl.BlockSpec((1, vo), lambda i: (0, 0))]
                args += [p['wsvT'], p['wsvb']]
            kern = functools.partial(
                _gvp_vec_kernel, scalar_act=c['scalar_act'],
                vector_act=c['vector_act'], vector_gate=c['vector_gate'],
                use_bf16=use_bf16)
            out_shape = (jax.ShapeDtypeStruct((n, so), jnp.float32),
                         jax.ShapeDtypeStruct((3, n, vo), jnp.float32))
            out_specs = (pl.BlockSpec((tn, so), lambda i: (i, 0)),
                         pl.BlockSpec((3, tn, vo), lambda i: (0, i, 0)))
            s_out, v_out = pl.pallas_call(
                kern, out_shape=out_shape, grid=grid,
                in_specs=in_specs, out_specs=out_specs,
                compiler_params=cparams)(*args)
            if planes:
                return s_out, v_out                              # (N, so), (3, N, vo)
            return s_out, jnp.transpose(v_out, (1, 2, 0))        # (N, vo, 3)
        else:
            kern = functools.partial(_gvp_novec_kernel,
                                     scalar_act=c['scalar_act'],
                                     use_bf16=use_bf16)
            s_out = pl.pallas_call(
                kern, out_shape=jax.ShapeDtypeStruct((n, so), jnp.float32),
                grid=grid, in_specs=in_specs,
                out_specs=pl.BlockSpec((tn, so), lambda i: (i, 0)),
                compiler_params=cparams)(*args)
            return s_out
    else:
        s = x.astype(jnp.float32)
        n = s.shape[0]
        tn = _choose_rows(n, c, block_rows, vmem_limit)
        grid = (pl.cdiv(n, tn),)
        kern = functools.partial(_linear_kernel, scalar_act=c['scalar_act'])
        s_out = pl.pallas_call(
            kern, out_shape=jax.ShapeDtypeStruct((n, so), jnp.float32),
            grid=grid,
            in_specs=[pl.BlockSpec((tn, si), lambda i: (i, 0)),
                      pl.BlockSpec((si, so), lambda i: (0, 0)),
                      pl.BlockSpec((1, so), lambda i: (0, 0))],
            out_specs=pl.BlockSpec((tn, so), lambda i: (i, 0)),
            compiler_params=cparams)(s, p['wsT'], p['wsb'])
        if vo:
            vz = (jnp.zeros((3, n, vo), jnp.float32) if planes
                  else jnp.zeros((n, vo, 3), jnp.float32))
            return s_out, vz
        return s_out


# ---------------------------------------------------------------------------
# Parameter init (weights pre-transposed / pre-split / pre-broadcast once)
# ---------------------------------------------------------------------------

def _init_linear(key, in_f, out_f, bias=True):
    k1, k2 = jax.random.split(key)
    bound = 1.0 / np.sqrt(in_f)
    w = jax.random.uniform(k1, (out_f, in_f), jnp.float32, -bound, bound)
    b = (jax.random.uniform(k2, (out_f,), jnp.float32, -bound, bound)
         if bias else None)
    return w, b


def init_gvp(key, in_dims, out_dims, h_dim=None,
             activations=(True, True), vector_gate=False):
    si, vi = in_dims
    so, vo = out_dims
    scalar_act, vector_act = activations        # True => relu / sigmoid (defaults)
    ks = jax.random.split(key, 4)
    p = {'cfg': dict(si=si, vi=vi, so=so, vo=vo, h=0,
                     scalar_act=bool(scalar_act), vector_act=bool(vector_act),
                     vector_gate=bool(vector_gate))}
    if vi:
        h = h_dim or max(vi, vo)
        p['cfg']['h'] = h
        wh, _ = _init_linear(ks[0], vi, h, bias=False)         # (h, vi)
        ws_w, ws_b = _init_linear(ks[1], si + h, so)           # cols: [s | vn]
        p['whT'] = wh.T                                        # (vi, h)
        p['wssT'] = ws_w[:, :si].T                             # (si, so)  s-part
        p['wshT'] = ws_w[:, si:].T                             # (h,  so)  vn-part
        p['wsb'] = ws_b[None, :]                               # (1, so)
        if vo:
            wv, _ = _init_linear(ks[2], h, vo, bias=False)     # (vo, h)
            p['wvT'] = wv.T                                    # (h, vo)
            if vector_gate:
                wsv_w, wsv_b = _init_linear(ks[3], so, vo)
                p['wsvT'] = wsv_w.T                            # (so, vo)
                p['wsvb'] = wsv_b[None, :]                     # (1, vo)
    else:
        ws_w, ws_b = _init_linear(ks[1], si, so)
        p['wsT'] = ws_w.T
        p['wsb'] = ws_b[None, :]
    return p


# ---------------------------------------------------------------------------
# Pure-JAX reference mirroring the PyTorch GVP.forward exactly
# ---------------------------------------------------------------------------

def _ref_norm_no_nan(x, axis=-1, keepdims=False, eps=EPS_NORM, sqrt=True):
    out = jnp.maximum(jnp.sum(jnp.square(x), axis=axis, keepdims=keepdims), eps)
    return jnp.sqrt(out) if sqrt else out


def ref_gvp(p, x):
    c = p['cfg']
    if c['vi']:
        s, v = x
        vt = jnp.swapaxes(v, -1, -2)                                     # (N, 3, vi)
        vh = jnp.einsum('ncd,dh->nch', vt, p['whT'], precision=HI)       # (N, 3, h)
        vn = _ref_norm_no_nan(vh, axis=-2)                               # (N, h)
        wsT = jnp.concatenate([p['wssT'], p['wshT']], axis=0)            # (si+h, so)
        s_new = (jnp.einsum('nk,ko->no', jnp.concatenate([s, vn], -1),
                            wsT, precision=HI) + p['wsb'][0])
        if c['vo']:
            vout = jnp.einsum('nch,hv->ncv', vh, p['wvT'], precision=HI)
            vout = jnp.swapaxes(vout, -1, -2)                            # (N, vo, 3)
            if c['vector_gate']:
                gate_in = jax.nn.sigmoid(s_new) if c['vector_act'] else s_new
                gate = (jnp.einsum('no,ov->nv', gate_in, p['wsvT'],
                                   precision=HI) + p['wsvb'][0])
                vout = vout * jax.nn.sigmoid(gate)[..., None]
            elif c['vector_act']:
                vout = vout * jax.nn.sigmoid(
                    _ref_norm_no_nan(vout, axis=-1, keepdims=True))
            if c['scalar_act']:
                s_new = jax.nn.relu(s_new)
            return s_new, vout
        if c['scalar_act']:
            s_new = jax.nn.relu(s_new)
        return s_new
    else:
        s_new = jnp.einsum('nk,ko->no', x, p['wsT'], precision=HI) + p['wsb'][0]
        if c['scalar_act']:
            s_new = jax.nn.relu(s_new)
        if c['vo']:
            return s_new, jnp.zeros((x.shape[0], c['vo'], 3), jnp.float32)
        return s_new


# ---------------------------------------------------------------------------
# main
# ---------------------------------------------------------------------------

def _check(name, got, want, atol=2e-3, rtol=2e-3):
    got, want = np.asarray(got), np.asarray(want)
    if got.shape != want.shape:
        raise AssertionError(f"{name}: shape {got.shape} vs {want.shape}")
    if not np.allclose(got, want, atol=atol, rtol=rtol):
        raise AssertionError(f"{name}: max|err|={np.max(np.abs(got - want))}")


if __name__ == "__main__":
    key = jax.random.PRNGKey(0)
    N = 20                    # deliberately not a multiple of 8 (ragged last block)
    si, vi = 6, 3
    k_s, k_v, k1, k2, k3, k4 = jax.random.split(key, 6)
    s_in = jax.random.normal(k_s, (N, si), jnp.float32)
    v_in = jax.random.normal(k_v, (N, vi, 3), jnp.float32)

    # (A) default GVP: (6,3) -> (16,4), activations=(relu, sigmoid), no vector gate
    pA = init_gvp(k1, (si, vi), (16, 4))
    sA, vA = gvp_apply(pA, (s_in, v_in))
    jax.block_until_ready((sA, vA))
    rA_s, rA_v = ref_gvp(pA, (s_in, v_in))
    _check("A.s", sA, rA_s)
    _check("A.v", vA, rA_v)

    # (A/bf16) opt-in bf16 MXU operands for the Wh / Wv matmuls
    sAb, vAb = gvp_apply(pA, (s_in, v_in), use_bf16=True)
    jax.block_until_ready((sAb, vAb))
    _check("Abf16.s", sAb, rA_s, atol=5e-2, rtol=5e-2)
    _check("Abf16.v", vAb, rA_v, atol=5e-2, rtol=5e-2)

    # (B) vector-gated GVP
    pB = init_gvp(k2, (si, vi), (16, 4), vector_gate=True)
    sB, vB = gvp_apply(pB, (s_in, v_in))
    jax.block_until_ready((sB, vB))
    rB_s, rB_v = ref_gvp(pB, (s_in, v_in))
    _check("B.s", sB, rB_s)
    _check("B.v", vB, rB_v)

    # (C) scalar-only output: (6,3) -> (16,0)
    pC = init_gvp(k3, (si, vi), (16, 0))
    sC = gvp_apply(pC, (s_in, v_in))
    jax.block_until_ready(sC)
    _check("C.s", sC, ref_gvp(pC, (s_in, v_in)))

    # (D) no vector input: (6,0) -> (16,0)  (plain Linear + ReLU)
    pD = init_gvp(k4, (si, 0), (16, 0))
    sD = gvp_apply(pD, s_in)
    jax.block_until_ready(sD)
    _check("D.s", sD, ref_gvp(pD, s_in))

    print("KERNEL_OK")
</pallas_src>

<mosaic_0001>
module attributes {stable_mosaic.version = 11 : i64} {
  func.func @_gvp_vec_kernel(%arg0: i32, %arg1: memref<16x6xf32, #tpu.memory_space<vmem>>, %arg2: memref<3x16x3xf32, #tpu.memory_space<vmem>>, %arg3: memref<3x4xf32, #tpu.memory_space<vmem>>, %arg4: memref<6x16xf32, #tpu.memory_space<vmem>>, %arg5: memref<4x16xf32, #tpu.memory_space<vmem>>, %arg6: memref<1x16xf32, #tpu.memory_space<vmem>>, %arg7: memref<4x4xf32, #tpu.memory_space<vmem>>, %arg8: memref<16x16xf32, #tpu.memory_space<vmem>>, %arg9: memref<3x16x4xf32, #tpu.memory_space<vmem>>) attributes {dimension_semantics = [#tpu.dimension_semantics<parallel>], iteration_bounds = array<i64: 2>, scalar_prefetch = 0 : i64, scratch_operands = 0 : i64, tpu.core_type = #tpu.core_type<tc>, window_params = [{transform_indices = @transform_0, window_bounds = array<i64: 16, 6>}, {transform_indices = @transform_1, window_bounds = array<i64: 3, 16, 3>}, {pipeline_mode = #tpu.pipeline_mode<synchronous>, transform_indices = @transform_2, window_bounds = array<i64: 3, 4>}, {pipeline_mode = #tpu.pipeline_mode<synchronous>, transform_indices = @transform_3, window_bounds = array<i64: 6, 16>}, {pipeline_mode = #tpu.pipeline_mode<synchronous>, transform_indices = @transform_4, window_bounds = array<i64: 4, 16>}, {pipeline_mode = #tpu.pipeline_mode<synchronous>, transform_indices = @transform_5, window_bounds = array<i64: 1, 16>}, {pipeline_mode = #tpu.pipeline_mode<synchronous>, transform_indices = @transform_6, window_bounds = array<i64: 4, 4>}, {transform_indices = @transform_7, window_bounds = array<i64: 16, 16>}, {transform_indices = @transform_8, window_bounds = array<i64: 3, 16, 4>}]} {
    %c0 = arith.constant 0 : index
    %c0_0 = arith.constant 0 : index
    %c0_1 = arith.constant 0 : index
    %0 = vector.load %arg2[%c0, %c0_0, %c0_1] : memref<3x16x3xf32, #tpu.memory_space<vmem>>, vector<3x16x3xf32>
    %1 = vector.shape_cast %0 : vector<3x16x3xf32> to vector<48x3xf32>
    %c0_2 = arith.constant 0 : index
    %c0_3 = arith.constant 0 : index
    %2 = vector.load %arg3[%c0_2, %c0_3] : memref<3x4xf32, #tpu.memory_space<vmem>>, vector<3x4xf32>
    %cst = arith.constant dense<0.000000e+00> : vector<48x4xf32>
    %3 = tpu.matmul %1, %2, %cst {dimension_numbers = #tpu.dot_dimension_numbers<[1], [0], [0], [1], [0, 0, 1, 1], [], []>, precision = #tpu.contract_precision<fp32>} : vector<48x3xf32>, vector<3x4xf32>, vector<48x4xf32> -> vector<48x4xf32>
    %4 = vector.shape_cast %3 : vector<48x4xf32> to vector<3x16x4xf32>
    %5 = vector.extract_strided_slice %4 {offsets = [0, 0, 0], sizes = [1, 16, 4], strides = [1, 1, 1]} : vector<3x16x4xf32> to vector<1x16x4xf32>
    %6 = vector.shape_cast %5 : vector<1x16x4xf32> to vector<16x4xf32>
    %7 = vector.extract_strided_slice %4 {offsets = [0, 0, 0], sizes = [1, 16, 4], strides = [1, 1, 1]} : vector<3x16x4xf32> to vector<1x16x4xf32>
    %8 = vector.shape_cast %7 : vector<1x16x4xf32> to vector<16x4xf32>
    %9 = arith.mulf %6, %8 : vector<16x4xf32>
    %10 = vector.extract_strided_slice %4 {offsets = [1, 0, 0], sizes = [1, 16, 4], strides = [1, 1, 1]} : vector<3x16x4xf32> to vector<1x16x4xf32>
    %11 = vector.shape_cast %10 : vector<1x16x4xf32> to vector<16x4xf32>
    %12 = vector.extract_strided_slice %4 {offsets = [1, 0, 0], sizes = [1, 16, 4], strides = [1, 1, 1]} : vector<3x16x4xf32> to vector<1x16x4xf32>
    %13 = vector.shape_cast %12 : vector<1x16x4xf32> to vector<16x4xf32>
    %14 = arith.mulf %11, %13 : vector<16x4xf32>
    %15 = arith.addf %9, %14 : vector<16x4xf32>
    %16 = vector.extract_strided_slice %4 {offsets = [2, 0, 0], sizes = [1, 16, 4], strides = [1, 1, 1]} : vector<3x16x4xf32> to vector<1x16x4xf32>
    %17 = vector.shape_cast %16 : vector<1x16x4xf32> to vector<16x4xf32>
    %18 = vector.extract_strided_slice %4 {offsets = [2, 0, 0], sizes = [1, 16, 4], strides = [1, 1, 1]} : vector<3x16x4xf32> to vector<1x16x4xf32>
    %19 = vector.shape_cast %18 : vector<1x16x4xf32> to vector<16x4xf32>
    %20 = arith.mulf %17, %19 : vector<16x4xf32>
    %21 = arith.addf %15, %20 : vector<16x4xf32>
    %cst_4 = arith.constant 9.99999993E-9 : f32
    %22 = vector.broadcast %cst_4 : f32 to vector<16x4xf32>
    %23 = arith.maximumf %21, %22 : vector<16x4xf32>
    %24 = math.sqrt %23 : vector<16x4xf32>
    %c0_5 = arith.constant 0 : index
    %c0_6 = arith.constant 0 : index
    %25 = vector.load %arg1[%c0_5, %c0_6] : memref<16x6xf32, #tpu.memory_space<vmem>>, vector<16x6xf32>
    %c0_7 = arith.constant 0 : index
    %c0_8 = arith.constant 0 : index
    %26 = vector.load %arg4[%c0_7, %c0_8] : memref<6x16xf32, #tpu.memory_space<vmem>>, vector<6x16xf32>
    %cst_9 = arith.constant dense<0.000000e+00> : vector<16x16xf32>
    %27 = tpu.matmul %25, %26, %cst_9 {dimension_numbers = #tpu.dot_dimension_numbers<[1], [0], [0], [1], [0, 0, 1, 1], [], []>, precision = #tpu.contract_precision<fp32>} : vector<16x6xf32>, vector<6x16xf32>, vector<16x16xf32> -> vector<16x16xf32>
    %c0_10 = arith.constant 0 : index
    %c0_11 = arith.constant 0 : index
    %28 = vector.load %arg5[%c0_10, %c0_11] : memref<4x16xf32, #tpu.memory_space<vmem>>, vector<4x16xf32>
    %cst_12 = arith.constant dense<0.000000e+00> : vector<16x16xf32>
    %29 = tpu.matmul %24, %28, %cst_12 {dimension_numbers = #tpu.dot_dimension_numbers<[1], [0], [0], [1], [0, 0, 1, 1], [], []>, precision = #tpu.contract_precision<fp32>} : vector<16x4xf32>, vector<4x16xf32>, vector<16x16xf32> -> vector<16x16xf32>
    %30 = arith.addf %27, %29 : vector<16x16xf32>
    %c0_13 = arith.constant 0 : index
    %c0_14 = arith.constant 0 : index
    %31 = vector.load %arg6[%c0_13, %c0_14] : memref<1x16xf32, #tpu.memory_space<vmem>>, vector<1x16xf32>
    %32 = vector.broadcast %31 : vector<1x16xf32> to vector<16x16xf32>
    %33 = arith.addf %30, %32 : vector<16x16xf32>
    %c0_15 = arith.constant 0 : index
    %c0_16 = arith.constant 0 : index
    %34 = vector.load %arg7[%c0_15, %c0_16] : memref<4x4xf32, #tpu.memory_space<vmem>>, vector<4x4xf32>
    %cst_17 = arith.constant dense<0.000000e+00> : vector<48x4xf32>
    %35 = tpu.matmul %3, %34, %cst_17 {dimension_numbers = #tpu.dot_dimension_numbers<[1], [0], [0], [1], [0, 0, 1, 1], [], []>, precision = #tpu.contract_precision<fp32>} : vector<48x4xf32>, vector<4x4xf32>, vector<48x4xf32> -> vector<48x4xf32>
    %36 = vector.shape_cast %35 : vector<48x4xf32> to vector<3x16x4xf32>
    %37 = vector.extract_strided_slice %36 {offsets = [0, 0, 0], sizes = [1, 16, 4], strides = [1, 1, 1]} : vector<3x16x4xf32> to vector<1x16x4xf32>
    %38 = vector.shape_cast %37 : vector<1x16x4xf32> to vector<16x4xf32>
    %39 = vector.extract_strided_slice %36 {offsets = [0, 0, 0], sizes = [1, 16, 4], strides = [1, 1, 1]} : vector<3x16x4xf32> to vector<1x16x4xf32>
    %40 = vector.shape_cast %39 : vector<1x16x4xf32> to vector<16x4xf32>
    %41 = arith.mulf %38, %40 : vector<16x4xf32>
    %42 = vector.extract_strided_slice %36 {offsets = [1, 0, 0], sizes = [1, 16, 4], strides = [1, 1, 1]} : vector<3x16x4xf32> to vector<1x16x4xf32>
    %43 = vector.shape_cast %42 : vector<1x16x4xf32> to vector<16x4xf32>
    %44 = vector.extract_strided_slice %36 {offsets = [1, 0, 0], sizes = [1, 16, 4], strides = [1, 1, 1]} : vector<3x16x4xf32> to vector<1x16x4xf32>
    %45 = vector.shape_cast %44 : vector<1x16x4xf32> to vector<16x4xf32>
    %46 = arith.mulf %43, %45 : vector<16x4xf32>
    %47 = arith.addf %41, %46 : vector<16x4xf32>
    %48 = vector.extract_strided_slice %36 {offsets = [2, 0, 0], sizes = [1, 16, 4], strides = [1, 1, 1]} : vector<3x16x4xf32> to vector<1x16x4xf32>
    %49 = vector.shape_cast %48 : vector<1x16x4xf32> to vector<16x4xf32>
    %50 = vector.extract_strided_slice %36 {offsets = [2, 0, 0], sizes = [1, 16, 4], strides = [1, 1, 1]} : vector<3x16x4xf32> to vector<1x16x4xf32>
    %51 = vector.shape_cast %50 : vector<1x16x4xf32> to vector<16x4xf32>
    %52 = arith.mulf %49, %51 : vector<16x4xf32>
    %53 = arith.addf %47, %52 : vector<16x4xf32>
    %cst_18 = arith.constant 9.99999993E-9 : f32
    %54 = vector.broadcast %cst_18 : f32 to vector<16x4xf32>
    %55 = arith.maximumf %53, %54 : vector<16x4xf32>
    %56 = math.sqrt %55 : vector<16x4xf32>
    %57 = arith.negf %56 : vector<16x4xf32>
    %58 = math.exp %57 : vector<16x4xf32>
    %cst_19 = arith.constant 1.000000e+00 : f32
    %59 = vector.broadcast %cst_19 : f32 to vector<16x4xf32>
    %60 = arith.addf %59, %58 : vector<16x4xf32>
    %61 = arith.divf %59, %60 : vector<16x4xf32>
    %62 = vector.shape_cast %61 : vector<16x4xf32> to vector<1x16x4xf32>
    %63 = vector.broadcast %62 : vector<1x16x4xf32> to vector<3x16x4xf32>
    %64 = arith.mulf %36, %63 : vector<3x16x4xf32>
    %cst_20 = arith.constant 0.000000e+00 : f32
    %65 = vector.broadcast %cst_20 : f32 to vector<16x16xf32>
    %66 = arith.maximumf %33, %65 : vector<16x16xf32>
    %c0_21 = arith.constant 0 : index
    %c0_22 = arith.constant 0 : index
    %67 = vector.load %arg8[%c0_21, %c0_22] : memref<16x16xf32, #tpu.memory_space<vmem>>, vector<16x16xf32>
    tpu.vector_store %arg8[%c0_21, %c0_22], %66 {strides = array<i32>} : memref<16x16xf32, #tpu.memory_space<vmem>>, vector<16x16xf32>,
    %c0_23 = arith.constant 0 : index
    %c0_24 = arith.constant 0 : index
    %c0_25 = arith.constant 0 : index
    %68 = vector.load %arg9[%c0_23, %c0_24, %c0_25] : memref<3x16x4xf32, #tpu.memory_space<vmem>>, vector<3x16x4xf32>
    tpu.vector_store %arg9[%c0_23, %c0_24, %c0_25], %64 {strides = array<i32>} : memref<3x16x4xf32, #tpu.memory_space<vmem>>, vector<3x16x4xf32>,
    return
  }
  func.func @transform_0(%arg0: i32) -> (i32, i32) {
    %c0_i32 = arith.constant 0 : i32
    %c0_i32_0 = arith.constant 0 : i32
    return %arg0, %c0_i32 : i32, i32
  }
  func.func @transform_1(%arg0: i32) -> (i32, i32, i32) {
    %c0_i32 = arith.constant 0 : i32
    %c0_i32_0 = arith.constant 0 : i32
    %c0_i32_1 = arith.constant 0 : i32
    return %c0_i32, %arg0, %c0_i32_0 : i32, i32, i32
  }
  func.func @transform_2(%arg0: i32) -> (i32, i32) {
    %c0_i32 = arith.constant 0 : i32
    %c0_i32_0 = arith.constant 0 : i32
    %c0_i32_1 = arith.constant 0 : i32
    return %c0_i32, %c0_i32_0 : i32, i32
  }
  func.func @transform_3(%arg0: i32) -> (i32, i32) {
    %c0_i32 = arith.constant 0 : i32
    %c0_i32_0 = arith.constant 0 : i32
    %c0_i32_1 = arith.constant 0 : i32
    return %c0_i32, %c0_i32_0 : i32, i32
  }
  func.func @transform_4(%arg0: i32) -> (i32, i32) {
    %c0_i32 = arith.constant 0 : i32
    %c0_i32_0 = arith.constant 0 : i32
    %c0_i32_1 = arith.constant 0 : i32
    return %c0_i32, %c0_i32_0 : i32, i32
  }
  func.func @transform_5(%arg0: i32) -> (i32, i32) {
    %c0_i32 = arith.constant 0 : i32
    %c0_i32_0 = arith.constant 0 : i32
    %c0_i32_1 = arith.constant 0 : i32
    return %c0_i32, %c0_i32_0 : i32, i32
  }
  func.func @transform_6(%arg0: i32) -> (i32, i32) {
    %c0_i32 = arith.constant 0 : i32
    %c0_i32_0 = arith.constant 0 : i32
    %c0_i32_1 = arith.constant 0 : i32
    return %c0_i32, %c0_i32_0 : i32, i32
  }
  func.func @transform_7(%arg0: i32) -> (i32, i32) {
    %c0_i32 = arith.constant 0 : i32
    %c0_i32_0 = arith.constant 0 : i32
    return %arg0, %c0_i32 : i32, i32
  }
  func.func @transform_8(%arg0: i32) -> (i32, i32, i32) {
    %c0_i32 = arith.constant 0 : i32
    %c0_i32_0 = arith.constant 0 : i32
    %c0_i32_1 = arith.constant 0 : i32
    return %c0_i32, %arg0, %c0_i32_0 : i32, i32, i32
  }
}

</mosaic_0001>

<llo_original>
// kernel: tpu_custom_call.1
$region0: #{tpu_custom_call.1}
  #allocation0 [shape = 'u32[]', space=smem, size = 0x4, offset = 0x4, fixed_abs, tag = 'smem constant byte address 0x4 - core index']
  #allocation1 [shape = 'u32[144,128]{1,0:T(1,128)}', space=vmem, size = 0x12000, scoped, tag = 'internal scratch']
  %s0 = inlined_call_operand.vmem [shape: f32[20,6], index: 0, kind: input, shape index: {}]
  %s1 = inlined_call_operand.vmem [shape: f32[3,20,3], index: 1, kind: input, shape index: {}]
  %s2 = inlined_call_operand.vmem [shape: f32[3,4], index: 2, kind: input, shape index: {}]
  %s3 = inlined_call_operand.vmem [shape: f32[6,16], index: 3, kind: input, shape index: {}]
  %s4 = inlined_call_operand.vmem [shape: f32[4,16], index: 4, kind: input, shape index: {}]
  %s5 = inlined_call_operand.vmem [shape: f32[1,16], index: 5, kind: input, shape index: {}]
  %s6 = inlined_call_operand.vmem [shape: f32[4,4], index: 6, kind: input, shape index: {}]
  %s7 = inlined_call_operand.vmem [shape: f32[20,16], index: 7, kind: output, shape index: {0}]
  %s8 = inlined_call_operand.vmem [shape: f32[3,20,4], index: 8, kind: output, shape index: {1}]
  %9 = xla_tuple %s7, %s8
  %s10 = sld [smem:[#allocation0]]
  $region217: #{tpu_custom_call.1} parent=0
    _
  %s12 = ssub.s32 1, %s10
  %s13 = scalar_select 0, %s12, %s10
  $region1: #{tpu_custom_call.1} parent=0
    #allocation2 [shape = 'u8[49152]{0}', space=vmem, size = 0xc000, scoped, tag = 'input window, operand 1']
    #allocation3 [shape = 'u8[16384]{0}', space=vmem, size = 0x4000, scoped, tag = 'output window, operand 0']
    #allocation4 [shape = 'u8[49152]{0}', space=vmem, size = 0xc000, scoped, tag = 'output window, operand 1']
    loop: start=0, step=1, limit=4
    $region2: #{tpu_custom_call.1} parent=1 // loop_pre_header
      _
    $region3: #{tpu_custom_call.1} parent=1 // loop_header
      %s15 = sphi 0, %s19
      %p16 = scmp.ge.s32.totalorder %s15, 4
      %s25 = sphi 0, %s27
      %s28 = sphi 0, %s25
      %s29 = sphi 0, %s28
      %s45 = sphi 0, %s29
      %s51 = sphi 0, %s53
      %s54 = sphi 0, %s51
      %s55 = sphi 0, %s54
      %s71 = sphi 0, %s55
      %s75 = sphi 0, %s75
      %s77 = sphi 0, %s75
      %s78 = sphi 0, %s77
      %s92 = sphi 0, %s78
      %s96 = sphi 0, %s96
      %s98 = sphi 0, %s96
      %s99 = sphi 0, %s98
      %s113 = sphi 0, %s99
      %s117 = sphi 0, %s117
      %s119 = sphi 0, %s117
      %s120 = sphi 0, %s119
      %s134 = sphi 0, %s120
      %s138 = sphi 0, %s138
      %s140 = sphi 0, %s138
      %s141 = sphi 0, %s140
      %s155 = sphi 0, %s141
      %s159 = sphi 0, %s159
      %s161 = sphi 0, %s159
      %s162 = sphi 0, %s161
      %s176 = sphi 0, %s162
      %s182 = sphi 0, %s184
      %s185 = sphi 0, %s182
      %s186 = sphi 0, %s185
      %s202 = sphi 0, %s186
      %s208 = sphi 0, %s210
      %s211 = sphi 0, %s208
      %s212 = sphi 0, %s211
      %s228 = sphi 0, %s212
    $region4: #{tpu_custom_call.1} parent=1 // loop_header_branch
      %18 = sbr.rel (%p16) target = $region8
    $region5: #{tpu_custom_call.1} parent=1 // loop_body
      %s20 = ssub.s32 %s15, 1
      %s21 = ssub.s32 %s15, 2
      %s22 = sadd.s32 %s15, 1
      %s23 = ssub.s32 %s15, %s22
      %p24 = scmp.eq.s32.totalorder %s23, 0
      %s26 = sadd.s32 %s25, 1
      %s27 = scalar_select %p24, %s25, %s26
      %p30 = pneg %p24
      %p31 = scmp.eq.s32.totalorder %s15, 1
      %p32 = por %p30, %p31
      %p33 = scmp.ne.s32.totalorder %s25, %s28
      %p34 = scmp.eq.s32.totalorder %s15, 0
      %p35 = por %p33, %p34
      %p36 = scmp.ne.s32.totalorder %s25, %s28
      %p37 = scmp.eq.s32.totalorder %s20, 1
      %p38 = por %p36, %p37
      %p39 = scmp.ne.s32.totalorder %s28, %s29
      %p40 = scmp.eq.s32.totalorder %s20, 0
      %p41 = por %p39, %p40
      %p42 = scmp.ne.s32.totalorder %s28, %s29
      %p43 = scmp.eq.s32.totalorder %s21, 1
      %p44 = por %p42, %p43
      %p46 = scmp.ne.s32.totalorder %s29, %s45
      %p47 = scmp.eq.s32.totalorder %s21, 0
      %p48 = por %p46, %p47
      %s49 = ssub.s32 %s15, %s22
      %p50 = scmp.eq.s32.totalorder %s49, 0
      %s52 = sadd.s32 %s51, 1
      %s53 = scalar_select %p50, %s51, %s52
      %p56 = pneg %p50
      %p57 = scmp.eq.s32.totalorder %s15, 1
      %p58 = por %p56, %p57
      %p59 = scmp.ne.s32.totalorder %s51, %s54
      %p60 = scmp.eq.s32.totalorder %s15, 0
      %p61 = por %p59, %p60
      %p62 = scmp.ne.s32.totalorder %s51, %s54
      %p63 = scmp.eq.s32.totalorder %s20, 1
      %p64 = por %p62, %p63
      %p65 = scmp.ne.s32.totalorder %s54, %s55
      %p66 = scmp.eq.s32.totalorder %s20, 0
      %p67 = por %p65, %p66
      %p68 = scmp.ne.s32.totalorder %s54, %s55
      %p69 = scmp.eq.s32.totalorder %s21, 1
      %p70 = por %p68, %p69
      %p72 = scmp.ne.s32.totalorder %s55, %s71
      %p73 = scmp.eq.s32.totalorder %s21, 0
      %p74 = por %p72, %p73
      %s76 = sadd.s32 %s75, 1
      %p79 = scmp.eq.s32.totalorder %s15, 1
      %p80 = scmp.ne.s32.totalorder %s75, %s77
      %p81 = scmp.eq.s32.totalorder %s15, 0
      %p82 = por %p80, %p81
      %p83 = scmp.ne.s32.totalorder %s75, %s77
      %p84 = scmp.eq.s32.totalorder %s20, 1
      %p85 = por %p83, %p84
      %p86 = scmp.ne.s32.totalorder %s77, %s78
      %p87 = scmp.eq.s32.totalorder %s20, 0
      %p88 = por %p86, %p87
      %p89 = scmp.ne.s32.totalorder %s77, %s78
      %p90 = scmp.eq.s32.totalorder %s21, 1
      %p91 = por %p89, %p90
      %p93 = scmp.ne.s32.totalorder %s78, %s92
      %p94 = scmp.eq.s32.totalorder %s21, 0
      %p95 = por %p93, %p94
      %s97 = sadd.s32 %s96, 1
      %p100 = scmp.eq.s32.totalorder %s15, 1
      %p101 = scmp.ne.s32.totalorder %s96, %s98
      %p102 = scmp.eq.s32.totalorder %s15, 0
      %p103 = por %p101, %p102
      %p104 = scmp.ne.s32.totalorder %s96, %s98
      %p105 = scmp.eq.s32.totalorder %s20, 1
      %p106 = por %p104, %p105
      %p107 = scmp.ne.s32.totalorder %s98, %s99
      %p108 = scmp.eq.s32.totalorder %s20, 0
      %p109 = por %p107, %p108
      %p110 = scmp.ne.s32.totalorder %s98, %s99
      %p111 = scmp.eq.s32.totalorder %s21, 1
      %p112 = por %p110, %p111
      %p114 = scmp.ne.s32.totalorder %s99, %s113
      %p115 = scmp.eq.s32.totalorder %s21, 0
      %p116 = por %p114, %p115
      %s118 = sadd.s32 %s117, 1
      %p121 = scmp.eq.s32.totalorder %s15, 1
      %p122 = scmp.ne.s32.totalorder %s117, %s119
      %p123 = scmp.eq.s32.totalorder %s15, 0
      %p124 = por %p122, %p123
      %p125 = scmp.ne.s32.totalorder %s117, %s119
      %p126 = scmp.eq.s32.totalorder %s20, 1
      %p127 = por %p125, %p126
      %p128 = scmp.ne.s32.totalorder %s119, %s120
      %p129 = scmp.eq.s32.totalorder %s20, 0
      %p130 = por %p128, %p129
      %p131 = scmp.ne.s32.totalorder %s119, %s120
      %p132 = scmp.eq.s32.totalorder %s21, 1
      %p133 = por %p131, %p132
      %p135 = scmp.ne.s32.totalorder %s120, %s134
      %p136 = scmp.eq.s32.totalorder %s21, 0
      %p137 = por %p135, %p136
      %s139 = sadd.s32 %s138, 1
      %p142 = scmp.eq.s32.totalorder %s15, 1
      %p143 = scmp.ne.s32.totalorder %s138, %s140
      %p144 = scmp.eq.s32.totalorder %s15, 0
      %p145 = por %p143, %p144
      %p146 = scmp.ne.s32.totalorder %s138, %s140
      %p147 = scmp.eq.s32.totalorder %s20, 1
      %p148 = por %p146, %p147
      %p149 = scmp.ne.s32.totalorder %s140, %s141
      %p150 = scmp.eq.s32.totalorder %s20, 0
      %p151 = por %p149, %p150
      %p152 = scmp.ne.s32.totalorder %s140, %s141
      %p153 = scmp.eq.s32.totalorder %s21, 1
      %p154 = por %p152, %p153
      %p156 = scmp.ne.s32.totalorder %s141, %s155
      %p157 = scmp.eq.s32.totalorder %s21, 0
      %p158 = por %p156, %p157
      %s160 = sadd.s32 %s159, 1
      %p163 = scmp.eq.s32.totalorder %s15, 1
      %p164 = scmp.ne.s32.totalorder %s159, %s161
      %p165 = scmp.eq.s32.totalorder %s15, 0
      %p166 = por %p164, %p165
      %p167 = scmp.ne.s32.totalorder %s159, %s161
      %p168 = scmp.eq.s32.totalorder %s20, 1
      %p169 = por %p167, %p168
      %p170 = scmp.ne.s32.totalorder %s161, %s162
      %p171 = scmp.eq.s32.totalorder %s20, 0
      %p172 = por %p170, %p171
      %p173 = scmp.ne.s32.totalorder %s161, %s162
      %p174 = scmp.eq.s32.totalorder %s21, 1
      %p175 = por %p173, %p174
      %p177 = scmp.ne.s32.totalorder %s162, %s176
      %p178 = scmp.eq.s32.totalorder %s21, 0
      %p179 = por %p177, %p178
      %s180 = ssub.s32 %s15, %s22
      %p181 = scmp.eq.s32.totalorder %s180, 0
      %s183 = sadd.s32 %s182, 1
      %s184 = scalar_select %p181, %s182, %s183
      %p187 = pneg %p181
      %p188 = scmp.eq.s32.totalorder %s15, 1
      %p189 = por %p187, %p188
      %p190 = scmp.ne.s32.totalorder %s182, %s185
      %p191 = scmp.eq.s32.totalorder %s15, 0
      %p192 = por %p190, %p191
      %p193 = scmp.ne.s32.totalorder %s182, %s185
      %p194 = scmp.eq.s32.totalorder %s20, 1
      %p195 = por %p193, %p194
      %p196 = scmp.ne.s32.totalorder %s185, %s186
      %p197 = scmp.eq.s32.totalorder %s20, 0
      %p198 = por %p196, %p197
      %p199 = scmp.ne.s32.totalorder %s185, %s186
      %p200 = scmp.eq.s32.totalorder %s21, 1
      %p201 = por %p199, %p200
      %p203 = scmp.ne.s32.totalorder %s186, %s202
      %p204 = scmp.eq.s32.totalorder %s21, 0
      %p205 = por %p203, %p204
      %s206 = ssub.s32 %s15, %s22
      %p207 = scmp.eq.s32.totalorder %s206, 0
      %s209 = sadd.s32 %s208, 1
      %s210 = scalar_select %p207, %s208, %s209
      %p213 = pneg %p207
      %p214 = scmp.eq.s32.totalorder %s15, 1
      %p215 = por %p213, %p214
      %p216 = scmp.ne.s32.totalorder %s208, %s211
      %p217 = scmp.eq.s32.totalorder %s15, 0
      %p218 = por %p216, %p217
      %p219 = scmp.ne.s32.totalorder %s208, %s211
      %p220 = scmp.eq.s32.totalorder %s20, 1
      %p221 = por %p219, %p220
      %p222 = scmp.ne.s32.totalorder %s211, %s212
      %p223 = scmp.eq.s32.totalorder %s20, 0
      %p224 = por %p222, %p223
      %p225 = scmp.ne.s32.totalorder %s211, %s212
      %p226 = scmp.eq.s32.totalorder %s21, 1
      %p227 = por %p225, %p226
      %p229 = scmp.ne.s32.totalorder %s212, %s228
      %p230 = scmp.eq.s32.totalorder %s21, 0
      %p231 = por %p229, %p230
      %p232 = scmp.le.s32.totalorder 1, %s15
      %p233 = scmp.lt.s32.totalorder %s15, 3
      %p234 = pnand %p232, %p233
      %p235 = pneg %p234
      // Predicated region
      $region9: #{tpu_custom_call.1} parent=5 // pred_check
        _
      $region10: #{tpu_custom_call.1} parent=5 // pred_check_branch
        %237 = sbr.rel (%p234) target = $region12
      $region11: #{tpu_custom_call.1} parent=5 // pred_region
        %s238 = ssub.s32 %s15, 1
        // Predicated region
        $region13: #{tpu_custom_call.1} parent=11 // pred_check
          %p239 = pneg %p88
        $region14: #{tpu_custom_call.1} parent=11 // pred_check_branch
          %241 = sbr.rel (%p239) target = $region16
        $region15: #{tpu_custom_call.1} parent=11 // pred_region
          _
        $region16: #{tpu_custom_call.1} parent=11 // pred_fallthru
          _
        // Predicated region
        $region17: #{tpu_custom_call.1} parent=11 // pred_check
          %p242 = pneg %p109
        $region18: #{tpu_custom_call.1} parent=11 // pred_check_branch
          %244 = sbr.rel (%p242) target = $region20
        $region19: #{tpu_custom_call.1} parent=11 // pred_region
          _
        $region20: #{tpu_custom_call.1} parent=11 // pred_fallthru
          _
        // Predicated region
        $region21: #{tpu_custom_call.1} parent=11 // pred_check
          %p245 = pneg %p130
        $region22: #{tpu_custom_call.1} parent=11 // pred_check_branch
          %247 = sbr.rel (%p245) target = $region24
        $region23: #{tpu_custom_call.1} parent=11 // pred_region
          _
        $region24: #{tpu_custom_call.1} parent=11 // pred_fallthru
          _
        // Predicated region
        $region25: #{tpu_custom_call.1} parent=11 // pred_check
          %p248 = pneg %p151
        $region26: #{tpu_custom_call.1} parent=11 // pred_check_branch
          %250 = sbr.rel (%p248) target = $region28
        $region27: #{tpu_custom_call.1} parent=11 // pred_region
          _
        $region28: #{tpu_custom_call.1} parent=11 // pred_fallthru
          _
        // Predicated region
        $region29: #{tpu_custom_call.1} parent=11 // pred_check
          %p251 = pneg %p172
        $region30: #{tpu_custom_call.1} parent=11 // pred_check_branch
          %253 = sbr.rel (%p251) target = $region32
        $region31: #{tpu_custom_call.1} parent=11 // pred_region
          _
        $region32: #{tpu_custom_call.1} parent=11 // pred_fallthru
          _
      $region12: #{tpu_custom_call.1} parent=5 // pred_fallthru
        _
      %p254 = scmp.lt.s32.totalorder %s15, 2
      // Predicated region
      $region33: #{tpu_custom_call.1} parent=5 // pred_check
        %p255 = pneg %p254
      $region34: #{tpu_custom_call.1} parent=5 // pred_check_branch
        %257 = sbr.rel (%p255) target = $region36
      $region35: #{tpu_custom_call.1} parent=5 // pred_region
        // Predicated region
        $region37: #{tpu_custom_call.1} parent=35 // pred_check
          %p258 = pneg %p35
        $region38: #{tpu_custom_call.1} parent=35 // pred_check_branch
          %260 = sbr.rel (%p258) target = $region40
        $region39: #{tpu_custom_call.1} parent=35 // pred_region
          %s261 = smul.u32 2, %s15
          %s262 = ssub.s32 3, %s261
          %p263 = scmp.lt.s32.totalorder %s262, 2
          %s264 = scalar_select %p263, %s262, 2
          %s265 = smul.u32 128, %s264
          %p266 = scmp.lt.s32.totalorder %s261, 2
          %s267 = scalar_select %p266, %s261, 2
          %s268 = smul.addr %s267, 8
          %s269 = scalar_lea.vmem %s0, %s268
          %s270 = smul.u32 2, %s15
          %s271 = ssub.s32 3, %s270
          %p272 = scmp.lt.s32.totalorder %s271, 2
          %s273 = scalar_select %p272, %s271, 2
          %s274 = smul.u32 128, %s273
        $region40: #{tpu_custom_call.1} parent=35 // pred_fallthru
          _
        // Predicated region
        $region41: #{tpu_custom_call.1} parent=35 // pred_check
          %p275 = pneg %p61
        $region42: #{tpu_custom_call.1} parent=35 // pred_check_branch
          %277 = sbr.rel (%p275) target = $region44
        $region43: #{tpu_custom_call.1} parent=35 // pred_region
          %s278 = sand.u32 %s51, 1
          %s279 = sand.u32 %s51, 1
          %s280 = smul.addr %s279, 48
          %s281 = scalar_lea.vmem [#allocation2], %s280
          %s282 = smul.u32 2, %s15
          %s283 = ssub.s32 3, %s282
          %p284 = scmp.lt.s32.totalorder %s283, 2
          %s285 = scalar_select %p284, %s283, 2
          %s286 = smul.u32 384, %s285
          %p287 = scmp.ne.s32.totalorder 0, %s286
          %s288 = smul.addr %s282, 8
          %s289 = scalar_lea.vmem %s1, %s288
          // Predicated region
          $region45: #{tpu_custom_call.1} parent=43 // pred_check
            %p290 = pneg %p287
          $region46: #{tpu_custom_call.1} parent=43 // pred_check_branch
            %292 = sbr.rel (%p290) target = $region48
          $region47: #{tpu_custom_call.1} parent=43 // pred_region
            // Predicated region
            $region49: #{tpu_custom_call.1} parent=47 // pred_check
              _
            $region50: #{tpu_custom_call.1} parent=47 // pred_check_branch
              %294 = sbr.rel (0) target = $region52
            $region51: #{tpu_custom_call.1} parent=47 // pred_region
              // Predicated region
              $region71: #{tpu_custom_call.1} parent=51 // pred_check
                _
              $region72: #{tpu_custom_call.1} parent=51 // pred_check_branch
                %357 = sbr.rel (0) target = $region74
              $region73: #{tpu_custom_call.1} parent=51 // pred_region
                %s358 = sshrl.u32 %s285, 1
                // While loop
                $region75: #{tpu_custom_call.1} parent=73 // loop_pre_header
                  _
                $region76: #{tpu_custom_call.1} parent=73 // loop_header
                  %s360 = sphi 0, %s362
                  %p361 = scmp.ge.s32.totalorder %s360, %s358
                  %s365 = sphi 0, %s382
                  %s366 = sphi %s289, %s385
                  %s367 = sphi %s281, %s386
                $region77: #{tpu_custom_call.1} parent=73 // loop_header_branch
                  %364 = sbr.rel (%p361) target = $region81
                $region78: #{tpu_custom_call.1} parent=73 // loop_body
                  %v368 = vld [vmem:[%s366] sm:$0xff]
                  %369 = vst [vmem:[%s367] sm:$0xff] %v368
                  %v370 = vld [vmem:[%s366 + $0x8] sm:$0xff]
                  %371 = vst [vmem:[%s367 + $0x8] sm:$0xff] %v370
                  %v372 = vld [vmem:[%s366 + $0x18] sm:$0xff]
                  %373 = vst [vmem:[%s367 + $0x10] sm:$0xff] %v372
                  %v374 = vld [vmem:[%s366 + $0x20] sm:$0xff]
                  %375 = vst [vmem:[%s367 + $0x18] sm:$0xff] %v374
                  %v376 = vld [vmem:[%s366 + $0x30] sm:$0xff]
                  %377 = vst [vmem:[%s367 + $0x20] sm:$0xff] %v376
                  %v378 = vld [vmem:[%s366 + $0x38] sm:$0xff]
                  %379 = vst [vmem:[%s367 + $0x28] sm:$0xff] %v378
                  %s380 = sadd.s32 1, %s365
                  %p381 = scmp.ge.s32.totalorder %s380, %s358
                  %s382 = scalar_select %p381, 0, %s380
                  %s383 = smul.u32 %s382, 16
                  %s384 = smul.u32 %s382, 16
                  %s385 = scalar_lea.vmem %s289, %s383
                  %s386 = scalar_lea.vmem %s281, %s384 [#allocation2]
                $region79: #{tpu_custom_call.1} parent=73 // loop_footer
                  %s362 = sadd.s32 %s360, 1
                $region80: #{tpu_custom_call.1} parent=73 // loop_footer_branch
                  %359 = sbr.rel target = $region76
                $region81: #{tpu_custom_call.1} parent=73 // loop_exit
                  _
                %s387 = sshrl.u32 %s285, 1
                %s388 = sand.u32 %s285, 1
                %s389 = smul.u32 %s387, 2
                %s390 = smul.u32 8, %s389
                %s391 = scalar_lea.vmem %s289, %s390
                %s392 = smul.u32 8, %s389
                %s393 = scalar_lea.vmem %s281, %s392 [#allocation2]
                // While loop
                $region82: #{tpu_custom_call.1} parent=73 // loop_pre_header
                  _
                $region83: #{tpu_custom_call.1} parent=73 // loop_header
                  %s395 = sphi 0, %s397
                  %p396 = scmp.ge.s32.totalorder %s395, %s388
                  %s400 = sphi 0, %s411
                  %s401 = sphi %s391, %s414
                  %s402 = sphi %s393, %s415
                $region84: #{tpu_custom_call.1} parent=73 // loop_header_branch
                  %399 = sbr.rel (%p396) target = $region88
                $region85: #{tpu_custom_call.1} parent=73 // loop_body
                  %v403 = vld [vmem:[%s401] sm:$0xff]
                  %404 = vst [vmem:[%s402] sm:$0xff] %v403
                  %v405 = vld [vmem:[%s401 + $0x18] sm:$0xff]
                  %406 = vst [vmem:[%s402 + $0x10] sm:$0xff] %v405
                  %v407 = vld [vmem:[%s401 + $0x30] sm:$0xff]
                  %408 = vst [vmem:[%s402 + $0x20] sm:$0xff] %v407
                  %s409 = sadd.s32 1, %s400
                  %p410 = scmp.ge.s32.totalorder %s409, %s388
                  %s411 = scalar_select %p410, 0, %s409
                  %s412 = smul.u32 %s411, 8
                  %s413 = smul.u32 %s411, 8
                  %s414 = scalar_lea.vmem %s391, %s412
                  %s415 = scalar_lea.vmem %s393, %s413 [#allocation2]
                $region86: #{tpu_custom_call.1} parent=73 // loop_footer
                  %s397 = sadd.s32 %s395, 1
                $region87: #{tpu_custom_call.1} parent=73 // loop_footer_branch
                  %394 = sbr.rel target = $region83
                $region88: #{tpu_custom_call.1} parent=73 // loop_exit
                  _
              $region74: #{tpu_custom_call.1} parent=51 // pred_fallthru
                _
              // Predicated region
              $region89: #{tpu_custom_call.1} parent=51 // pred_check
                _
              $region90: #{tpu_custom_call.1} parent=51 // pred_check_branch
                %417 = sbr.rel target = $region92
              $region91: #{tpu_custom_call.1} parent=51 // pred_region
                _
              $region92: #{tpu_custom_call.1} parent=51 // pred_fallthru
                _
            $region52: #{tpu_custom_call.1} parent=47 // pred_fallthru
              _
            // Predicated region
            $region53: #{tpu_custom_call.1} parent=47 // pred_check
              _
            $region54: #{tpu_custom_call.1} parent=47 // pred_check_branch
              %296 = sbr.rel target = $region56
            $region55: #{tpu_custom_call.1} parent=47 // pred_region
              %s298 = sshrl.u32 %s285, 1
              // While loop
              $region57: #{tpu_custom_call.1} parent=55 // loop_pre_header
                _
              $region58: #{tpu_custom_call.1} parent=55 // loop_header
                %s300 = sphi 0, %s302
                %p301 = scmp.ge.s32.totalorder %s300, %s298
                %s305 = sphi 0, %s322
                %s306 = sphi %s289, %s325
                %s307 = sphi %s281, %s326
              $region59: #{tpu_custom_call.1} parent=55 // loop_header_branch
                %304 = sbr.rel (%p301) target = $region63
              $region60: #{tpu_custom_call.1} parent=55 // loop_body
                %v308 = vld [vmem:[%s306] sm:$0xff]
                %309 = vst [vmem:[%s307] sm:$0xff] %v308
                %v310 = vld [vmem:[%s306 + $0x8] sm:$0xff]
                %311 = vst [vmem:[%s307 + $0x8] sm:$0xff] %v310
                %v312 = vld [vmem:[%s306 + $0x18] sm:$0xff]
                %313 = vst [vmem:[%s307 + $0x10] sm:$0xff] %v312
                %v314 = vld [vmem:[%s306 + $0x20] sm:$0xff]
                %315 = vst [vmem:[%s307 + $0x18] sm:$0xff] %v314
                %v316 = vld [vmem:[%s306 + $0x30] sm:$0xff]
                %317 = vst [vmem:[%s307 + $0x20] sm:$0xff] %v316
                %v318 = vld [vmem:[%s306 + $0x38] sm:$0xff]
                %319 = vst [vmem:[%s307 + $0x28] sm:$0xff] %v318
                %s320 = sadd.s32 1, %s305
                %p321 = scmp.ge.s32.totalorder %s320, %s298
                %s322 = scalar_select %p321, 0, %s320
                %s323 = smul.u32 %s322, 16
                %s324 = smul.u32 %s322, 16
                %s325 = scalar_lea.vmem %s289, %s323
                %s326 = scalar_lea.vmem %s281, %s324 [#allocation2]
              $region61: #{tpu_custom_call.1} parent=55 // loop_footer
                %s302 = sadd.s32 %s300, 1
              $region62: #{tpu_custom_call.1} parent=55 // loop_footer_branch
                %299 = sbr.rel target = $region58
              $region63: #{tpu_custom_call.1} parent=55 // loop_exit
                _
              %s327 = sshrl.u32 %s285, 1
              %s328 = sand.u32 %s285, 1
              %s329 = smul.u32 %s327, 2
              %s330 = smul.u32 8, %s329
              %s331 = scalar_lea.vmem %s289, %s330
              %s332 = smul.u32 8, %s329
              %s333 = scalar_lea.vmem %s281, %s332 [#allocation2]
              // While loop
              $region64: #{tpu_custom_call.1} parent=55 // loop_pre_header
                _
              $region65: #{tpu_custom_call.1} parent=55 // loop_header
                %s335 = sphi 0, %s337
                %p336 = scmp.ge.s32.totalorder %s335, %s328
                %s340 = sphi 0, %s351
                %s341 = sphi %s331, %s354
                %s342 = sphi %s333, %s355
              $region66: #{tpu_custom_call.1} parent=55 // loop_header_branch
                %339 = sbr.rel (%p336) target = $region70
              $region67: #{tpu_custom_call.1} parent=55 // loop_body
                %v343 = vld [vmem:[%s341] sm:$0xff]
                %344 = vst [vmem:[%s342] sm:$0xff] %v343
                %v345 = vld [vmem:[%s341 + $0x18] sm:$0xff]
                %346 = vst [vmem:[%s342 + $0x10] sm:$0xff] %v345
                %v347 = vld [vmem:[%s341 + $0x30] sm:$0xff]
                %348 = vst [vmem:[%s342 + $0x20] sm:$0xff] %v347
                %s349 = sadd.s32 1, %s340
                %p350 = scmp.ge.s32.totalorder %s349, %s328
                %s351 = scalar_select %p350, 0, %s349
                %s352 = smul.u32 %s351, 8
                %s353 = smul.u32 %s351, 8
                %s354 = scalar_lea.vmem %s331, %s352
                %s355 = scalar_lea.vmem %s333, %s353 [#allocation2]
              $region68: #{tpu_custom_call.1} parent=55 // loop_footer
                %s337 = sadd.s32 %s335, 1
              $region69: #{tpu_custom_call.1} parent=55 // loop_footer_branch
                %334 = sbr.rel target = $region65
              $region70: #{tpu_custom_call.1} parent=55 // loop_exit
                _
            $region56: #{tpu_custom_call.1} parent=47 // pred_fallthru
              _
          $region48: #{tpu_custom_call.1} parent=43 // pred_fallthru
            _
          %418 = vnop
        $region44: #{tpu_custom_call.1} parent=35 // pred_fallthru
          _
      $region36: #{tpu_custom_call.1} parent=5 // pred_fallthru
        _
      %p419 = scmp.le.s32.totalorder 1, %s15
      %p420 = scmp.lt.s32.totalorder %s15, 3
      %p421 = pnand %p419, %p420
      %p422 = pneg %p421
      // Predicated region
      $region93: #{tpu_custom_call.1} parent=5 // pred_check
        _
      $region94: #{tpu_custom_call.1} parent=5 // pred_check_branch
        %424 = sbr.rel (%p421) target = $region96
      $region95: #{tpu_custom_call.1} parent=5 // pred_region
        %s425 = ssub.s32 %s15, 1
        %s426 = sand.u32 %s54, 1
        %s427 = sand.u32 %s54, 1
        %s428 = smul.addr %s427, 48
        %s429 = scalar_lea.vmem [#allocation2], %s428
        // Predicated region
        $region97: #{tpu_custom_call.1} parent=95 // pred_check
          %p430 = pneg %p67
        $region98: #{tpu_custom_call.1} parent=95 // pred_check_branch
          %432 = sbr.rel (%p430) target = $region100
        $region99: #{tpu_custom_call.1} parent=95 // pred_region
          _
        $region100: #{tpu_custom_call.1} parent=95 // pred_fallthru
          _
        %s433 = smul.u32 2, %s20
        %s434 = ssub.s32 3, %s433
        %p435 = scmp.lt.s32.totalorder %s434, 2
        %s436 = scalar_select %p435, %s434, 2
        %s437 = smul.u32 128, %s436
        %p438 = scmp.lt.s32.totalorder %s433, 2
        %s439 = scalar_select %p438, %s433, 2
        %s440 = smul.addr %s439, 8
        %s441 = scalar_lea.vmem %s0, %s440
        %p442 = pneg %p41
        %p443 = pneg %p38
        %s444 = sand.u32 %s54, 1
        %s445 = sand.u32 %s54, 1
        %s446 = smul.addr %s445, 48
        %s447 = scalar_lea.vmem [#allocation2], %s446
        %p448 = pneg %p67
        %p449 = pneg %p64
        %p450 = pneg %p88
        %p451 = pneg %p85
        %p452 = pneg %p109
        %p453 = pneg %p106
        %p454 = pneg %p130
        %p455 = pneg %p127
        %p456 = pneg %p151
        %p457 = pneg %p148
        %p458 = pneg %p172
        %p459 = pneg %p169
        %p460 = pneg %p198
        %p461 = pneg %p195
        %s462 = sand.u32 %s185, 1
        %s463 = sand.u32 %s185, 1
        %s464 = smul.addr %s463, 16
        %s465 = scalar_lea.vmem [#allocation3], %s464
        %p466 = pneg %p224
        %p467 = pneg %p221
        %s468 = sand.u32 %s211, 1
        %s469 = sand.u32 %s211, 1
        %s470 = smul.addr %s469, 48
        %s471 = scalar_lea.vmem [#allocation4], %s470
        %s472 = smul.u32 2, %s20
        %s473 = ssub.s32 3, %s472
        %p474 = scmp.lt.s32.totalorder %s473, 2
        %s475 = scalar_select %p474, %s473, 2
        %s476 = smul.u32 128, %s475
        %p477 = scmp.lt.s32.totalorder %s472, 2
        %s478 = scalar_select %p477, %s472, 2
        %s479 = smul.addr %s478, 8
        %s480 = scalar_lea.vmem %s0, %s479
        %s481 = smul.u32 2, %s20
        %s482 = ssub.s32 3, %s481
        %p483 = scmp.lt.s32.totalorder %s482, 2
        %s484 = scalar_select %p483, %s482, 2
        %s485 = smul.u32 128, %s484
        %s486 = smul.u32 2, %s20
        %s487 = ssub.s32 3, %s486
        %p488 = scmp.lt.s32.totalorder %s487, 2
        %s489 = scalar_select %p488, %s487, 2
        %s490 = smul.u32 384, %s489
        %s491 = smul.u32 2, %s20
        %s492 = ssub.s32 3, %s491
        %p493 = scmp.lt.s32.totalorder %s492, 2
        %s494 = scalar_select %p493, %s492, 2
        %s495 = smul.u32 128, %s494
        %s496 = smul.u32 2, %s20
        %s497 = ssub.s32 3, %s496
        %p498 = scmp.lt.s32.totalorder %s497, 2
        %s499 = scalar_select %p498, %s497, 2
        %s500 = smul.u32 384, %s499
        %v501 = vld [vmem:[%s429] sm:$0xff]
        %v502 = vld [vmem:[%s429 + $0x8] sm:$0xff]
        %v503 = vld [vmem:[%s429 + $0x10] sm:$0xff]
        %v504 = vld [vmem:[%s429 + $0x18] sm:$0xff]
        %v505 = vld [vmem:[%s429 + $0x20] sm:$0xff]
        %v506 = vld [vmem:[%s429 + $0x28] sm:$0xff]
        %v507 = vld [vmem:[%s2] sm:$0x7]
        %vm508 = vcmask 23552
        %v510 = vsel %vm508, %v501, 0
        %v513 = vsel %vm508, %v502, 0
        %v516 = vsel %vm508, %v503, 0
        %v519 = vsel %vm508, %v504, 0
        %v522 = vsel %vm508, %v505, 0
        %v525 = vsel %vm508, %v506, 0
        %vm527 = vcmask 1042432
        %v529 = vsel %vm527, %v507, 0
        %531 = vmatprep.subr.mxu0 0.0
        %v532 = vand.u32 %v529, 4294901760
        %533 = vmatpush1.msra.mxu0 %v532
        %534 = vmatprep.subr.mxu0 0.0
        %535 = vmatpush1.msra.mxu0 0.0
        %536 = vmatprep.subr.mxu0 0.0
        %537 = vmatpush1.msra.mxu0 0.0
        %538 = vmatprep.subr.mxu0 0.0
        %539 = vmatpush1.msra.mxu0 0.0
        %540 = vmatprep.subr.mxu0 0.0
        %541 = vmatpush1.msra.mxu0 0.0
        %542 = vmatprep.subr.mxu0 0.0
        %543 = vmatpush1.msra.mxu0 0.0
        %544 = vmatprep.subr.mxu0 0.0
        %545 = vmatpush1.msra.mxu0 0.0
        %546 = vmatprep.subr.mxu0 0.0
        %547 = vmatpush1.msra.mxu0 0.0
        %548 = vmatprep.subr.mxu0 0.0
        %549 = vmatpush1.msra.mxu0 0.0
        %550 = vmatprep.subr.mxu0 0.0
        %551 = vmatpush1.msra.mxu0 0.0
        %552 = vmatprep.subr.mxu0 0.0
        %553 = vmatpush1.msra.mxu0 0.0
        %554 = vmatprep.subr.mxu0 0.0
        %555 = vmatpush1.msra.mxu0 0.0
        %556 = vmatprep.subr.mxu0 0.0
        %557 = vmatpush1.msra.mxu0 0.0
        %558 = vmatprep.subr.mxu0 0.0
        %559 = vmatpush1.msra.mxu0 0.0
        %560 = vmatprep.subr.mxu0 0.0
        %561 = vmatpush1.msra.mxu0 0.0
        %562 = vmatprep.subr.mxu0 0.0
        %563 = vmatpush1.msra.mxu0 0.0
        %564 = vmatprep.subr.mxu0 0.0
        %565 = vmatpush1.msra.mxu0 0.0
        %566 = vmatprep.subr.mxu0 0.0
        %567 = vmatpush1.msra.mxu0 0.0
        %568 = vmatprep.subr.mxu0 0.0
        %569 = vmatpush1.msra.mxu0 0.0
        %570 = vmatprep.subr.mxu0 0.0
        %571 = vmatpush1.msra.mxu0 0.0
        %572 = vmatprep.subr.mxu0 0.0
        %573 = vmatpush1.msra.mxu0 0.0
        %574 = vmatprep.subr.mxu0 0.0
        %575 = vmatpush1.msra.mxu0 0.0
        %576 = vmatprep.subr.mxu0 0.0
        %577 = vmatpush1.msra.mxu0 0.0
        %578 = vmatprep.subr.mxu0 0.0
        %579 = vmatpush1.msra.mxu0 0.0
        %580 = vmatprep.subr.mxu0 0.0
        %581 = vmatpush1.msra.mxu0 0.0
        %582 = vmatprep.subr.mxu0 0.0
        %583 = vmatpush1.msra.mxu0 0.0
        %584 = vmatprep.subr.mxu0 0.0
        %585 = vmatpush1.msra.mxu0 0.0
        %586 = vmatprep.subr.mxu0 0.0
        %587 = vmatpush1.msra.mxu0 0.0
        %588 = vmatprep.subr.mxu0 0.0
        %589 = vmatpush1.msra.mxu0 0.0
        %590 = vmatprep.subr.mxu0 0.0
        %591 = vmatpush1.msra.mxu0 0.0
        %592 = vmatprep.subr.mxu0 0.0
        %593 = vmatpush1.msra.mxu0 0.0
        %594 = vmatprep.subr.mxu0 0.0
        %595 = vmatpush1.msra.mxu0 0.0
        %596 = vmatprep.mubr.f32.mxu0 0.0
        %v597 = vand.u32 %v510, 4294901760
        %v598 = vsub.f32 %v510, %v597
        %v599 = vand.u32 %v598, 4294901760
        %v600 = vsub.f32 %v598, %v599
        %v601 = vand.u32 %v600, 4294901760
        %602 = vmatmul.mubr.f32.gmra.mrb[0].mxu0 %v601
        %v603 = vpop.f32.mrb[0].mxu0
        %v604 = vadd.f32 0.0, %v603
        %v605 = vpop.f32.mrb[0].mxu0
        %606 = vmatprep.mubr.f32.mxu0 0.0
        %v607 = vand.u32 %v513, 4294901760
        %v608 = vsub.f32 %v513, %v607
        %v609 = vand.u32 %v608, 4294901760
        %v610 = vsub.f32 %v608, %v609
        %v611 = vand.u32 %v610, 4294901760
        %612 = vmatmul.mubr.f32.gmra.mrb[0].mxu0 %v611
        %v613 = vpop.f32.mrb[0].mxu0
        %v614 = vadd.f32 0.0, %v613
        %v615 = vpop.f32.mrb[0].mxu0
        %616 = vmatprep.mubr.f32.mxu0 0.0
        %v617 = vand.u32 %v516, 4294901760
        %v618 = vsub.f32 %v516, %v617
        %v619 = vand.u32 %v618, 4294901760
        %v620 = vsub.f32 %v618, %v619
        %v621 = vand.u32 %v620, 4294901760
        %622 = vmatmul.mubr.f32.gmra.mrb[0].mxu0 %v621
        %v623 = vpop.f32.mrb[0].mxu0
        %v624 = vadd.f32 0.0, %v623
        %v625 = vpop.f32.mrb[0].mxu0
        %626 = vmatprep.mubr.f32.mxu0 0.0
        %v627 = vand.u32 %v519, 4294901760
        %v628 = vsub.f32 %v519, %v627
        %v629 = vand.u32 %v628, 4294901760
        %v630 = vsub.f32 %v628, %v629
        %v631 = vand.u32 %v630, 4294901760
        %632 = vmatmul.mubr.f32.gmra.mrb[0].mxu0 %v631
        %v633 = vpop.f32.mrb[0].mxu0
        %v634 = vadd.f32 0.0, %v633
        %v635 = vpop.f32.mrb[0].mxu0
        %636 = vmatprep.mubr.f32.mxu0 0.0
        %v637 = vand.u32 %v522, 4294901760
        %v638 = vsub.f32 %v522, %v637
        %v639 = vand.u32 %v638, 4294901760
        %v640 = vsub.f32 %v638, %v639
        %v641 = vand.u32 %v640, 4294901760
        %642 = vmatmul.mubr.f32.gmra.mrb[0].mxu0 %v641
        %v643 = vpop.f32.mrb[0].mxu0
        %v644 = vadd.f32 0.0, %v643
        %v645 = vpop.f32.mrb[0].mxu0
        %646 = vmatprep.mubr.f32.mxu0 0.0
        %v647 = vand.u32 %v525, 4294901760
        %v648 = vsub.f32 %v525, %v647
        %v649 = vand.u32 %v648, 4294901760
        %v650 = vsub.f32 %v648, %v649
        %v651 = vand.u32 %v650, 4294901760
        %652 = vmatmul.mubr.f32.gmra.mrb[0].mxu0 %v651
        %v653 = vpop.f32.mrb[0].mxu0
        %v654 = vadd.f32 0.0, %v653
        %v655 = vpop.f32.mrb[0].mxu0
        %656 = vdwg.mxu0
        %657 = vmatprep.subr.mxu0 0.0
        %v658 = vand.u32 %v529, 4294901760
        %v659 = vsub.f32 %v529, %v658
        %v660 = vand.u32 %v659, 4294901760
        %v661 = vsub.f32 %v659, %v660
        %v662 = vand.u32 %v661, 4294901760
        %663 = vmatpush1.msra.mxu0 %v662
        %664 = vmatprep.subr.mxu0 0.0
        %665 = vmatpush1.msra.mxu0 0.0
        %666 = vmatprep.subr.mxu0 0.0
        %667 = vmatpush1.msra.mxu0 0.0
        %668 = vmatprep.subr.mxu0 0.0
        %669 = vmatpush1.msra.mxu0 0.0
        %670 = vmatprep.subr.mxu0 0.0
        %671 = vmatpush1.msra.mxu0 0.0
        %672 = vmatprep.subr.mxu0 0.0
        %673 = vmatpush1.msra.mxu0 0.0
        %674 = vmatprep.subr.mxu0 0.0
        %675 = vmatpush1.msra.mxu0 0.0
        %676 = vmatprep.subr.mxu0 0.0
        %677 = vmatpush1.msra.mxu0 0.0
        %678 = vmatprep.subr.mxu0 0.0
        %679 = vmatpush1.msra.mxu0 0.0
        %680 = vmatprep.subr.mxu0 0.0
        %681 = vmatpush1.msra.mxu0 0.0
        %682 = vmatprep.subr.mxu0 0.0
        %683 = vmatpush1.msra.mxu0 0.0
        %684 = vmatprep.subr.mxu0 0.0
        %685 = vmatpush1.msra.mxu0 0.0
        %686 = vmatprep.subr.mxu0 0.0
        %687 = vmatpush1.msra.mxu0 0.0
        %688 = vmatprep.subr.mxu0 0.0
        %689 = vmatpush1.msra.mxu0 0.0
        %690 = vmatprep.subr.mxu0 0.0
        %691 = vmatpush1.msra.mxu0 0.0
        %692 = vmatprep.subr.mxu0 0.0
        %693 = vmatpush1.msra.mxu0 0.0
        %694 = vmatprep.subr.mxu0 0.0
        %695 = vmatpush1.msra.mxu0 0.0
        %696 = vmatprep.subr.mxu0 0.0
        %697 = vmatpush1.msra.mxu0 0.0
        %698 = vmatprep.subr.mxu0 0.0
        %699 = vmatpush1.msra.mxu0 0.0
        %700 = vmatprep.subr.mxu0 0.0
        %701 = vmatpush1.msra.mxu0 0.0
        %702 = vmatprep.subr.mxu0 0.0
        %703 = vmatpush1.msra.mxu0 0.0
        %704 = vmatprep.subr.mxu0 0.0
        %705 = vmatpush1.msra.mxu0 0.0
        %706 = vmatprep.subr.mxu0 0.0
        %707 = vmatpush1.msra.mxu0 0.0
        %708 = vmatprep.subr.mxu0 0.0
        %709 = vmatpush1.msra.mxu0 0.0
        %710 = vmatprep.subr.mxu0 0.0
        %711 = vmatpush1.msra.mxu0 0.0
        %712 = vmatprep.subr.mxu0 0.0
        %713 = vmatpush1.msra.mxu0 0.0
        %714 = vmatprep.subr.mxu0 0.0
        %715 = vmatpush1.msra.mxu0 0.0
        %716 = vmatprep.subr.mxu0 0.0
        %717 = vmatpush1.msra.mxu0 0.0
        %718 = vmatprep.subr.mxu0 0.0
        %719 = vmatpush1.msra.mxu0 0.0
        %720 = vmatprep.subr.mxu0 0.0
        %721 = vmatpush1.msra.mxu0 0.0
        %722 = vmatprep.subr.mxu0 0.0
        %723 = vmatpush1.msra.mxu0 0.0
        %724 = vmatprep.subr.mxu0 0.0
        %725 = vmatpush1.msra.mxu0 0.0
        %726 = vmatprep.mubr.f32.mxu0 0.0
        %v727 = vand.u32 %v510, 4294901760
        %728 = vmatmul.mubr.f32.gmra.mrb[0].mxu0 %v727
        %v729 = vpop.f32.mrb[0].mxu0
        %v730 = vadd.f32 %v604, %v729
        %v731 = vpop.f32.mrb[0].mxu0
        %732 = vmatprep.mubr.f32.mxu0 0.0
        %v733 = vand.u32 %v513, 4294901760
        %734 = vmatmul.mubr.f32.gmra.mrb[0].mxu0 %v733
        %v735 = vpop.f32.mrb[0].mxu0
        %v736 = vadd.f32 %v614, %v735
        %v737 = vpop.f32.mrb[0].mxu0
        %738 = vmatprep.mubr.f32.mxu0 0.0
        %v739 = vand.u32 %v516, 4294901760
        %740 = vmatmul.mubr.f32.gmra.mrb[0].mxu0 %v739
        %v741 = vpop.f32.mrb[0].mxu0
        %v742 = vadd.f32 %v624, %v741
        %v743 = vpop.f32.mrb[0].mxu0
        %744 = vmatprep.mubr.f32.mxu0 0.0
        %v745 = vand.u32 %v519, 4294901760
        %746 = vmatmul.mubr.f32.gmra.mrb[0].mxu0 %v745
        %v747 = vpop.f32.mrb[0].mxu0
        %v748 = vadd.f32 %v634, %v747
        %v749 = vpop.f32.mrb[0].mxu0
        %750 = vmatprep.mubr.f32.mxu0 0.0
        %v751 = vand.u32 %v522, 4294901760
        %752 = vmatmul.mubr.f32.gmra.mrb[0].mxu0 %v751
        %v753 = vpop.f32.mrb[0].mxu0
        %v754 = vadd.f32 %v644, %v753
        %v755 = vpop.f32.mrb[0].mxu0
        %756 = vmatprep.mubr.f32.mxu0 0.0
        %v757 = vand.u32 %v525, 4294901760
        %758 = vmatmul.mubr.f32.gmra.mrb[0].mxu0 %v757
        %v759 = vpop.f32.mrb[0].mxu0
        %v760 = vadd.f32 %v654, %v759
        %v761 = vpop.f32.mrb[0].mxu0
        %762 = vdwg.mxu0
        %763 = vmatprep.subr.mxu0 0.0
        %v764 = vand.u32 %v529, 4294901760
        %v765 = vsub.f32 %v529, %v764
        %766 = vmatpush1.msra.mxu0 %v765
        %767 = vmatprep.subr.mxu0 0.0
        %768 = vmatpush1.msra.mxu0 0.0
        %769 = vmatprep.subr.mxu0 0.0
        %770 = vmatpush1.msra.mxu0 0.0
        %771 = vmatprep.subr.mxu0 0.0
        %772 = vmatpush1.msra.mxu0 0.0
        %773 = vmatprep.subr.mxu0 0.0
        %774 = vmatpush1.msra.mxu0 0.0
        %775 = vmatprep.subr.mxu0 0.0
        %776 = vmatpush1.msra.mxu0 0.0
        %777 = vmatprep.subr.mxu0 0.0
        %778 = vmatpush1.msra.mxu0 0.0
        %779 = vmatprep.subr.mxu0 0.0
        %780 = vmatpush1.msra.mxu0 0.0
        %781 = vmatprep.subr.mxu0 0.0
        %782 = vmatpush1.msra.mxu0 0.0
        %783 = vmatprep.subr.mxu0 0.0
        %784 = vmatpush1.msra.mxu0 0.0
        %785 = vmatprep.subr.mxu0 0.0
        %786 = vmatpush1.msra.mxu0 0.0
        %787 = vmatprep.subr.mxu0 0.0
        %788 = vmatpush1.msra.mxu0 0.0
        %789 = vmatprep.subr.mxu0 0.0
        %790 = vmatpush1.msra.mxu0 0.0
        %791 = vmatprep.subr.mxu0 0.0
        %792 = vmatpush1.msra.mxu0 0.0
        %793 = vmatprep.subr.mxu0 0.0
        %794 = vmatpush1.msra.mxu0 0.0
        %795 = vmatprep.subr.mxu0 0.0
        %796 = vmatpush1.msra.mxu0 0.0
        %797 = vmatprep.subr.mxu0 0.0
        %798 = vmatpush1.msra.mxu0 0.0
        %799 = vmatprep.subr.mxu0 0.0
        %800 = vmatpush1.msra.mxu0 0.0
        %801 = vmatprep.subr.mxu0 0.0
        %802 = vmatpush1.msra.mxu0 0.0
        %803 = vmatprep.subr.mxu0 0.0
        %804 = vmatpush1.msra.mxu0 0.0
        %805 = vmatprep.subr.mxu0 0.0
        %806 = vmatpush1.msra.mxu0 0.0
        %807 = vmatprep.subr.mxu0 0.0
        %808 = vmatpush1.msra.mxu0 0.0
        %809 = vmatprep.subr.mxu0 0.0
        %810 = vmatpush1.msra.mxu0 0.0
        %811 = vmatprep.subr.mxu0 0.0
        %812 = vmatpush1.msra.mxu0 0.0
        %813 = vmatprep.subr.mxu0 0.0
        %814 = vmatpush1.msra.mxu0 0.0
        %815 = vmatprep.subr.mxu0 0.0
        %816 = vmatpush1.msra.mxu0 0.0
        %817 = vmatprep.subr.mxu0 0.0
        %818 = vmatpush1.msra.mxu0 0.0
        %819 = vmatprep.subr.mxu0 0.0
        %820 = vmatpush1.msra.mxu0 0.0
        %821 = vmatprep.subr.mxu0 0.0
        %822 = vmatpush1.msra.mxu0 0.0
        %823 = vmatprep.subr.mxu0 0.0
        %824 = vmatpush1.msra.mxu0 0.0
        %825 = vmatprep.subr.mxu0 0.0
        %826 = vmatpush1.msra.mxu0 0.0
        %827 = vmatprep.subr.mxu0 0.0
        %828 = vmatpush1.msra.mxu0 0.0
        %829 = vmatprep.mubr.f32.mxu0 0.0
        %v830 = vand.u32 %v510, 4294901760
        %v831 = vsub.f32 %v510, %v830
        %832 = vmatmul.mubr.f32.gmra.mrb[0].mxu0 %v831
        %v833 = vpop.f32.mrb[0].mxu0
        %v834 = vadd.f32 %v730, %v833
        %v835 = vpop.f32.mrb[0].mxu0
        %836 = vmatprep.mubr.f32.mxu0 0.0
        %v837 = vand.u32 %v513, 4294901760
        %v838 = vsub.f32 %v513, %v837
        %839 = vmatmul.mubr.f32.gmra.mrb[0].mxu0 %v838
        %v840 = vpop.f32.mrb[0].mxu0
        %v841 = vadd.f32 %v736, %v840
        %v842 = vpop.f32.mrb[0].mxu0
        %843 = vmatprep.mubr.f32.mxu0 0.0
        %v844 = vand.u32 %v516, 4294901760
        %v845 = vsub.f32 %v516, %v844
        %846 = vmatmul.mubr.f32.gmra.mrb[0].mxu0 %v845
        %v847 = vpop.f32.mrb[0].mxu0
        %v848 = vadd.f32 %v742, %v847
        %v849 = vpop.f32.mrb[0].mxu0
        %850 = vmatprep.mubr.f32.mxu0 0.0
        %v851 = vand.u32 %v519, 4294901760
        %v852 = vsub.f32 %v519, %v851
        %853 = vmatmul.mubr.f32.gmra.mrb[0].mxu0 %v852
        %v854 = vpop.f32.mrb[0].mxu0
        %v855 = vadd.f32 %v748, %v854
        %v856 = vpop.f32.mrb[0].mxu0
        %857 = vmatprep.mubr.f32.mxu0 0.0
        %v858 = vand.u32 %v522, 4294901760
        %v859 = vsub.f32 %v522, %v858
        %860 = vmatmul.mubr.f32.gmra.mrb[0].mxu0 %v859
        %v861 = vpop.f32.mrb[0].mxu0
        %v862 = vadd.f32 %v754, %v861
        %v863 = vpop.f32.mrb[0].mxu0
        %864 = vmatprep.mubr.f32.mxu0 0.0
        %v865 = vand.u32 %v525, 4294901760
        %v866 = vsub.f32 %v525, %v865
        %867 = vmatmul.mubr.f32.gmra.mrb[0].mxu0 %v866
        %v868 = vpop.f32.mrb[0].mxu0
        %v869 = vadd.f32 %v760, %v868
        %v870 = vpop.f32.mrb[0].mxu0
        %871 = vdwg.mxu0
        %872 = vmatprep.subr.mxu0 0.0
        %v873 = vand.u32 %v529, 4294901760
        %874 = vmatpush1.msra.mxu0 %v873
        %875 = vmatprep.subr.mxu0 0.0
        %876 = vmatpush1.msra.mxu0 0.0
        %877 = vmatprep.subr.mxu0 0.0
        %878 = vmatpush1.msra.mxu0 0.0
        %879 = vmatprep.subr.mxu0 0.0
        %880 = vmatpush1.msra.mxu0 0.0
        %881 = vmatprep.subr.mxu0 0.0
        %882 = vmatpush1.msra.mxu0 0.0
        %883 = vmatprep.subr.mxu0 0.0
        %884 = vmatpush1.msra.mxu0 0.0
        %885 = vmatprep.subr.mxu0 0.0
        %886 = vmatpush1.msra.mxu0 0.0
        %887 = vmatprep.subr.mxu0 0.0
        %888 = vmatpush1.msra.mxu0 0.0
        %889 = vmatprep.subr.mxu0 0.0
        %890 = vmatpush1.msra.mxu0 0.0
        %891 = vmatprep.subr.mxu0 0.0
        %892 = vmatpush1.msra.mxu0 0.0
        %893 = vmatprep.subr.mxu0 0.0
        %894 = vmatpush1.msra.mxu0 0.0
        %895 = vmatprep.subr.mxu0 0.0
        %896 = vmatpush1.msra.mxu0 0.0
        %897 = vmatprep.subr.mxu0 0.0
        %898 = vmatpush1.msra.mxu0 0.0
        %899 = vmatprep.subr.mxu0 0.0
        %900 = vmatpush1.msra.mxu0 0.0
        %901 = vmatprep.subr.mxu0 0.0
        %902 = vmatpush1.msra.mxu0 0.0
        %903 = vmatprep.subr.mxu0 0.0
        %904 = vmatpush1.msra.mxu0 0.0
        %905 = vmatprep.subr.mxu0 0.0
        %906 = vmatpush1.msra.mxu0 0.0
        %907 = vmatprep.subr.mxu0 0.0
        %908 = vmatpush1.msra.mxu0 0.0
        %909 = vmatprep.subr.mxu0 0.0
        %910 = vmatpush1.msra.mxu0 0.0
        %911 = vmatprep.subr.mxu0 0.0
        %912 = vmatpush1.msra.mxu0 0.0
        %913 = vmatprep.subr.mxu0 0.0
        %914 = vmatpush1.msra.mxu0 0.0
        %915 = vmatprep.subr.mxu0 0.0
        %916 = vmatpush1.msra.mxu0 0.0
        %917 = vmatprep.subr.mxu0 0.0
        %918 = vmatpush1.msra.mxu0 0.0
        %919 = vmatprep.subr.mxu0 0.0
        %920 = vmatpush1.msra.mxu0 0.0
        %921 = vmatprep.subr.mxu0 0.0
        %922 = vmatpush1.msra.mxu0 0.0
        %923 = vmatprep.subr.mxu0 0.0
        %924 = vmatpush1.msra.mxu0 0.0
        %925 = vmatprep.subr.mxu0 0.0
        %926 = vmatpush1.msra.mxu0 0.0
        %927 = vmatprep.subr.mxu0 0.0
        %928 = vmatpush1.msra.mxu0 0.0
        %929 = vmatprep.subr.mxu0 0.0
        %930 = vmatpush1.msra.mxu0 0.0
        %931 = vmatprep.subr.mxu0 0.0
        %932 = vmatpush1.msra.mxu0 0.0
        %933 = vmatprep.subr.mxu0 0.0
        %934 = vmatpush1.msra.mxu0 0.0
        %935 = vmatprep.subr.mxu0 0.0
        %936 = vmatpush1.msra.mxu0 0.0
        %937 = vmatprep.mubr.f32.mxu0 0.0
        %v938 = vand.u32 %v510, 4294901760
        %v939 = vsub.f32 %v510, %v938
        %v940 = vand.u32 %v939, 4294901760
        %941 = vmatmul.mubr.f32.gmra.mrb[0].mxu0 %v940
        %v942 = vpop.f32.mrb[0].mxu0
        %v943 = vadd.f32 %v834, %v942
        %v944 = vpop.f32.mrb[0].mxu0
        %945 = vmatprep.mubr.f32.mxu0 0.0
        %v946 = vand.u32 %v513, 4294901760
        %v947 = vsub.f32 %v513, %v946
        %v948 = vand.u32 %v947, 4294901760
        %949 = vmatmul.mubr.f32.gmra.mrb[0].mxu0 %v948
        %v950 = vpop.f32.mrb[0].mxu0
        %v951 = vadd.f32 %v841, %v950
        %v952 = vpop.f32.mrb[0].mxu0
        %953 = vmatprep.mubr.f32.mxu0 0.0
        %v954 = vand.u32 %v516, 4294901760
        %v955 = vsub.f32 %v516, %v954
        %v956 = vand.u32 %v955, 4294901760
        %957 = vmatmul.mubr.f32.gmra.mrb[0].mxu0 %v956
        %v958 = vpop.f32.mrb[0].mxu0
        %v959 = vadd.f32 %v848, %v958
        %v960 = vpop.f32.mrb[0].mxu0
        %961 = vmatprep.mubr.f32.mxu0 0.0
        %v962 = vand.u32 %v519, 4294901760
        %v963 = vsub.f32 %v519, %v962
        %v964 = vand.u32 %v963, 4294901760
        %965 = vmatmul.mubr.f32.gmra.mrb[0].mxu0 %v964
        %v966 = vpop.f32.mrb[0].mxu0
        %v967 = vadd.f32 %v855, %v966
        %v968 = vpop.f32.mrb[0].mxu0
        %969 = vmatprep.mubr.f32.mxu0 0.0
        %v970 = vand.u32 %v522, 4294901760
        %v971 = vsub.f32 %v522, %v970
        %v972 = vand.u32 %v971, 4294901760
        %973 = vmatmul.mubr.f32.gmra.mrb[0].mxu0 %v972
        %v974 = vpop.f32.mrb[0].mxu0
        %v975 = vadd.f32 %v862, %v974
        %v976 = vpop.f32.mrb[0].mxu0
        %977 = vmatprep.mubr.f32.mxu0 0.0
        %v978 = vand.u32 %v525, 4294901760
        %v979 = vsub.f32 %v525, %v978
        %v980 = vand.u32 %v979, 4294901760
        %981 = vmatmul.mubr.f32.gmra.mrb[0].mxu0 %v980
        %v982 = vpop.f32.mrb[0].mxu0
        %v983 = vadd.f32 %v869, %v982
        %v984 = vpop.f32.mrb[0].mxu0
        %985 = vdwg.mxu0
        %986 = vmatprep.subr.mxu0 0.0
        %v987 = vand.u32 %v529, 4294901760
        %v988 = vsub.f32 %v529, %v987
        %v989 = vand.u32 %v988, 4294901760
        %990 = vmatpush1.msra.mxu0 %v989
        %991 = vmatprep.subr.mxu0 0.0
        %992 = vmatpush1.msra.mxu0 0.0
        %993 = vmatprep.subr.mxu0 0.0
        %994 = vmatpush1.msra.mxu0 0.0
        %995 = vmatprep.subr.mxu0 0.0
        %996 = vmatpush1.msra.mxu0 0.0
        %997 = vmatprep.subr.mxu0 0.0
        %998 = vmatpush1.msra.mxu0 0.0
        %999 = vmatprep.subr.mxu0 0.0
        %1000 = vmatpush1.msra.mxu0 0.0
        %1001 = vmatprep.subr.mxu0 0.0
        %1002 = vmatpush1.msra.mxu0 0.0
        %1003 = vmatprep.subr.mxu0 0.0
        %1004 = vmatpush1.msra.mxu0 0.0
        %1005 = vmatprep.subr.mxu0 0.0
        %1006 = vmatpush1.msra.mxu0 0.0
        %1007 = vmatprep.subr.mxu0 0.0
        %1008 = vmatpush1.msra.mxu0 0.0
        %1009 = vmatprep.subr.mxu0 0.0
        %1010 = vmatpush1.msra.mxu0 0.0
        %1011 = vmatprep.subr.mxu0 0.0
        %1012 = vmatpush1.msra.mxu0 0.0
        %1013 = vmatprep.subr.mxu0 0.0
        %1014 = vmatpush1.msra.mxu0 0.0
        %1015 = vmatprep.subr.mxu0 0.0
        %1016 = vmatpush1.msra.mxu0 0.0
        %1017 = vmatprep.subr.mxu0 0.0
        %1018 = vmatpush1.msra.mxu0 0.0
        %1019 = vmatprep.subr.mxu0 0.0
        %1020 = vmatpush1.msra.mxu0 0.0
        %1021 = vmatprep.subr.mxu0 0.0
        %1022 = vmatpush1.msra.mxu0 0.0
        %1023 = vmatprep.subr.mxu0 0.0
        %1024 = vmatpush1.msra.mxu0 0.0
        %1025 = vmatprep.subr.mxu0 0.0
        %1026 = vmatpush1.msra.mxu0 0.0
        %1027 = vmatprep.subr.mxu0 0.0
        %1028 = vmatpush1.msra.mxu0 0.0
        %1029 = vmatprep.subr.mxu0 0.0
        %1030 = vmatpush1.msra.mxu0 0.0
        %1031 = vmatprep.subr.mxu0 0.0
        %1032 = vmatpush1.msra.mxu0 0.0
        %1033 = vmatprep.subr.mxu0 0.0
        %1034 = vmatpush1.msra.mxu0 0.0
        %1035 = vmatprep.subr.mxu0 0.0
        %1036 = vmatpush1.msra.mxu0 0.0
        %1037 = vmatprep.subr.mxu0 0.0
        %1038 = vmatpush1.msra.mxu0 0.0
        %1039 = vmatprep.subr.mxu0 0.0
        %1040 = vmatpush1.msra.mxu0 0.0
        %1041 = vmatprep.subr.mxu0 0.0
        %1042 = vmatpush1.msra.mxu0 0.0
        %1043 = vmatprep.subr.mxu0 0.0
        %1044 = vmatpush1.msra.mxu0 0.0
        %1045 = vmatprep.subr.mxu0 0.0
        %1046 = vmatpush1.msra.mxu0 0.0
        %1047 = vmatprep.subr.mxu0 0.0
        %1048 = vmatpush1.msra.mxu0 0.0
        %1049 = vmatprep.subr.mxu0 0.0
        %1050 = vmatpush1.msra.mxu0 0.0
        %1051 = vmatprep.subr.mxu0 0.0
        %1052 = vmatpush1.msra.mxu0 0.0
        %1053 = vmatprep.mubr.f32.mxu0 0.0
        %v1054 = vand.u32 %v510, 4294901760
        %1055 = vmatmul.mubr.f32.gmra.mrb[0].mxu0 %v1054
        %v1056 = vpop.f32.mrb[0].mxu0
        %v1057 = vadd.f32 %v943, %v1056
        %v1058 = vpop.f32.mrb[0].mxu0
        %1059 = vmatprep.mubr.f32.mxu0 0.0
        %v1060 = vand.u32 %v513, 4294901760
        %1061 = vmatmul.mubr.f32.gmra.mrb[0].mxu0 %v1060
        %v1062 = vpop.f32.mrb[0].mxu0
        %v1063 = vadd.f32 %v951, %v1062
        %v1064 = vpop.f32.mrb[0].mxu0
        %1065 = vmatprep.mubr.f32.mxu0 0.0
        %v1066 = vand.u32 %v516, 4294901760
        %1067 = vmatmul.mubr.f32.gmra.mrb[0].mxu0 %v1066
        %v1068 = vpop.f32.mrb[0].mxu0
        %v1069 = vadd.f32 %v959, %v1068
        %v1070 = vpop.f32.mrb[0].mxu0
        %1071 = vmatprep.mubr.f32.mxu0 0.0
        %v1072 = vand.u32 %v519, 4294901760
        %1073 = vmatmul.mubr.f32.gmra.mrb[0].mxu0 %v1072
        %v1074 = vpop.f32.mrb[0].mxu0
        %v1075 = vadd.f32 %v967, %v1074
        %v1076 = vpop.f32.mrb[0].mxu0
        %1077 = vmatprep.mubr.f32.mxu0 0.0
        %v1078 = vand.u32 %v522, 4294901760
        %1079 = vmatmul.mubr.f32.gmra.mrb[0].mxu0 %v1078
        %v1080 = vpop.f32.mrb[0].mxu0
        %v1081 = vadd.f32 %v975, %v1080
        %v1082 = vpop.f32.mrb[0].mxu0
        %1083 = vmatprep.mubr.f32.mxu0 0.0
        %v1084 = vand.u32 %v525, 4294901760
        %1085 = vmatmul.mubr.f32.gmra.mrb[0].mxu0 %v1084
        %v1086 = vpop.f32.mrb[0].mxu0
        %v1087 = vadd.f32 %v983, %v1086
        %v1088 = vpop.f32.mrb[0].mxu0
        %1089 = vdwg.mxu0
        %1090 = vmatprep.subr.mxu0 0.0
        %v1091 = vand.u32 %v529, 4294901760
        %1092 = vmatpush1.msra.mxu0 %v1091
        %1093 = vmatprep.subr.mxu0 0.0
        %1094 = vmatpush1.msra.mxu0 0.0
        %1095 = vmatprep.subr.mxu0 0.0
        %1096 = vmatpush1.msra.mxu0 0.0
        %1097 = vmatprep.subr.mxu0 0.0
        %1098 = vmatpush1.msra.mxu0 0.0
        %1099 = vmatprep.subr.mxu0 0.0
        %1100 = vmatpush1.msra.mxu0 0.0
        %1101 = vmatprep.subr.mxu0 0.0
        %1102 = vmatpush1.msra.mxu0 0.0
        %1103 = vmatprep.subr.mxu0 0.0
        %1104 = vmatpush1.msra.mxu0 0.0
        %1105 = vmatprep.subr.mxu0 0.0
        %1106 = vmatpush1.msra.mxu0 0.0
        %1107 = vmatprep.subr.mxu0 0.0
        %1108 = vmatpush1.msra.mxu0 0.0
        %1109 = vmatprep.subr.mxu0 0.0
        %1110 = vmatpush1.msra.mxu0 0.0
        %1111 = vmatprep.subr.mxu0 0.0
        %1112 = vmatpush1.msra.mxu0 0.0
        %1113 = vmatprep.subr.mxu0 0.0
        %1114 = vmatpush1.msra.mxu0 0.0
        %1115 = vmatprep.subr.mxu0 0.0
        %1116 = vmatpush1.msra.mxu0 0.0
        %1117 = vmatprep.subr.mxu0 0.0
        %1118 = vmatpush1.msra.mxu0 0.0
        %1119 = vmatprep.subr.mxu0 0.0
        %1120 = vmatpush1.msra.mxu0 0.0
        %1121 = vmatprep.subr.mxu0 0.0
        %1122 = vmatpush1.msra.mxu0 0.0
        %1123 = vmatprep.subr.mxu0 0.0
        %1124 = vmatpush1.msra.mxu0 0.0
        %1125 = vmatprep.subr.mxu0 0.0
        %1126 = vmatpush1.msra.mxu0 0.0
        %1127 = vmatprep.subr.mxu0 0.0
        %1128 = vmatpush1.msra.mxu0 0.0
        %1129 = vmatprep.subr.mxu0 0.0
        %1130 = vmatpush1.msra.mxu0 0.0
        %1131 = vmatprep.subr.mxu0 0.0
        %1132 = vmatpush1.msra.mxu0 0.0
        %1133 = vmatprep.subr.mxu0 0.0
        %1134 = vmatpush1.msra.mxu0 0.0
        %1135 = vmatprep.subr.mxu0 0.0
        %1136 = vmatpush1.msra.mxu0 0.0
        %1137 = vmatprep.subr.mxu0 0.0
        %1138 = vmatpush1.msra.mxu0 0.0
        %1139 = vmatprep.subr.mxu0 0.0
        %1140 = vmatpush1.msra.mxu0 0.0
        %1141 = vmatprep.subr.mxu0 0.0
        %1142 = vmatpush1.msra.mxu0 0.0
        %1143 = vmatprep.subr.mxu0 0.0
        %1144 = vmatpush1.msra.mxu0 0.0
        %1145 = vmatprep.subr.mxu0 0.0
        %1146 = vmatpush1.msra.mxu0 0.0
        %1147 = vmatprep.subr.mxu0 0.0
        %1148 = vmatpush1.msra.mxu0 0.0
        %1149 = vmatprep.subr.mxu0 0.0
        %1150 = vmatpush1.msra.mxu0 0.0
        %1151 = vmatprep.subr.mxu0 0.0
        %1152 = vmatpush1.msra.mxu0 0.0
        %1153 = vmatprep.subr.mxu0 0.0
        %1154 = vmatpush1.msra.mxu0 0.0
        %1155 = vmatprep.mubr.f32.mxu0 0.0
        %v1156 = vand.u32 %v510, 4294901760
        %1157 = vmatmul.mubr.f32.gmra.mrb[0].mxu0 %v1156
        %v1158 = vpop.f32.mrb[0].mxu0
        %v1159 = vadd.f32 %v1057, %v1158
        %v1160 = vpop.f32.mrb[0].mxu0
        %1161 = vmatprep.mubr.f32.mxu0 0.0
        %v1162 = vand.u32 %v513, 4294901760
        %1163 = vmatmul.mubr.f32.gmra.mrb[0].mxu0 %v1162
        %v1164 = vpop.f32.mrb[0].mxu0
        %v1165 = vadd.f32 %v1063, %v1164
        %v1166 = vpop.f32.mrb[0].mxu0
        %1167 = vmatprep.mubr.f32.mxu0 0.0
        %v1168 = vand.u32 %v516, 4294901760
        %1169 = vmatmul.mubr.f32.gmra.mrb[0].mxu0 %v1168
        %v1170 = vpop.f32.mrb[0].mxu0
        %v1171 = vadd.f32 %v1069, %v1170
        %v1172 = vpop.f32.mrb[0].mxu0
        %1173 = vmatprep.mubr.f32.mxu0 0.0
        %v1174 = vand.u32 %v519, 4294901760
        %1175 = vmatmul.mubr.f32.gmra.mrb[0].mxu0 %v1174
        %v1176 = vpop.f32.mrb[0].mxu0
        %v1177 = vadd.f32 %v1075, %v1176
        %v1178 = vpop.f32.mrb[0].mxu0
        %1179 = vmatprep.mubr.f32.mxu0 0.0
        %v1180 = vand.u32 %v522, 4294901760
        %1181 = vmatmul.mubr.f32.gmra.mrb[0].mxu0 %v1180
        %v1182 = vpop.f32.mrb[0].mxu0
        %v1183 = vadd.f32 %v1081, %v1182
        %v1184 = vpop.f32.mrb[0].mxu0
        %1185 = vmatprep.mubr.f32.mxu0 0.0
        %v1186 = vand.u32 %v525, 4294901760
        %1187 = vmatmul.mubr.f32.gmra.mrb[0].mxu0 %v1186
        %v1188 = vpop.f32.mrb[0].mxu0
        %v1189 = vadd.f32 %v1087, %v1188
        %v1190 = vpop.f32.mrb[0].mxu0
        %1191 = vdwg.mxu0
        %v1192 = vmul.f32 %v1159, %v1159
        %v1193 = vmul.f32 %v1165, %v1165
        %v1194 = vmul.f32 %v1171, %v1171
        %v1195 = vmul.f32 %v1177, %v1177
        %v1196 = vadd.f32 %v1192, %v1194
        %v1197 = vadd.f32 %v1193, %v1195
        %v1198 = vmul.f32 %v1183, %v1183
        %v1199 = vmul.f32 %v1189, %v1189
        %v1200 = vadd.f32 %v1196, %v1198
        %v1201 = vadd.f32 %v1197, %v1199
        %v1202 = vmax.f32 %v1200, 1e-08
        %v1203 = vmax.f32 %v1201, 1e-08
        %v1204 = vrsqrt.pop %v1202
        %v1205 = vmul.f32 %v1202, %v1204
        %vm1206 = vcmp.eq.f32.partialorder %v1202, inf
        %v1207 = vsel %vm1206, %v1202, %v1205
        %vm1208 = vcmp.eq.f32.partialorder %v1202, 0.0
        %v1209 = vand.u32 %v1202, 2147483648
        %v1210 = vsel %vm1208, %v1209, %v1207
        %v1211 = vrsqrt.pop %v1203
        %v1212 = vmul.f32 %v1203, %v1211
        %vm1213 = vcmp.eq.f32.partialorder %v1203, inf
        %v1214 = vsel %vm1213, %v1203, %v1212
        %vm1215 = vcmp.eq.f32.partialorder %v1203, 0.0
        %v1216 = vand.u32 %v1203, 2147483648
        %v1217 = vsel %vm1215, %v1216, %v1214
        %v1218 = vld [vmem:[%s480] sm:$0xff]
        %v1219 = vld [vmem:[%s480 + $0x8] sm:$0xff]
        %v1220 = vld [vmem:[%s3] sm:$0x3f]
        %v1221 = vld [vmem:[%s4] sm:$0xf]
        %vm1222 = vcmask 31744
        %v1224 = vsel %vm1222, %v1210, 0
        %v1227 = vsel %vm1222, %v1217, 0
        %vm1229 = vcmask 1043456
        %v1231 = vsel %vm1229, %v1221, 0
        %1233 = vmatprep.subr.mxu0 0.0
        %v1234 = vand.u32 %v1231, 4294901760
        %1235 = vmatpush1.msra.mxu0 %v1234
        %1236 = vmatprep.subr.mxu0 0.0
        %1237 = vmatpush1.msra.mxu0 0.0
        %1238 = vmatprep.subr.mxu0 0.0
        %1239 = vmatpush1.msra.mxu0 0.0
        %1240 = vmatprep.subr.mxu0 0.0
        %1241 = vmatpush1.msra.mxu0 0.0
        %1242 = vmatprep.subr.mxu0 0.0
        %1243 = vmatpush1.msra.mxu0 0.0
        %1244 = vmatprep.subr.mxu0 0.0
        %1245 = vmatpush1.msra.mxu0 0.0
        %1246 = vmatprep.subr.mxu0 0.0
        %1247 = vmatpush1.msra.mxu0 0.0
        %1248 = vmatprep.subr.mxu0 0.0
        %1249 = vmatpush1.msra.mxu0 0.0
        %1250 = vmatprep.subr.mxu0 0.0
        %1251 = vmatpush1.msra.mxu0 0.0
        %1252 = vmatprep.subr.mxu0 0.0
        %1253 = vmatpush1.msra.mxu0 0.0
        %1254 = vmatprep.subr.mxu0 0.0
        %1255 = vmatpush1.msra.mxu0 0.0
        %1256 = vmatprep.subr.mxu0 0.0
        %1257 = vmatpush1.msra.mxu0 0.0
        %1258 = vmatprep.subr.mxu0 0.0
        %1259 = vmatpush1.msra.mxu0 0.0
        %1260 = vmatprep.subr.mxu0 0.0
        %1261 = vmatpush1.msra.mxu0 0.0
        %1262 = vmatprep.subr.mxu0 0.0
        %1263 = vmatpush1.msra.mxu0 0.0
        %1264 = vmatprep.subr.mxu0 0.0
        %1265 = vmatpush1.msra.mxu0 0.0
        %1266 = vmatprep.subr.mxu0 0.0
        %1267 = vmatpush1.msra.mxu0 0.0
        %1268 = vmatprep.subr.mxu0 0.0
        %1269 = vmatpush1.msra.mxu0 0.0
        %1270 = vmatprep.subr.mxu0 0.0
        %1271 = vmatpush1.msra.mxu0 0.0
        %1272 = vmatprep.subr.mxu0 0.0
        %1273 = vmatpush1.msra.mxu0 0.0
        %1274 = vmatprep.subr.mxu0 0.0
        %1275 = vmatpush1.msra.mxu0 0.0
        %1276 = vmatprep.subr.mxu0 0.0
        %1277 = vmatpush1.msra.mxu0 0.0
        %1278 = vmatprep.subr.mxu0 0.0
        %1279 = vmatpush1.msra.mxu0 0.0
        %1280 = vmatprep.subr.mxu0 0.0
        %1281 = vmatpush1.msra.mxu0 0.0
        %1282 = vmatprep.subr.mxu0 0.0
        %1283 = vmatpush1.msra.mxu0 0.0
        %1284 = vmatprep.subr.mxu0 0.0
        %1285 = vmatpush1.msra.mxu0 0.0
        %1286 = vmatprep.subr.mxu0 0.0
        %1287 = vmatpush1.msra.mxu0 0.0
        %1288 = vmatprep.subr.mxu0 0.0
        %1289 = vmatpush1.msra.mxu0 0.0
        %1290 = vmatprep.subr.mxu0 0.0
        %1291 = vmatpush1.msra.mxu0 0.0
        %1292 = vmatprep.subr.mxu0 0.0
        %1293 = vmatpush1.msra.mxu0 0.0
        %1294 = vmatprep.subr.mxu0 0.0
        %1295 = vmatpush1.msra.mxu0 0.0
        %1296 = vmatprep.subr.mxu0 0.0
        %1297 = vmatpush1.msra.mxu0 0.0
        %1298 = vmatprep.mubr.f32.mxu0 0.0
        %v1299 = vand.u32 %v1224, 4294901760
        %v1300 = vsub.f32 %v1224, %v1299
        %v1301 = vand.u32 %v1300, 4294901760
        %v1302 = vsub.f32 %v1300, %v1301
        %v1303 = vand.u32 %v1302, 4294901760
        %1304 = vmatmul.mubr.f32.gmra.mrb[0].mxu0 %v1303
        %v1305 = vpop.f32.mrb[0].mxu0
        %v1306 = vadd.f32 0.0, %v1305
        %v1307 = vpop.f32.mrb[0].mxu0
        %1308 = vmatprep.mubr.f32.mxu0 0.0
        %v1309 = vand.u32 %v1227, 4294901760
        %v1310 = vsub.f32 %v1227, %v1309
        %v1311 = vand.u32 %v1310, 4294901760
        %v1312 = vsub.f32 %v1310, %v1311
        %v1313 = vand.u32 %v1312, 4294901760
        %1314 = vmatmul.mubr.f32.gmra.mrb[0].mxu0 %v1313
        %v1315 = vpop.f32.mrb[0].mxu0
        %v1316 = vadd.f32 0.0, %v1315
        %v1317 = vpop.f32.mrb[0].mxu0
        %1318 = vdwg.mxu0
        %1319 = vmatprep.subr.mxu0 0.0
        %v1320 = vand.u32 %v1231, 4294901760
        %v1321 = vsub.f32 %v1231, %v1320
        %v1322 = vand.u32 %v1321, 4294901760
        %v1323 = vsub.f32 %v1321, %v1322
        %v1324 = vand.u32 %v1323, 4294901760
        %1325 = vmatpush1.msra.mxu0 %v1324
        %1326 = vmatprep.subr.mxu0 0.0
        %1327 = vmatpush1.msra.mxu0 0.0
        %1328 = vmatprep.subr.mxu0 0.0
        %1329 = vmatpush1.msra.mxu0 0.0
        %1330 = vmatprep.subr.mxu0 0.0
        %1331 = vmatpush1.msra.mxu0 0.0
        %1332 = vmatprep.subr.mxu0 0.0
        %1333 = vmatpush1.msra.mxu0 0.0
        %1334 = vmatprep.subr.mxu0 0.0
        %1335 = vmatpush1.msra.mxu0 0.0
        %1336 = vmatprep.subr.mxu0 0.0
        %1337 = vmatpush1.msra.mxu0 0.0
        %1338 = vmatprep.subr.mxu0 0.0
        %1339 = vmatpush1.msra.mxu0 0.0
        %1340 = vmatprep.subr.mxu0 0.0
        %1341 = vmatpush1.msra.mxu0 0.0
        %1342 = vmatprep.subr.mxu0 0.0
        %1343 = vmatpush1.msra.mxu0 0.0
        %1344 = vmatprep.subr.mxu0 0.0
        %1345 = vmatpush1.msra.mxu0 0.0
        %1346 = vmatprep.subr.mxu0 0.0
        %1347 = vmatpush1.msra.mxu0 0.0
        %1348 = vmatprep.subr.mxu0 0.0
        %1349 = vmatpush1.msra.mxu0 0.0
        %1350 = vmatprep.subr.mxu0 0.0
        %1351 = vmatpush1.msra.mxu0 0.0
        %1352 = vmatprep.subr.mxu0 0.0
        %1353 = vmatpush1.msra.mxu0 0.0
        %1354 = vmatprep.subr.mxu0 0.0
        %1355 = vmatpush1.msra.mxu0 0.0
        %1356 = vmatprep.subr.mxu0 0.0
        %1357 = vmatpush1.msra.mxu0 0.0
        %1358 = vmatprep.subr.mxu0 0.0
        %1359 = vmatpush1.msra.mxu0 0.0
        %1360 = vmatprep.subr.mxu0 0.0
        %1361 = vmatpush1.msra.mxu0 0.0
        %1362 = vmatprep.subr.mxu0 0.0
        %1363 = vmatpush1.msra.mxu0 0.0
        %1364 = vmatprep.subr.mxu0 0.0
        %1365 = vmatpush1.msra.mxu0 0.0
        %1366 = vmatprep.subr.mxu0 0.0
        %1367 = vmatpush1.msra.mxu0 0.0
        %1368 = vmatprep.subr.mxu0 0.0
        %1369 = vmatpush1.msra.mxu0 0.0
        %1370 = vmatprep.subr.mxu0 0.0
        %1371 = vmatpush1.msra.mxu0 0.0
        %1372 = vmatprep.subr.mxu0 0.0
        %1373 = vmatpush1.msra.mxu0 0.0
        %1374 = vmatprep.subr.mxu0 0.0
        %1375 = vmatpush1.msra.mxu0 0.0
        %1376 = vmatprep.subr.mxu0 0.0
        %1377 = vmatpush1.msra.mxu0 0.0
        %1378 = vmatprep.subr.mxu0 0.0
        %1379 = vmatpush1.msra.mxu0 0.0
        %1380 = vmatprep.subr.mxu0 0.0
        %1381 = vmatpush1.msra.mxu0 0.0
        %1382 = vmatprep.subr.mxu0 0.0
        %1383 = vmatpush1.msra.mxu0 0.0
        %1384 = vmatprep.subr.mxu0 0.0
        %1385 = vmatpush1.msra.mxu0 0.0
        %1386 = vmatprep.subr.mxu0 0.0
        %1387 = vmatpush1.msra.mxu0 0.0
        %1388 = vmatprep.mubr.f32.mxu0 0.0
        %v1389 = vand.u32 %v1224, 4294901760
        %1390 = vmatmul.mubr.f32.gmra.mrb[0].mxu0 %v1389
        %v1391 = vpop.f32.mrb[0].mxu0
        %v1392 = vadd.f32 %v1306, %v1391
        %v1393 = vpop.f32.mrb[0].mxu0
        %1394 = vmatprep.mubr.f32.mxu0 0.0
        %v1395 = vand.u32 %v1227, 4294901760
        %1396 = vmatmul.mubr.f32.gmra.mrb[0].mxu0 %v1395
        %v1397 = vpop.f32.mrb[0].mxu0
        %v1398 = vadd.f32 %v1316, %v1397
        %v1399 = vpop.f32.mrb[0].mxu0
        %1400 = vdwg.mxu0
        %1401 = vmatprep.subr.mxu0 0.0
        %v1402 = vand.u32 %v1231, 4294901760
        %v1403 = vsub.f32 %v1231, %v1402
        %1404 = vmatpush1.msra.mxu0 %v1403
        %1405 = vmatprep.subr.mxu0 0.0
        %1406 = vmatpush1.msra.mxu0 0.0
        %1407 = vmatprep.subr.mxu0 0.0
        %1408 = vmatpush1.msra.mxu0 0.0
        %1409 = vmatprep.subr.mxu0 0.0
        %1410 = vmatpush1.msra.mxu0 0.0
        %1411 = vmatprep.subr.mxu0 0.0
        %1412 = vmatpush1.msra.mxu0 0.0
        %1413 = vmatprep.subr.mxu0 0.0
        %1414 = vmatpush1.msra.mxu0 0.0
        %1415 = vmatprep.subr.mxu0 0.0
        %1416 = vmatpush1.msra.mxu0 0.0
        %1417 = vmatprep.subr.mxu0 0.0
        %1418 = vmatpush1.msra.mxu0 0.0
        %1419 = vmatprep.subr.mxu0 0.0
        %1420 = vmatpush1.msra.mxu0 0.0
        %1421 = vmatprep.subr.mxu0 0.0
        %1422 = vmatpush1.msra.mxu0 0.0
        %1423 = vmatprep.subr.mxu0 0.0
        %1424 = vmatpush1.msra.mxu0 0.0
        %1425 = vmatprep.subr.mxu0 0.0
        %1426 = vmatpush1.msra.mxu0 0.0
        %1427 = vmatprep.subr.mxu0 0.0
        %1428 = vmatpush1.msra.mxu0 0.0
        %1429 = vmatprep.subr.mxu0 0.0
        %1430 = vmatpush1.msra.mxu0 0.0
        %1431 = vmatprep.subr.mxu0 0.0
        %1432 = vmatpush1.msra.mxu0 0.0
        %1433 = vmatprep.subr.mxu0 0.0
        %1434 = vmatpush1.msra.mxu0 0.0
        %1435 = vmatprep.subr.mxu0 0.0
        %1436 = vmatpush1.msra.mxu0 0.0
        %1437 = vmatprep.subr.mxu0 0.0
        %1438 = vmatpush1.msra.mxu0 0.0
        %1439 = vmatprep.subr.mxu0 0.0
        %1440 = vmatpush1.msra.mxu0 0.0
        %1441 = vmatprep.subr.mxu0 0.0
        %1442 = vmatpush1.msra.mxu0 0.0
        %1443 = vmatprep.subr.mxu0 0.0
        %1444 = vmatpush1.msra.mxu0 0.0
        %1445 = vmatprep.subr.mxu0 0.0
        %1446 = vmatpush1.msra.mxu0 0.0
        %1447 = vmatprep.subr.mxu0 0.0
        %1448 = vmatpush1.msra.mxu0 0.0
        %1449 = vmatprep.subr.mxu0 0.0
        %1450 = vmatpush1.msra.mxu0 0.0
        %1451 = vmatprep.subr.mxu0 0.0
        %1452 = vmatpush1.msra.mxu0 0.0
        %1453 = vmatprep.subr.mxu0 0.0
        %1454 = vmatpush1.msra.mxu0 0.0
        %1455 = vmatprep.subr.mxu0 0.0
        %1456 = vmatpush1.msra.mxu0 0.0
        %1457 = vmatprep.subr.mxu0 0.0
        %1458 = vmatpush1.msra.mxu0 0.0
        %1459 = vmatprep.subr.mxu0 0.0
        %1460 = vmatpush1.msra.mxu0 0.0
        %1461 = vmatprep.subr.mxu0 0.0
        %1462 = vmatpush1.msra.mxu0 0.0
        %1463 = vmatprep.subr.mxu0 0.0
        %1464 = vmatpush1.msra.mxu0 0.0
        %1465 = vmatprep.subr.mxu0 0.0
        %1466 = vmatpush1.msra.mxu0 0.0
        %1467 = vmatprep.mubr.f32.mxu0 0.0
        %v1468 = vand.u32 %v1224, 4294901760
        %v1469 = vsub.f32 %v1224, %v1468
        %1470 = vmatmul.mubr.f32.gmra.mrb[0].mxu0 %v1469
        %v1471 = vpop.f32.mrb[0].mxu0
        %v1472 = vadd.f32 %v1392, %v1471
        %v1473 = vpop.f32.mrb[0].mxu0
        %1474 = vmatprep.mubr.f32.mxu0 0.0
        %v1475 = vand.u32 %v1227, 4294901760
        %v1476 = vsub.f32 %v1227, %v1475
        %1477 = vmatmul.mubr.f32.gmra.mrb[0].mxu0 %v1476
        %v1478 = vpop.f32.mrb[0].mxu0
        %v1479 = vadd.f32 %v1398, %v1478
        %v1480 = vpop.f32.mrb[0].mxu0
        %1481 = vdwg.mxu0
        %1482 = vmatprep.subr.mxu0 0.0
        %v1483 = vand.u32 %v1231, 4294901760
        %1484 = vmatpush1.msra.mxu0 %v1483
        %1485 = vmatprep.subr.mxu0 0.0
        %1486 = vmatpush1.msra.mxu0 0.0
        %1487 = vmatprep.subr.mxu0 0.0
        %1488 = vmatpush1.msra.mxu0 0.0
        %1489 = vmatprep.subr.mxu0 0.0
        %1490 = vmatpush1.msra.mxu0 0.0
        %1491 = vmatprep.subr.mxu0 0.0
        %1492 = vmatpush1.msra.mxu0 0.0
        %1493 = vmatprep.subr.mxu0 0.0
        %1494 = vmatpush1.msra.mxu0 0.0
        %1495 = vmatprep.subr.mxu0 0.0
        %1496 = vmatpush1.msra.mxu0 0.0
        %1497 = vmatprep.subr.mxu0 0.0
        %1498 = vmatpush1.msra.mxu0 0.0
        %1499 = vmatprep.subr.mxu0 0.0
        %1500 = vmatpush1.msra.mxu0 0.0
        %1501 = vmatprep.subr.mxu0 0.0
        %1502 = vmatpush1.msra.mxu0 0.0
        %1503 = vmatprep.subr.mxu0 0.0
        %1504 = vmatpush1.msra.mxu0 0.0
        %1505 = vmatprep.subr.mxu0 0.0
        %1506 = vmatpush1.msra.mxu0 0.0
        %1507 = vmatprep.subr.mxu0 0.0
        %1508 = vmatpush1.msra.mxu0 0.0
        %1509 = vmatprep.subr.mxu0 0.0
        %1510 = vmatpush1.msra.mxu0 0.0
        %1511 = vmatprep.subr.mxu0 0.0
        %1512 = vmatpush1.msra.mxu0 0.0
        %1513 = vmatprep.subr.mxu0 0.0
        %1514 = vmatpush1.msra.mxu0 0.0
        %1515 = vmatprep.subr.mxu0 0.0
        %1516 = vmatpush1.msra.mxu0 0.0
        %1517 = vmatprep.subr.mxu0 0.0
        %1518 = vmatpush1.msra.mxu0 0.0
        %1519 = vmatprep.subr.mxu0 0.0
        %1520 = vmatpush1.msra.mxu0 0.0
        %1521 = vmatprep.subr.mxu0 0.0
        %1522 = vmatpush1.msra.mxu0 0.0
        %1523 = vmatprep.subr.mxu0 0.0
        %1524 = vmatpush1.msra.mxu0 0.0
        %1525 = vmatprep.subr.mxu0 0.0
        %1526 = vmatpush1.msra.mxu0 0.0
        %1527 = vmatprep.subr.mxu0 0.0
        %1528 = vmatpush1.msra.mxu0 0.0
        %1529 = vmatprep.subr.mxu0 0.0
        %1530 = vmatpush1.msra.mxu0 0.0
        %1531 = vmatprep.subr.mxu0 0.0
        %1532 = vmatpush1.msra.mxu0 0.0
        %1533 = vmatprep.subr.mxu0 0.0
        %1534 = vmatpush1.msra.mxu0 0.0
        %1535 = vmatprep.subr.mxu0 0.0
        %1536 = vmatpush1.msra.mxu0 0.0
        %1537 = vmatprep.subr.mxu0 0.0
        %1538 = vmatpush1.msra.mxu0 0.0
        %1539 = vmatprep.subr.mxu0 0.0
        %1540 = vmatpush1.msra.mxu0 0.0
        %1541 = vmatprep.subr.mxu0 0.0
        %1542 = vmatpush1.msra.mxu0 0.0
        %1543 = vmatprep.subr.mxu0 0.0
        %1544 = vmatpush1.msra.mxu0 0.0
        %1545 = vmatprep.subr.mxu0 0.0
        %1546 = vmatpush1.msra.mxu0 0.0
        %1547 = vmatprep.mubr.f32.mxu0 0.0
        %v1548 = vand.u32 %v1224, 4294901760
        %v1549 = vsub.f32 %v1224, %v1548
        %v1550 = vand.u32 %v1549, 4294901760
        %1551 = vmatmul.mubr.f32.gmra.mrb[0].mxu0 %v1550
        %v1552 = vpop.f32.mrb[0].mxu0
        %v1553 = vadd.f32 %v1472, %v1552
        %v1554 = vpop.f32.mrb[0].mxu0
        %1555 = vmatprep.mubr.f32.mxu0 0.0
        %v1556 = vand.u32 %v1227, 4294901760
        %v1557 = vsub.f32 %v1227, %v1556
        %v1558 = vand.u32 %v1557, 4294901760
        %1559 = vmatmul.mubr.f32.gmra.mrb[0].mxu0 %v1558
        %v1560 = vpop.f32.mrb[0].mxu0
        %v1561 = vadd.f32 %v1479, %v1560
        %v1562 = vpop.f32.mrb[0].mxu0
        %1563 = vdwg.mxu0
        %1564 = vmatprep.subr.mxu0 0.0
        %v1565 = vand.u32 %v1231, 4294901760
        %v1566 = vsub.f32 %v1231, %v1565
        %v1567 = vand.u32 %v1566, 4294901760
        %1568 = vmatpush1.msra.mxu0 %v1567
        %1569 = vmatprep.subr.mxu0 0.0
        %1570 = vmatpush1.msra.mxu0 0.0
        %1571 = vmatprep.subr.mxu0 0.0
        %1572 = vmatpush1.msra.mxu0 0.0
        %1573 = vmatprep.subr.mxu0 0.0
        %1574 = vmatpush1.msra.mxu0 0.0
        %1575 = vmatprep.subr.mxu0 0.0
        %1576 = vmatpush1.msra.mxu0 0.0
        %1577 = vmatprep.subr.mxu0 0.0
        %1578 = vmatpush1.msra.mxu0 0.0
        %1579 = vmatprep.subr.mxu0 0.0
        %1580 = vmatpush1.msra.mxu0 0.0
        %1581 = vmatprep.subr.mxu0 0.0
        %1582 = vmatpush1.msra.mxu0 0.0
        %1583 = vmatprep.subr.mxu0 0.0
        %1584 = vmatpush1.msra.mxu0 0.0
        %1585 = vmatprep.subr.mxu0 0.0
        %1586 = vmatpush1.msra.mxu0 0.0
        %1587 = vmatprep.subr.mxu0 0.0
        %1588 = vmatpush1.msra.mxu0 0.0
        %1589 = vmatprep.subr.mxu0 0.0
        %1590 = vmatpush1.msra.mxu0 0.0
        %1591 = vmatprep.subr.mxu0 0.0
        %1592 = vmatpush1.msra.mxu0 0.0
        %1593 = vmatprep.subr.mxu0 0.0
        %1594 = vmatpush1.msra.mxu0 0.0
        %1595 = vmatprep.subr.mxu0 0.0
        %1596 = vmatpush1.msra.mxu0 0.0
        %1597 = vmatprep.subr.mxu0 0.0
        %1598 = vmatpush1.msra.mxu0 0.0
        %1599 = vmatprep.subr.mxu0 0.0
        %1600 = vmatpush1.msra.mxu0 0.0
        %1601 = vmatprep.subr.mxu0 0.0
        %1602 = vmatpush1.msra.mxu0 0.0
        %1603 = vmatprep.subr.mxu0 0.0
        %1604 = vmatpush1.msra.mxu0 0.0
        %1605 = vmatprep.subr.mxu0 0.0
        %1606 = vmatpush1.msra.mxu0 0.0
        %1607 = vmatprep.subr.mxu0 0.0
        %1608 = vmatpush1.msra.mxu0 0.0
        %1609 = vmatprep.subr.mxu0 0.0
        %1610 = vmatpush1.msra.mxu0 0.0
        %1611 = vmatprep.subr.mxu0 0.0
        %1612 = vmatpush1.msra.mxu0 0.0
        %1613 = vmatprep.subr.mxu0 0.0
        %1614 = vmatpush1.msra.mxu0 0.0
        %1615 = vmatprep.subr.mxu0 0.0
        %1616 = vmatpush1.msra.mxu0 0.0
        %1617 = vmatprep.subr.mxu0 0.0
        %1618 = vmatpush1.msra.mxu0 0.0
        %1619 = vmatprep.subr.mxu0 0.0
        %1620 = vmatpush1.msra.mxu0 0.0
        %1621 = vmatprep.subr.mxu0 0.0
        %1622 = vmatpush1.msra.mxu0 0.0
        %1623 = vmatprep.subr.mxu0 0.0
        %1624 = vmatpush1.msra.mxu0 0.0
        %1625 = vmatprep.subr.mxu0 0.0
        %1626 = vmatpush1.msra.mxu0 0.0
        %1627 = vmatprep.subr.mxu0 0.0
        %1628 = vmatpush1.msra.mxu0 0.0
        %1629 = vmatprep.subr.mxu0 0.0
        %1630 = vmatpush1.msra.mxu0 0.0
        %1631 = vmatprep.mubr.f32.mxu0 0.0
        %v1632 = vand.u32 %v1224, 4294901760
        %1633 = vmatmul.mubr.f32.gmra.mrb[0].mxu0 %v1632
        %v1634 = vpop.f32.mrb[0].mxu0
        %v1635 = vadd.f32 %v1553, %v1634
        %v1636 = vpop.f32.mrb[0].mxu0
        %1637 = vmatprep.mubr.f32.mxu0 0.0
        %v1638 = vand.u32 %v1227, 4294901760
        %1639 = vmatmul.mubr.f32.gmra.mrb[0].mxu0 %v1638
        %v1640 = vpop.f32.mrb[0].mxu0
        %v1641 = vadd.f32 %v1561, %v1640
        %v1642 = vpop.f32.mrb[0].mxu0
        %1643 = vdwg.mxu0
        %1644 = vmatprep.subr.mxu0 0.0
        %v1645 = vand.u32 %v1231, 4294901760
        %1646 = vmatpush1.msra.mxu0 %v1645
        %1647 = vmatprep.subr.mxu0 0.0
        %1648 = vmatpush1.msra.mxu0 0.0
        %1649 = vmatprep.subr.mxu0 0.0
        %1650 = vmatpush1.msra.mxu0 0.0
        %1651 = vmatprep.subr.mxu0 0.0
        %1652 = vmatpush1.msra.mxu0 0.0
        %1653 = vmatprep.subr.mxu0 0.0
        %1654 = vmatpush1.msra.mxu0 0.0
        %1655 = vmatprep.subr.mxu0 0.0
        %1656 = vmatpush1.msra.mxu0 0.0
        %1657 = vmatprep.subr.mxu0 0.0
        %1658 = vmatpush1.msra.mxu0 0.0
        %1659 = vmatprep.subr.mxu0 0.0
        %1660 = vmatpush1.msra.mxu0 0.0
        %1661 = vmatprep.subr.mxu0 0.0
        %1662 = vmatpush1.msra.mxu0 0.0
        %1663 = vmatprep.subr.mxu0 0.0
        %1664 = vmatpush1.msra.mxu0 0.0
        %1665 = vmatprep.subr.mxu0 0.0
        %1666 = vmatpush1.msra.mxu0 0.0
        %1667 = vmatprep.subr.mxu0 0.0
        %1668 = vmatpush1.msra.mxu0 0.0
        %1669 = vmatprep.subr.mxu0 0.0
        %1670 = vmatpush1.msra.mxu0 0.0
        %1671 = vmatprep.subr.mxu0 0.0
        %1672 = vmatpush1.msra.mxu0 0.0
        %1673 = vmatprep.subr.mxu0 0.0
        %1674 = vmatpush1.msra.mxu0 0.0
        %1675 = vmatprep.subr.mxu0 0.0
        %1676 = vmatpush1.msra.mxu0 0.0
        %1677 = vmatprep.subr.mxu0 0.0
        %1678 = vmatpush1.msra.mxu0 0.0
        %1679 = vmatprep.subr.mxu0 0.0
        %1680 = vmatpush1.msra.mxu0 0.0
        %1681 = vmatprep.subr.mxu0 0.0
        %1682 = vmatpush1.msra.mxu0 0.0
        %1683 = vmatprep.subr.mxu0 0.0
        %1684 = vmatpush1.msra.mxu0 0.0
        %1685 = vmatprep.subr.mxu0 0.0
        %1686 = vmatpush1.msra.mxu0 0.0
        %1687 = vmatprep.subr.mxu0 0.0
        %1688 = vmatpush1.msra.mxu0 0.0
        %1689 = vmatprep.subr.mxu0 0.0
        %1690 = vmatpush1.msra.mxu0 0.0
        %1691 = vmatprep.subr.mxu0 0.0
        %1692 = vmatpush1.msra.mxu0 0.0
        %1693 = vmatprep.subr.mxu0 0.0
        %1694 = vmatpush1.msra.mxu0 0.0
        %1695 = vmatprep.subr.mxu0 0.0
        %1696 = vmatpush1.msra.mxu0 0.0
        %1697 = vmatprep.subr.mxu0 0.0
        %1698 = vmatpush1.msra.mxu0 0.0
        %1699 = vmatprep.subr.mxu0 0.0
        %1700 = vmatpush1.msra.mxu0 0.0
        %1701 = vmatprep.subr.mxu0 0.0
        %1702 = vmatpush1.msra.mxu0 0.0
        %1703 = vmatprep.subr.mxu0 0.0
        %1704 = vmatpush1.msra.mxu0 0.0
        %1705 = vmatprep.subr.mxu0 0.0
        %1706 = vmatpush1.msra.mxu0 0.0
        %1707 = vmatprep.subr.mxu0 0.0
        %1708 = vmatpush1.msra.mxu0 0.0
        %1709 = vmatprep.mubr.f32.mxu0 0.0
        %v1710 = vand.u32 %v1224, 4294901760
        %1711 = vmatmul.mubr.f32.gmra.mrb[0].mxu0 %v1710
        %v1712 = vpop.f32.mrb[0].mxu0
        %v1713 = vadd.f32 %v1635, %v1712
        %v1714 = vpop.f32.mrb[0].mxu0
        %1715 = vmatprep.mubr.f32.mxu0 0.0
        %v1716 = vand.u32 %v1227, 4294901760
        %1717 = vmatmul.mubr.f32.gmra.mrb[0].mxu0 %v1716
        %v1718 = vpop.f32.mrb[0].mxu0
        %v1719 = vadd.f32 %v1641, %v1718
        %v1720 = vpop.f32.mrb[0].mxu0
        %1721 = vdwg.mxu0
        %vm1722 = vcmask 48128
        %v1724 = vsel %vm1722, %v1218, 0
        %v1727 = vsel %vm1722, %v1219, 0
        %vm1729 = vcmask 1045504
        %v1731 = vsel %vm1729, %v1220, 0
        %1733 = vmatprep.subr.mxu0 0.0
        %v1734 = vand.u32 %v1731, 4294901760
        %1735 = vmatpush1.msra.mxu0 %v1734
        %1736 = vmatprep.subr.mxu0 0.0
        %1737 = vmatpush1.msra.mxu0 0.0
        %1738 = vmatprep.subr.mxu0 0.0
        %1739 = vmatpush1.msra.mxu0 0.0
        %1740 = vmatprep.subr.mxu0 0.0
        %1741 = vmatpush1.msra.mxu0 0.0
        %1742 = vmatprep.subr.mxu0 0.0
        %1743 = vmatpush1.msra.mxu0 0.0
        %1744 = vmatprep.subr.mxu0 0.0
        %1745 = vmatpush1.msra.mxu0 0.0
        %1746 = vmatprep.subr.mxu0 0.0
        %1747 = vmatpush1.msra.mxu0 0.0
        %1748 = vmatprep.subr.mxu0 0.0
        %1749 = vmatpush1.msra.mxu0 0.0
        %1750 = vmatprep.subr.mxu0 0.0
        %1751 = vmatpush1.msra.mxu0 0.0
        %1752 = vmatprep.subr.mxu0 0.0
        %1753 = vmatpush1.msra.mxu0 0.0
        %1754 = vmatprep.subr.mxu0 0.0
        %1755 = vmatpush1.msra.mxu0 0.0
        %1756 = vmatprep.subr.mxu0 0.0
        %1757 = vmatpush1.msra.mxu0 0.0
        %1758 = vmatprep.subr.mxu0 0.0
        %1759 = vmatpush1.msra.mxu0 0.0
        %1760 = vmatprep.subr.mxu0 0.0
        %1761 = vmatpush1.msra.mxu0 0.0
        %1762 = vmatprep.subr.mxu0 0.0
        %1763 = vmatpush1.msra.mxu0 0.0
        %1764 = vmatprep.subr.mxu0 0.0
        %1765 = vmatpush1.msra.mxu0 0.0
        %1766 = vmatprep.subr.mxu0 0.0
        %1767 = vmatpush1.msra.mxu0 0.0
        %1768 = vmatprep.subr.mxu0 0.0
        %1769 = vmatpush1.msra.mxu0 0.0
        %1770 = vmatprep.subr.mxu0 0.0
        %1771 = vmatpush1.msra.mxu0 0.0
        %1772 = vmatprep.subr.mxu0 0.0
        %1773 = vmatpush1.msra.mxu0 0.0
        %1774 = vmatprep.subr.mxu0 0.0
        %1775 = vmatpush1.msra.mxu0 0.0
        %1776 = vmatprep.subr.mxu0 0.0
        %1777 = vmatpush1.msra.mxu0 0.0
        %1778 = vmatprep.subr.mxu0 0.0
        %1779 = vmatpush1.msra.mxu0 0.0
        %1780 = vmatprep.subr.mxu0 0.0
        %1781 = vmatpush1.msra.mxu0 0.0
        %1782 = vmatprep.subr.mxu0 0.0
        %1783 = vmatpush1.msra.mxu0 0.0
        %1784 = vmatprep.subr.mxu0 0.0
        %1785 = vmatpush1.msra.mxu0 0.0
        %1786 = vmatprep.subr.mxu0 0.0
        %1787 = vmatpush1.msra.mxu0 0.0
        %1788 = vmatprep.subr.mxu0 0.0
        %1789 = vmatpush1.msra.mxu0 0.0
        %1790 = vmatprep.subr.mxu0 0.0
        %1791 = vmatpush1.msra.mxu0 0.0
        %1792 = vmatprep.subr.mxu0 0.0
        %1793 = vmatpush1.msra.mxu0 0.0
        %1794 = vmatprep.subr.mxu0 0.0
        %1795 = vmatpush1.msra.mxu0 0.0
        %1796 = vmatprep.subr.mxu0 0.0
        %1797 = vmatpush1.msra.mxu0 0.0
        %1798 = vmatprep.mubr.f32.mxu0 0.0
        %v1799 = vand.u32 %v1724, 4294901760
        %v1800 = vsub.f32 %v1724, %v1799
        %v1801 = vand.u32 %v1800, 4294901760
        %v1802 = vsub.f32 %v1800, %v1801
        %v1803 = vand.u32 %v1802, 4294901760
        %1804 = vmatmul.mubr.f32.gmra.mrb[0].mxu0 %v1803
        %v1805 = vpop.f32.mrb[0].mxu0
        %v1806 = vadd.f32 %v1713, %v1805
        %v1807 = vpop.f32.mrb[0].mxu0
        %1808 = vmatprep.mubr.f32.mxu0 0.0
        %v1809 = vand.u32 %v1727, 4294901760
        %v1810 = vsub.f32 %v1727, %v1809
        %v1811 = vand.u32 %v1810, 4294901760
        %v1812 = vsub.f32 %v1810, %v1811
        %v1813 = vand.u32 %v1812, 4294901760
        %1814 = vmatmul.mubr.f32.gmra.mrb[0].mxu0 %v1813
        %v1815 = vpop.f32.mrb[0].mxu0
        %v1816 = vadd.f32 %v1719, %v1815
        %v1817 = vpop.f32.mrb[0].mxu0
        %1818 = vdwg.mxu0
        %1819 = vmatprep.subr.mxu0 0.0
        %v1820 = vand.u32 %v1731, 4294901760
        %v1821 = vsub.f32 %v1731, %v1820
        %v1822 = vand.u32 %v1821, 4294901760
        %v1823 = vsub.f32 %v1821, %v1822
        %v1824 = vand.u32 %v1823, 4294901760
        %1825 = vmatpush1.msra.mxu0 %v1824
        %1826 = vmatprep.subr.mxu0 0.0
        %1827 = vmatpush1.msra.mxu0 0.0
        %1828 = vmatprep.subr.mxu0 0.0
        %1829 = vmatpush1.msra.mxu0 0.0
        %1830 = vmatprep.subr.mxu0 0.0
        %1831 = vmatpush1.msra.mxu0 0.0
        %1832 = vmatprep.subr.mxu0 0.0
        %1833 = vmatpush1.msra.mxu0 0.0
        %1834 = vmatprep.subr.mxu0 0.0
        %1835 = vmatpush1.msra.mxu0 0.0
        %1836 = vmatprep.subr.mxu0 0.0
        %1837 = vmatpush1.msra.mxu0 0.0
        %1838 = vmatprep.subr.mxu0 0.0
        %1839 = vmatpush1.msra.mxu0 0.0
        %1840 = vmatprep.subr.mxu0 0.0
        %1841 = vmatpush1.msra.mxu0 0.0
        %1842 = vmatprep.subr.mxu0 0.0
        %1843 = vmatpush1.msra.mxu0 0.0
        %1844 = vmatprep.subr.mxu0 0.0
        %1845 = vmatpush1.msra.mxu0 0.0
        %1846 = vmatprep.subr.mxu0 0.0
        %1847 = vmatpush1.msra.mxu0 0.0
        %1848 = vmatprep.subr.mxu0 0.0
        %1849 = vmatpush1.msra.mxu0 0.0
        %1850 = vmatprep.subr.mxu0 0.0
        %1851 = vmatpush1.msra.mxu0 0.0
        %1852 = vmatprep.subr.mxu0 0.0
        %1853 = vmatpush1.msra.mxu0 0.0
        %1854 = vmatprep.subr.mxu0 0.0
        %1855 = vmatpush1.msra.mxu0 0.0
        %1856 = vmatprep.subr.mxu0 0.0
        %1857 = vmatpush1.msra.mxu0 0.0
        %1858 = vmatprep.subr.mxu0 0.0
        %1859 = vmatpush1.msra.mxu0 0.0
        %1860 = vmatprep.subr.mxu0 0.0
        %1861 = vmatpush1.msra.mxu0 0.0
        %1862 = vmatprep.subr.mxu0 0.0
        %1863 = vmatpush1.msra.mxu0 0.0
        %1864 = vmatprep.subr.mxu0 0.0
        %1865 = vmatpush1.msra.mxu0 0.0
        %1866 = vmatprep.subr.mxu0 0.0
        %1867 = vmatpush1.msra.mxu0 0.0
        %1868 = vmatprep.subr.mxu0 0.0
        %1869 = vmatpush1.msra.mxu0 0.0
        %1870 = vmatprep.subr.mxu0 0.0
        %1871 = vmatpush1.msra.mxu0 0.0
        %1872 = vmatprep.subr.mxu0 0.0
        %1873 = vmatpush1.msra.mxu0 0.0
        %1874 = vmatprep.subr.mxu0 0.0
        %1875 = vmatpush1.msra.mxu0 0.0
        %1876 = vmatprep.subr.mxu0 0.0
        %1877 = vmatpush1.msra.mxu0 0.0
        %1878 = vmatprep.subr.mxu0 0.0
        %1879 = vmatpush1.msra.mxu0 0.0
        %1880 = vmatprep.subr.mxu0 0.0
        %1881 = vmatpush1.msra.mxu0 0.0
        %1882 = vmatprep.subr.mxu0 0.0
        %1883 = vmatpush1.msra.mxu0 0.0
        %1884 = vmatprep.subr.mxu0 0.0
        %1885 = vmatpush1.msra.mxu0 0.0
        %1886 = vmatprep.subr.mxu0 0.0
        %1887 = vmatpush1.msra.mxu0 0.0
        %1888 = vmatprep.mubr.f32.mxu0 0.0
        %v1889 = vand.u32 %v1724, 4294901760
        %1890 = vmatmul.mubr.f32.gmra.mrb[0].mxu0 %v1889
        %v1891 = vpop.f32.mrb[0].mxu0
        %v1892 = vadd.f32 %v1806, %v1891
        %v1893 = vpop.f32.mrb[0].mxu0
        %1894 = vmatprep.mubr.f32.mxu0 0.0
        %v1895 = vand.u32 %v1727, 4294901760
        %1896 = vmatmul.mubr.f32.gmra.mrb[0].mxu0 %v1895
        %v1897 = vpop.f32.mrb[0].mxu0
        %v1898 = vadd.f32 %v1816, %v1897
        %v1899 = vpop.f32.mrb[0].mxu0
        %1900 = vdwg.mxu0
        %1901 = vmatprep.subr.mxu0 0.0
        %v1902 = vand.u32 %v1731, 4294901760
        %v1903 = vsub.f32 %v1731, %v1902
        %1904 = vmatpush1.msra.mxu0 %v1903
        %1905 = vmatprep.subr.mxu0 0.0
        %1906 = vmatpush1.msra.mxu0 0.0
        %1907 = vmatprep.subr.mxu0 0.0
        %1908 = vmatpush1.msra.mxu0 0.0
        %1909 = vmatprep.subr.mxu0 0.0
        %1910 = vmatpush1.msra.mxu0 0.0
        %1911 = vmatprep.subr.mxu0 0.0
        %1912 = vmatpush1.msra.mxu0 0.0
        %1913 = vmatprep.subr.mxu0 0.0
        %1914 = vmatpush1.msra.mxu0 0.0
        %1915 = vmatprep.subr.mxu0 0.0
        %1916 = vmatpush1.msra.mxu0 0.0
        %1917 = vmatprep.subr.mxu0 0.0
        %1918 = vmatpush1.msra.mxu0 0.0
        %1919 = vmatprep.subr.mxu0 0.0
        %1920 = vmatpush1.msra.mxu0 0.0
        %1921 = vmatprep.subr.mxu0 0.0
        %1922 = vmatpush1.msra.mxu0 0.0
        %1923 = vmatprep.subr.mxu0 0.0
        %1924 = vmatpush1.msra.mxu0 0.0
        %1925 = vmatprep.subr.mxu0 0.0
        %1926 = vmatpush1.msra.mxu0 0.0
        %1927 = vmatprep.subr.mxu0 0.0
        %1928 = vmatpush1.msra.mxu0 0.0
        %1929 = vmatprep.subr.mxu0 0.0
        %1930 = vmatpush1.msra.mxu0 0.0
        %1931 = vmatprep.subr.mxu0 0.0
        %1932 = vmatpush1.msra.mxu0 0.0
        %1933 = vmatprep.subr.mxu0 0.0
        %1934 = vmatpush1.msra.mxu0 0.0
        %1935 = vmatprep.subr.mxu0 0.0
        %1936 = vmatpush1.msra.mxu0 0.0
        %1937 = vmatprep.subr.mxu0 0.0
        %1938 = vmatpush1.msra.mxu0 0.0
        %1939 = vmatprep.subr.mxu0 0.0
        %1940 = vmatpush1.msra.mxu0 0.0
        %1941 = vmatprep.subr.mxu0 0.0
        %1942 = vmatpush1.msra.mxu0 0.0
        %1943 = vmatprep.subr.mxu0 0.0
        %1944 = vmatpush1.msra.mxu0 0.0
        %1945 = vmatprep.subr.mxu0 0.0
        %1946 = vmatpush1.msra.mxu0 0.0
        %1947 = vmatprep.subr.mxu0 0.0
        %1948 = vmatpush1.msra.mxu0 0.0
        %1949 = vmatprep.subr.mxu0 0.0
        %1950 = vmatpush1.msra.mxu0 0.0
        %1951 = vmatprep.subr.mxu0 0.0
        %1952 = vmatpush1.msra.mxu0 0.0
        %1953 = vmatprep.subr.mxu0 0.0
        %1954 = vmatpush1.msra.mxu0 0.0
        %1955 = vmatprep.subr.mxu0 0.0
        %1956 = vmatpush1.msra.mxu0 0.0
        %1957 = vmatprep.subr.mxu0 0.0
        %1958 = vmatpush1.msra.mxu0 0.0
        %1959 = vmatprep.subr.mxu0 0.0
        %1960 = vmatpush1.msra.mxu0 0.0
        %1961 = vmatprep.subr.mxu0 0.0
        %1962 = vmatpush1.msra.mxu0 0.0
        %1963 = vmatprep.subr.mxu0 0.0
        %1964 = vmatpush1.msra.mxu0 0.0
        %1965 = vmatprep.subr.mxu0 0.0
        %1966 = vmatpush1.msra.mxu0 0.0
        %1967 = vmatprep.mubr.f32.mxu0 0.0
        %v1968 = vand.u32 %v1724, 4294901760
        %v1969 = vsub.f32 %v1724, %v1968
        %1970 = vmatmul.mubr.f32.gmra.mrb[0].mxu0 %v1969
        %v1971 = vpop.f32.mrb[0].mxu0
        %v1972 = vadd.f32 %v1892, %v1971
        %v1973 = vpop.f32.mrb[0].mxu0
        %1974 = vmatprep.mubr.f32.mxu0 0.0
        %v1975 = vand.u32 %v1727, 4294901760
        %v1976 = vsub.f32 %v1727, %v1975
        %1977 = vmatmul.mubr.f32.gmra.mrb[0].mxu0 %v1976
        %v1978 = vpop.f32.mrb[0].mxu0
        %v1979 = vadd.f32 %v1898, %v1978
        %v1980 = vpop.f32.mrb[0].mxu0
        %1981 = vdwg.mxu0
        %1982 = vmatprep.subr.mxu0 0.0
        %v1983 = vand.u32 %v1731, 4294901760
        %1984 = vmatpush1.msra.mxu0 %v1983
        %1985 = vmatprep.subr.mxu0 0.0
        %1986 = vmatpush1.msra.mxu0 0.0
        %1987 = vmatprep.subr.mxu0 0.0
        %1988 = vmatpush1.msra.mxu0 0.0
        %1989 = vmatprep.subr.mxu0 0.0
        %1990 = vmatpush1.msra.mxu0 0.0
        %1991 = vmatprep.subr.mxu0 0.0
        %1992 = vmatpush1.msra.mxu0 0.0
        %1993 = vmatprep.subr.mxu0 0.0
        %1994 = vmatpush1.msra.mxu0 0.0
        %1995 = vmatprep.subr.mxu0 0.0
        %1996 = vmatpush1.msra.mxu0 0.0
        %1997 = vmatprep.subr.mxu0 0.0
        %1998 = vmatpush1.msra.mxu0 0.0
        %1999 = vmatprep.subr.mxu0 0.0
        %2000 = vmatpush1.msra.mxu0 0.0
        %2001 = vmatprep.subr.mxu0 0.0
        %2002 = vmatpush1.msra.mxu0 0.0
        %2003 = vmatprep.subr.mxu0 0.0
        %2004 = vmatpush1.msra.mxu0 0.0
        %2005 = vmatprep.subr.mxu0 0.0
        %2006 = vmatpush1.msra.mxu0 0.0
        %2007 = vmatprep.subr.mxu0 0.0
        %2008 = vmatpush1.msra.mxu0 0.0
        %2009 = vmatprep.subr.mxu0 0.0
        %2010 = vmatpush1.msra.mxu0 0.0
        %2011 = vmatprep.subr.mxu0 0.0
        %2012 = vmatpush1.msra.mxu0 0.0
        %2013 = vmatprep.subr.mxu0 0.0
        %2014 = vmatpush1.msra.mxu0 0.0
        %2015 = vmatprep.subr.mxu0 0.0
        %2016 = vmatpush1.msra.mxu0 0.0
        %2017 = vmatprep.subr.mxu0 0.0
        %2018 = vmatpush1.msra.mxu0 0.0
        %2019 = vmatprep.subr.mxu0 0.0
        %2020 = vmatpush1.msra.mxu0 0.0
        %2021 = vmatprep.subr.mxu0 0.0
        %2022 = vmatpush1.msra.mxu0 0.0
        %2023 = vmatprep.subr.mxu0 0.0
        %2024 = vmatpush1.msra.mxu0 0.0
        %2025 = vmatprep.subr.mxu0 0.0
        %2026 = vmatpush1.msra.mxu0 0.0
        %2027 = vmatprep.subr.mxu0 0.0
        %2028 = vmatpush1.msra.mxu0 0.0
        %2029 = vmatprep.subr.mxu0 0.0
        %2030 = vmatpush1.msra.mxu0 0.0
        %2031 = vmatprep.subr.mxu0 0.0
        %2032 = vmatpush1.msra.mxu0 0.0
        %2033 = vmatprep.subr.mxu0 0.0
        %2034 = vmatpush1.msra.mxu0 0.0
        %2035 = vmatprep.subr.mxu0 0.0
        %2036 = vmatpush1.msra.mxu0 0.0
        %2037 = vmatprep.subr.mxu0 0.0
        %2038 = vmatpush1.msra.mxu0 0.0
        %2039 = vmatprep.subr.mxu0 0.0
        %2040 = vmatpush1.msra.mxu0 0.0
        %2041 = vmatprep.subr.mxu0 0.0
        %2042 = vmatpush1.msra.mxu0 0.0
        %2043 = vmatprep.subr.mxu0 0.0
        %2044 = vmatpush1.msra.mxu0 0.0
        %2045 = vmatprep.subr.mxu0 0.0
        %2046 = vmatpush1.msra.mxu0 0.0
        %2047 = vmatprep.mubr.f32.mxu0 0.0
        %v2048 = vand.u32 %v1724, 4294901760
        %v2049 = vsub.f32 %v1724, %v2048
        %v2050 = vand.u32 %v2049, 4294901760
        %2051 = vmatmul.mubr.f32.gmra.mrb[0].mxu0 %v2050
        %v2052 = vpop.f32.mrb[0].mxu0
        %v2053 = vadd.f32 %v1972, %v2052
        %v2054 = vpop.f32.mrb[0].mxu0
        %2055 = vmatprep.mubr.f32.mxu0 0.0
        %v2056 = vand.u32 %v1727, 4294901760
        %v2057 = vsub.f32 %v1727, %v2056
        %v2058 = vand.u32 %v2057, 4294901760
        %2059 = vmatmul.mubr.f32.gmra.mrb[0].mxu0 %v2058
        %v2060 = vpop.f32.mrb[0].mxu0
        %v2061 = vadd.f32 %v1979, %v2060
        %v2062 = vpop.f32.mrb[0].mxu0
        %2063 = vdwg.mxu0
        %2064 = vmatprep.subr.mxu0 0.0
        %v2065 = vand.u32 %v1731, 4294901760
        %v2066 = vsub.f32 %v1731, %v2065
        %v2067 = vand.u32 %v2066, 4294901760
        %2068 = vmatpush1.msra.mxu0 %v2067
        %2069 = vmatprep.subr.mxu0 0.0
        %2070 = vmatpush1.msra.mxu0 0.0
        %2071 = vmatprep.subr.mxu0 0.0
        %2072 = vmatpush1.msra.mxu0 0.0
        %2073 = vmatprep.subr.mxu0 0.0
        %2074 = vmatpush1.msra.mxu0 0.0
        %2075 = vmatprep.subr.mxu0 0.0
        %2076 = vmatpush1.msra.mxu0 0.0
        %2077 = vmatprep.subr.mxu0 0.0
        %2078 = vmatpush1.msra.mxu0 0.0
        %2079 = vmatprep.subr.mxu0 0.0
        %2080 = vmatpush1.msra.mxu0 0.0
        %2081 = vmatprep.subr.mxu0 0.0
        %2082 = vmatpush1.msra.mxu0 0.0
        %2083 = vmatprep.subr.mxu0 0.0
        %2084 = vmatpush1.msra.mxu0 0.0
        %2085 = vmatprep.subr.mxu0 0.0
        %2086 = vmatpush1.msra.mxu0 0.0
        %2087 = vmatprep.subr.mxu0 0.0
        %2088 = vmatpush1.msra.mxu0 0.0
        %2089 = vmatprep.subr.mxu0 0.0
        %2090 = vmatpush1.msra.mxu0 0.0
        %2091 = vmatprep.subr.mxu0 0.0
        %2092 = vmatpush1.msra.mxu0 0.0
        %2093 = vmatprep.subr.mxu0 0.0
        %2094 = vmatpush1.msra.mxu0 0.0
        %2095 = vmatprep.subr.mxu0 0.0
        %2096 = vmatpush1.msra.mxu0 0.0
        %2097 = vmatprep.subr.mxu0 0.0
        %2098 = vmatpush1.msra.mxu0 0.0
        %2099 = vmatprep.subr.mxu0 0.0
        %2100 = vmatpush1.msra.mxu0 0.0
        %2101 = vmatprep.subr.mxu0 0.0
        %2102 = vmatpush1.msra.mxu0 0.0
        %2103 = vmatprep.subr.mxu0 0.0
        %2104 = vmatpush1.msra.mxu0 0.0
        %2105 = vmatprep.subr.mxu0 0.0
        %2106 = vmatpush1.msra.mxu0 0.0
        %2107 = vmatprep.subr.mxu0 0.0
        %2108 = vmatpush1.msra.mxu0 0.0
        %2109 = vmatprep.subr.mxu0 0.0
        %2110 = vmatpush1.msra.mxu0 0.0
        %2111 = vmatprep.subr.mxu0 0.0
        %2112 = vmatpush1.msra.mxu0 0.0
        %2113 = vmatprep.subr.mxu0 0.0
        %2114 = vmatpush1.msra.mxu0 0.0
        %2115 = vmatprep.subr.mxu0 0.0
        %2116 = vmatpush1.msra.mxu0 0.0
        %2117 = vmatprep.subr.mxu0 0.0
        %2118 = vmatpush1.msra.mxu0 0.0
        %2119 = vmatprep.subr.mxu0 0.0
        %2120 = vmatpush1.msra.mxu0 0.0
        %2121 = vmatprep.subr.mxu0 0.0
        %2122 = vmatpush1.msra.mxu0 0.0
        %2123 = vmatprep.subr.mxu0 0.0
        %2124 = vmatpush1.msra.mxu0 0.0
        %2125 = vmatprep.subr.mxu0 0.0
        %2126 = vmatpush1.msra.mxu0 0.0
        %2127 = vmatprep.subr.mxu0 0.0
        %2128 = vmatpush1.msra.mxu0 0.0
        %2129 = vmatprep.subr.mxu0 0.0
        %2130 = vmatpush1.msra.mxu0 0.0
        %2131 = vmatprep.mubr.f32.mxu0 0.0
        %v2132 = vand.u32 %v1724, 4294901760
        %2133 = vmatmul.mubr.f32.gmra.mrb[0].mxu0 %v2132
        %v2134 = vpop.f32.mrb[0].mxu0
        %v2135 = vadd.f32 %v2053, %v2134
        %v2136 = vpop.f32.mrb[0].mxu0
        %2137 = vmatprep.mubr.f32.mxu0 0.0
        %v2138 = vand.u32 %v1727, 4294901760
        %2139 = vmatmul.mubr.f32.gmra.mrb[0].mxu0 %v2138
        %v2140 = vpop.f32.mrb[0].mxu0
        %v2141 = vadd.f32 %v2061, %v2140
        %v2142 = vpop.f32.mrb[0].mxu0
        %2143 = vdwg.mxu0
        %2144 = vmatprep.subr.mxu0 0.0
        %v2145 = vand.u32 %v1731, 4294901760
        %2146 = vmatpush1.msra.mxu0 %v2145
        %2147 = vmatprep.subr.mxu0 0.0
        %2148 = vmatpush1.msra.mxu0 0.0
        %2149 = vmatprep.subr.mxu0 0.0
        %2150 = vmatpush1.msra.mxu0 0.0
        %2151 = vmatprep.subr.mxu0 0.0
        %2152 = vmatpush1.msra.mxu0 0.0
        %2153 = vmatprep.subr.mxu0 0.0
        %2154 = vmatpush1.msra.mxu0 0.0
        %2155 = vmatprep.subr.mxu0 0.0
        %2156 = vmatpush1.msra.mxu0 0.0
        %2157 = vmatprep.subr.mxu0 0.0
        %2158 = vmatpush1.msra.mxu0 0.0
        %2159 = vmatprep.subr.mxu0 0.0
        %2160 = vmatpush1.msra.mxu0 0.0
        %2161 = vmatprep.subr.mxu0 0.0
        %2162 = vmatpush1.msra.mxu0 0.0
        %2163 = vmatprep.subr.mxu0 0.0
        %2164 = vmatpush1.msra.mxu0 0.0
        %2165 = vmatprep.subr.mxu0 0.0
        %2166 = vmatpush1.msra.mxu0 0.0
        %2167 = vmatprep.subr.mxu0 0.0
        %2168 = vmatpush1.msra.mxu0 0.0
        %2169 = vmatprep.subr.mxu0 0.0
        %2170 = vmatpush1.msra.mxu0 0.0
        %2171 = vmatprep.subr.mxu0 0.0
        %2172 = vmatpush1.msra.mxu0 0.0
        %2173 = vmatprep.subr.mxu0 0.0
        %2174 = vmatpush1.msra.mxu0 0.0
        %2175 = vmatprep.subr.mxu0 0.0
        %2176 = vmatpush1.msra.mxu0 0.0
        %2177 = vmatprep.subr.mxu0 0.0
        %2178 = vmatpush1.msra.mxu0 0.0
        %2179 = vmatprep.subr.mxu0 0.0
        %2180 = vmatpush1.msra.mxu0 0.0
        %2181 = vmatprep.subr.mxu0 0.0
        %2182 = vmatpush1.msra.mxu0 0.0
        %2183 = vmatprep.subr.mxu0 0.0
        %2184 = vmatpush1.msra.mxu0 0.0
        %2185 = vmatprep.subr.mxu0 0.0
        %2186 = vmatpush1.msra.mxu0 0.0
        %2187 = vmatprep.subr.mxu0 0.0
        %2188 = vmatpush1.msra.mxu0 0.0
        %2189 = vmatprep.subr.mxu0 0.0
        %2190 = vmatpush1.msra.mxu0 0.0
        %2191 = vmatprep.subr.mxu0 0.0
        %2192 = vmatpush1.msra.mxu0 0.0
        %2193 = vmatprep.subr.mxu0 0.0
        %2194 = vmatpush1.msra.mxu0 0.0
        %2195 = vmatprep.subr.mxu0 0.0
        %2196 = vmatpush1.msra.mxu0 0.0
        %2197 = vmatprep.subr.mxu0 0.0
        %2198 = vmatpush1.msra.mxu0 0.0
        %2199 = vmatprep.subr.mxu0 0.0
        %2200 = vmatpush1.msra.mxu0 0.0
        %2201 = vmatprep.subr.mxu0 0.0
        %2202 = vmatpush1.msra.mxu0 0.0
        %2203 = vmatprep.subr.mxu0 0.0
        %2204 = vmatpush1.msra.mxu0 0.0
        %2205 = vmatprep.subr.mxu0 0.0
        %2206 = vmatpush1.msra.mxu0 0.0
        %2207 = vmatprep.subr.mxu0 0.0
        %2208 = vmatpush1.msra.mxu0 0.0
        %2209 = vmatprep.mubr.f32.mxu0 0.0
        %v2210 = vand.u32 %v1724, 4294901760
        %2211 = vmatmul.mubr.f32.gmra.mrb[0].mxu0 %v2210
        %v2212 = vpop.f32.mrb[0].mxu0
        %v2213 = vadd.f32 %v2135, %v2212
        %v2214 = vpop.f32.mrb[0].mxu0
        %2215 = vmatprep.mubr.f32.mxu0 0.0
        %v2216 = vand.u32 %v1727, 4294901760
        %2217 = vmatmul.mubr.f32.gmra.mrb[0].mxu0 %v2216
        %v2218 = vpop.f32.mrb[0].mxu0
        %v2219 = vadd.f32 %v2141, %v2218
        %v2220 = vpop.f32.mrb[0].mxu0
        %2221 = vdwg.mxu0
        %v2222 = vld [vmem:[%s5] sm:$0x1]
        %v2224 = vlaneseq
        %v2225 = vshrl.u32 %v2224, 7
        %v2226 = vsub.s32 0, %v2225
        %v2227 = vrot.slane %v2222, %v2226
        %v2229 = vadd.f32 %v2213, %v2227
        %v2230 = vadd.f32 %v2219, %v2227
        %v2231 = vld [vmem:[%s6] sm:$0xf]
        %v2233 = vsel %vm1222, %v1159, 0
        %v2236 = vsel %vm1222, %v1165, 0
        %v2239 = vsel %vm1222, %v1171, 0
        %v2242 = vsel %vm1222, %v1177, 0
        %v2245 = vsel %vm1222, %v1183, 0
        %v2248 = vsel %vm1222, %v1189, 0
        %v2251 = vsel %vm1229, %v2231, 0
        %2253 = vmatprep.subr.mxu0 0.0
        %v2254 = vand.u32 %v2251, 4294901760
        %2255 = vmatpush1.msra.mxu0 %v2254
        %2256 = vmatprep.subr.mxu0 0.0
        %2257 = vmatpush1.msra.mxu0 0.0
        %2258 = vmatprep.subr.mxu0 0.0
        %2259 = vmatpush1.msra.mxu0 0.0
        %2260 = vmatprep.subr.mxu0 0.0
        %2261 = vmatpush1.msra.mxu0 0.0
        %2262 = vmatprep.subr.mxu0 0.0
        %2263 = vmatpush1.msra.mxu0 0.0
        %2264 = vmatprep.subr.mxu0 0.0
        %2265 = vmatpush1.msra.mxu0 0.0
        %2266 = vmatprep.subr.mxu0 0.0
        %2267 = vmatpush1.msra.mxu0 0.0
        %2268 = vmatprep.subr.mxu0 0.0
        %2269 = vmatpush1.msra.mxu0 0.0
        %2270 = vmatprep.subr.mxu0 0.0
        %2271 = vmatpush1.msra.mxu0 0.0
        %2272 = vmatprep.subr.mxu0 0.0
        %2273 = vmatpush1.msra.mxu0 0.0
        %2274 = vmatprep.subr.mxu0 0.0
        %2275 = vmatpush1.msra.mxu0 0.0
        %2276 = vmatprep.subr.mxu0 0.0
        %2277 = vmatpush1.msra.mxu0 0.0
        %2278 = vmatprep.subr.mxu0 0.0
        %2279 = vmatpush1.msra.mxu0 0.0
        %2280 = vmatprep.subr.mxu0 0.0
        %2281 = vmatpush1.msra.mxu0 0.0
        %2282 = vmatprep.subr.mxu0 0.0
        %2283 = vmatpush1.msra.mxu0 0.0
        %2284 = vmatprep.subr.mxu0 0.0
        %2285 = vmatpush1.msra.mxu0 0.0
        %2286 = vmatprep.subr.mxu0 0.0
        %2287 = vmatpush1.msra.mxu0 0.0
        %2288 = vmatprep.subr.mxu0 0.0
        %2289 = vmatpush1.msra.mxu0 0.0
        %2290 = vmatprep.subr.mxu0 0.0
        %2291 = vmatpush1.msra.mxu0 0.0
        %2292 = vmatprep.subr.mxu0 0.0
        %2293 = vmatpush1.msra.mxu0 0.0
        %2294 = vmatprep.subr.mxu0 0.0
        %2295 = vmatpush1.msra.mxu0 0.0
        %2296 = vmatprep.subr.mxu0 0.0
        %2297 = vmatpush1.msra.mxu0 0.0
        %2298 = vmatprep.subr.mxu0 0.0
        %2299 = vmatpush1.msra.mxu0 0.0
        %2300 = vmatprep.subr.mxu0 0.0
        %2301 = vmatpush1.msra.mxu0 0.0
        %2302 = vmatprep.subr.mxu0 0.0
        %2303 = vmatpush1.msra.mxu0 0.0
        %2304 = vmatprep.subr.mxu0 0.0
        %2305 = vmatpush1.msra.mxu0 0.0
        %2306 = vmatprep.subr.mxu0 0.0
        %2307 = vmatpush1.msra.mxu0 0.0
        %2308 = vmatprep.subr.mxu0 0.0
        %2309 = vmatpush1.msra.mxu0 0.0
        %2310 = vmatprep.subr.mxu0 0.0
        %2311 = vmatpush1.msra.mxu0 0.0
        %2312 = vmatprep.subr.mxu0 0.0
        %2313 = vmatpush1.msra.mxu0 0.0
        %2314 = vmatprep.subr.mxu0 0.0
        %2315 = vmatpush1.msra.mxu0 0.0
        %2316 = vmatprep.subr.mxu0 0.0
        %2317 = vmatpush1.msra.mxu0 0.0
        %2318 = vmatprep.mubr.f32.mxu0 0.0
        %v2319 = vand.u32 %v2233, 4294901760
        %v2320 = vsub.f32 %v2233, %v2319
        %v2321 = vand.u32 %v2320, 4294901760
        %v2322 = vsub.f32 %v2320, %v2321
        %v2323 = vand.u32 %v2322, 4294901760
        %2324 = vmatmul.mubr.f32.gmra.mrb[0].mxu0 %v2323
        %v2325 = vpop.f32.mrb[0].mxu0
        %v2326 = vadd.f32 0.0, %v2325
        %v2327 = vpop.f32.mrb[0].mxu0
        %2328 = vmatprep.mubr.f32.mxu0 0.0
        %v2329 = vand.u32 %v2236, 4294901760
        %v2330 = vsub.f32 %v2236, %v2329
        %v2331 = vand.u32 %v2330, 4294901760
        %v2332 = vsub.f32 %v2330, %v2331
        %v2333 = vand.u32 %v2332, 4294901760
        %2334 = vmatmul.mubr.f32.gmra.mrb[0].mxu0 %v2333
        %v2335 = vpop.f32.mrb[0].mxu0
        %v2336 = vadd.f32 0.0, %v2335
        %v2337 = vpop.f32.mrb[0].mxu0
        %2338 = vmatprep.mubr.f32.mxu0 0.0
        %v2339 = vand.u32 %v2239, 4294901760
        %v2340 = vsub.f32 %v2239, %v2339
        %v2341 = vand.u32 %v2340, 4294901760
        %v2342 = vsub.f32 %v2340, %v2341
        %v2343 = vand.u32 %v2342, 4294901760
        %2344 = vmatmul.mubr.f32.gmra.mrb[0].mxu0 %v2343
        %v2345 = vpop.f32.mrb[0].mxu0
        %v2346 = vadd.f32 0.0, %v2345
        %v2347 = vpop.f32.mrb[0].mxu0
        %2348 = vmatprep.mubr.f32.mxu0 0.0
        %v2349 = vand.u32 %v2242, 4294901760
        %v2350 = vsub.f32 %v2242, %v2349
        %v2351 = vand.u32 %v2350, 4294901760
        %v2352 = vsub.f32 %v2350, %v2351
        %v2353 = vand.u32 %v2352, 4294901760
        %2354 = vmatmul.mubr.f32.gmra.mrb[0].mxu0 %v2353
        %v2355 = vpop.f32.mrb[0].mxu0
        %v2356 = vadd.f32 0.0, %v2355
        %v2357 = vpop.f32.mrb[0].mxu0
        %2358 = vmatprep.mubr.f32.mxu0 0.0
        %v2359 = vand.u32 %v2245, 4294901760
        %v2360 = vsub.f32 %v2245, %v2359
        %v2361 = vand.u32 %v2360, 4294901760
        %v2362 = vsub.f32 %v2360, %v2361
        %v2363 = vand.u32 %v2362, 4294901760
        %2364 = vmatmul.mubr.f32.gmra.mrb[0].mxu0 %v2363
        %v2365 = vpop.f32.mrb[0].mxu0
        %v2366 = vadd.f32 0.0, %v2365
        %v2367 = vpop.f32.mrb[0].mxu0
        %2368 = vmatprep.mubr.f32.mxu0 0.0
        %v2369 = vand.u32 %v2248, 4294901760
        %v2370 = vsub.f32 %v2248, %v2369
        %v2371 = vand.u32 %v2370, 4294901760
        %v2372 = vsub.f32 %v2370, %v2371
        %v2373 = vand.u32 %v2372, 4294901760
        %2374 = vmatmul.mubr.f32.gmra.mrb[0].mxu0 %v2373
        %v2375 = vpop.f32.mrb[0].mxu0
        %v2376 = vadd.f32 0.0, %v2375
        %v2377 = vpop.f32.mrb[0].mxu0
        %2378 = vdwg.mxu0
        %2379 = vmatprep.subr.mxu0 0.0
        %v2380 = vand.u32 %v2251, 4294901760
        %v2381 = vsub.f32 %v2251, %v2380
        %v2382 = vand.u32 %v2381, 4294901760
        %v2383 = vsub.f32 %v2381, %v2382
        %v2384 = vand.u32 %v2383, 4294901760
        %2385 = vmatpush1.msra.mxu0 %v2384
        %2386 = vmatprep.subr.mxu0 0.0
        %2387 = vmatpush1.msra.mxu0 0.0
        %2388 = vmatprep.subr.mxu0 0.0
        %2389 = vmatpush1.msra.mxu0 0.0
        %2390 = vmatprep.subr.mxu0 0.0
        %2391 = vmatpush1.msra.mxu0 0.0
        %2392 = vmatprep.subr.mxu0 0.0
        %2393 = vmatpush1.msra.mxu0 0.0
        %2394 = vmatprep.subr.mxu0 0.0
        %2395 = vmatpush1.msra.mxu0 0.0
        %2396 = vmatprep.subr.mxu0 0.0
        %2397 = vmatpush1.msra.mxu0 0.0
        %2398 = vmatprep.subr.mxu0 0.0
        %2399 = vmatpush1.msra.mxu0 0.0
        %2400 = vmatprep.subr.mxu0 0.0
        %2401 = vmatpush1.msra.mxu0 0.0
        %2402 = vmatprep.subr.mxu0 0.0
        %2403 = vmatpush1.msra.mxu0 0.0
        %2404 = vmatprep.subr.mxu0 0.0
        %2405 = vmatpush1.msra.mxu0 0.0
        %2406 = vmatprep.subr.mxu0 0.0
        %2407 = vmatpush1.msra.mxu0 0.0
        %2408 = vmatprep.subr.mxu0 0.0
        %2409 = vmatpush1.msra.mxu0 0.0
        %2410 = vmatprep.subr.mxu0 0.0
        %2411 = vmatpush1.msra.mxu0 0.0
        %2412 = vmatprep.subr.mxu0 0.0
        %2413 = vmatpush1.msra.mxu0 0.0
        %2414 = vmatprep.subr.mxu0 0.0
        %2415 = vmatpush1.msra.mxu0 0.0
        %2416 = vmatprep.subr.mxu0 0.0
        %2417 = vmatpush1.msra.mxu0 0.0
        %2418 = vmatprep.subr.mxu0 0.0
        %2419 = vmatpush1.msra.mxu0 0.0
        %2420 = vmatprep.subr.mxu0 0.0
        %2421 = vmatpush1.msra.mxu0 0.0
        %2422 = vmatprep.subr.mxu0 0.0
        %2423 = vmatpush1.msra.mxu0 0.0
        %2424 = vmatprep.subr.mxu0 0.0
        %2425 = vmatpush1.msra.mxu0 0.0
        %2426 = vmatprep.subr.mxu0 0.0
        %2427 = vmatpush1.msra.mxu0 0.0
        %2428 = vmatprep.subr.mxu0 0.0
        %2429 = vmatpush1.msra.mxu0 0.0
        %2430 = vmatprep.subr.mxu0 0.0
        %2431 = vmatpush1.msra.mxu0 0.0
        %2432 = vmatprep.subr.mxu0 0.0
        %2433 = vmatpush1.msra.mxu0 0.0
        %2434 = vmatprep.subr.mxu0 0.0
        %2435 = vmatpush1.msra.mxu0 0.0
        %2436 = vmatprep.subr.mxu0 0.0
        %2437 = vmatpush1.msra.mxu0 0.0
        %2438 = vmatprep.subr.mxu0 0.0
        %2439 = vmatpush1.msra.mxu0 0.0
        %2440 = vmatprep.subr.mxu0 0.0
        %2441 = vmatpush1.msra.mxu0 0.0
        %2442 = vmatprep.subr.mxu0 0.0
        %2443 = vmatpush1.msra.mxu0 0.0
        %2444 = vmatprep.subr.mxu0 0.0
        %2445 = vmatpush1.msra.mxu0 0.0
        %2446 = vmatprep.subr.mxu0 0.0
        %2447 = vmatpush1.msra.mxu0 0.0
        %2448 = vmatprep.mubr.f32.mxu0 0.0
        %v2449 = vand.u32 %v2233, 4294901760
        %2450 = vmatmul.mubr.f32.gmra.mrb[0].mxu0 %v2449
        %v2451 = vpop.f32.mrb[0].mxu0
        %v2452 = vadd.f32 %v2326, %v2451
        %v2453 = vpop.f32.mrb[0].mxu0
        %2454 = vmatprep.mubr.f32.mxu0 0.0
        %v2455 = vand.u32 %v2236, 4294901760
        %2456 = vmatmul.mubr.f32.gmra.mrb[0].mxu0 %v2455
        %v2457 = vpop.f32.mrb[0].mxu0
        %v2458 = vadd.f32 %v2336, %v2457
        %v2459 = vpop.f32.mrb[0].mxu0
        %2460 = vmatprep.mubr.f32.mxu0 0.0
        %v2461 = vand.u32 %v2239, 4294901760
        %2462 = vmatmul.mubr.f32.gmra.mrb[0].mxu0 %v2461
        %v2463 = vpop.f32.mrb[0].mxu0
        %v2464 = vadd.f32 %v2346, %v2463
        %v2465 = vpop.f32.mrb[0].mxu0
        %2466 = vmatprep.mubr.f32.mxu0 0.0
        %v2467 = vand.u32 %v2242, 4294901760
        %2468 = vmatmul.mubr.f32.gmra.mrb[0].mxu0 %v2467
        %v2469 = vpop.f32.mrb[0].mxu0
        %v2470 = vadd.f32 %v2356, %v2469
        %v2471 = vpop.f32.mrb[0].mxu0
        %2472 = vmatprep.mubr.f32.mxu0 0.0
        %v2473 = vand.u32 %v2245, 4294901760
        %2474 = vmatmul.mubr.f32.gmra.mrb[0].mxu0 %v2473
        %v2475 = vpop.f32.mrb[0].mxu0
        %v2476 = vadd.f32 %v2366, %v2475
        %v2477 = vpop.f32.mrb[0].mxu0
        %2478 = vmatprep.mubr.f32.mxu0 0.0
        %v2479 = vand.u32 %v2248, 4294901760
        %2480 = vmatmul.mubr.f32.gmra.mrb[0].mxu0 %v2479
        %v2481 = vpop.f32.mrb[0].mxu0
        %v2482 = vadd.f32 %v2376, %v2481
        %v2483 = vpop.f32.mrb[0].mxu0
        %2484 = vdwg.mxu0
        %2485 = vmatprep.subr.mxu0 0.0
        %v2486 = vand.u32 %v2251, 4294901760
        %v2487 = vsub.f32 %v2251, %v2486
        %2488 = vmatpush1.msra.mxu0 %v2487
        %2489 = vmatprep.subr.mxu0 0.0
        %2490 = vmatpush1.msra.mxu0 0.0
        %2491 = vmatprep.subr.mxu0 0.0
        %2492 = vmatpush1.msra.mxu0 0.0
        %2493 = vmatprep.subr.mxu0 0.0
        %2494 = vmatpush1.msra.mxu0 0.0
        %2495 = vmatprep.subr.mxu0 0.0
        %2496 = vmatpush1.msra.mxu0 0.0
        %2497 = vmatprep.subr.mxu0 0.0
        %2498 = vmatpush1.msra.mxu0 0.0
        %2499 = vmatprep.subr.mxu0 0.0
        %2500 = vmatpush1.msra.mxu0 0.0
        %2501 = vmatprep.subr.mxu0 0.0
        %2502 = vmatpush1.msra.mxu0 0.0
        %2503 = vmatprep.subr.mxu0 0.0
        %2504 = vmatpush1.msra.mxu0 0.0
        %2505 = vmatprep.subr.mxu0 0.0
        %2506 = vmatpush1.msra.mxu0 0.0
        %2507 = vmatprep.subr.mxu0 0.0
        %2508 = vmatpush1.msra.mxu0 0.0
        %2509 = vmatprep.subr.mxu0 0.0
        %2510 = vmatpush1.msra.mxu0 0.0
        %2511 = vmatprep.subr.mxu0 0.0
        %2512 = vmatpush1.msra.mxu0 0.0
        %2513 = vmatprep.subr.mxu0 0.0
        %2514 = vmatpush1.msra.mxu0 0.0
        %2515 = vmatprep.subr.mxu0 0.0
        %2516 = vmatpush1.msra.mxu0 0.0
        %2517 = vmatprep.subr.mxu0 0.0
        %2518 = vmatpush1.msra.mxu0 0.0
        %2519 = vmatprep.subr.mxu0 0.0
        %2520 = vmatpush1.msra.mxu0 0.0
        %2521 = vmatprep.subr.mxu0 0.0
        %2522 = vmatpush1.msra.mxu0 0.0
        %2523 = vmatprep.subr.mxu0 0.0
        %2524 = vmatpush1.msra.mxu0 0.0
        %2525 = vmatprep.subr.mxu0 0.0
        %2526 = vmatpush1.msra.mxu0 0.0
        %2527 = vmatprep.subr.mxu0 0.0
        %2528 = vmatpush1.msra.mxu0 0.0
        %2529 = vmatprep.subr.mxu0 0.0
        %2530 = vmatpush1.msra.mxu0 0.0
        %2531 = vmatprep.subr.mxu0 0.0
        %2532 = vmatpush1.msra.mxu0 0.0
        %2533 = vmatprep.subr.mxu0 0.0
        %2534 = vmatpush1.msra.mxu0 0.0
        %2535 = vmatprep.subr.mxu0 0.0
        %2536 = vmatpush1.msra.mxu0 0.0
        %2537 = vmatprep.subr.mxu0 0.0
        %2538 = vmatpush1.msra.mxu0 0.0
        %2539 = vmatprep.subr.mxu0 0.0
        %2540 = vmatpush1.msra.mxu0 0.0
        %2541 = vmatprep.subr.mxu0 0.0
        %2542 = vmatpush1.msra.mxu0 0.0
        %2543 = vmatprep.subr.mxu0 0.0
        %2544 = vmatpush1.msra.mxu0 0.0
        %2545 = vmatprep.subr.mxu0 0.0
        %2546 = vmatpush1.msra.mxu0 0.0
        %2547 = vmatprep.subr.mxu0 0.0
        %2548 = vmatpush1.msra.mxu0 0.0
        %2549 = vmatprep.subr.mxu0 0.0
        %2550 = vmatpush1.msra.mxu0 0.0
        %2551 = vmatprep.mubr.f32.mxu0 0.0
        %v2552 = vand.u32 %v2233, 4294901760
        %v2553 = vsub.f32 %v2233, %v2552
        %2554 = vmatmul.mubr.f32.gmra.mrb[0].mxu0 %v2553
        %v2555 = vpop.f32.mrb[0].mxu0
        %v2556 = vadd.f32 %v2452, %v2555
        %v2557 = vpop.f32.mrb[0].mxu0
        %2558 = vmatprep.mubr.f32.mxu0 0.0
        %v2559 = vand.u32 %v2236, 4294901760
        %v2560 = vsub.f32 %v2236, %v2559
        %2561 = vmatmul.mubr.f32.gmra.mrb[0].mxu0 %v2560
        %v2562 = vpop.f32.mrb[0].mxu0
        %v2563 = vadd.f32 %v2458, %v2562
        %v2564 = vpop.f32.mrb[0].mxu0
        %2565 = vmatprep.mubr.f32.mxu0 0.0
        %v2566 = vand.u32 %v2239, 4294901760
        %v2567 = vsub.f32 %v2239, %v2566
        %2568 = vmatmul.mubr.f32.gmra.mrb[0].mxu0 %v2567
        %v2569 = vpop.f32.mrb[0].mxu0
        %v2570 = vadd.f32 %v2464, %v2569
        %v2571 = vpop.f32.mrb[0].mxu0
        %2572 = vmatprep.mubr.f32.mxu0 0.0
        %v2573 = vand.u32 %v2242, 4294901760
        %v2574 = vsub.f32 %v2242, %v2573
        %2575 = vmatmul.mubr.f32.gmra.mrb[0].mxu0 %v2574
        %v2576 = vpop.f32.mrb[0].mxu0
        %v2577 = vadd.f32 %v2470, %v2576
        %v2578 = vpop.f32.mrb[0].mxu0
        %2579 = vmatprep.mubr.f32.mxu0 0.0
        %v2580 = vand.u32 %v2245, 4294901760
        %v2581 = vsub.f32 %v2245, %v2580
        %2582 = vmatmul.mubr.f32.gmra.mrb[0].mxu0 %v2581
        %v2583 = vpop.f32.mrb[0].mxu0
        %v2584 = vadd.f32 %v2476, %v2583
        %v2585 = vpop.f32.mrb[0].mxu0
        %2586 = vmatprep.mubr.f32.mxu0 0.0
        %v2587 = vand.u32 %v2248, 4294901760
        %v2588 = vsub.f32 %v2248, %v2587
        %2589 = vmatmul.mubr.f32.gmra.mrb[0].mxu0 %v2588
        %v2590 = vpop.f32.mrb[0].mxu0
        %v2591 = vadd.f32 %v2482, %v2590
        %v2592 = vpop.f32.mrb[0].mxu0
        %2593 = vdwg.mxu0
        %2594 = vmatprep.subr.mxu0 0.0
        %v2595 = vand.u32 %v2251, 4294901760
        %2596 = vmatpush1.msra.mxu0 %v2595
        %2597 = vmatprep.subr.mxu0 0.0
        %2598 = vmatpush1.msra.mxu0 0.0
        %2599 = vmatprep.subr.mxu0 0.0
        %2600 = vmatpush1.msra.mxu0 0.0
        %2601 = vmatprep.subr.mxu0 0.0
        %2602 = vmatpush1.msra.mxu0 0.0
        %2603 = vmatprep.subr.mxu0 0.0
        %2604 = vmatpush1.msra.mxu0 0.0
        %2605 = vmatprep.subr.mxu0 0.0
        %2606 = vmatpush1.msra.mxu0 0.0
        %2607 = vmatprep.subr.mxu0 0.0
        %2608 = vmatpush1.msra.mxu0 0.0
        %2609 = vmatprep.subr.mxu0 0.0
        %2610 = vmatpush1.msra.mxu0 0.0
        %2611 = vmatprep.subr.mxu0 0.0
        %2612 = vmatpush1.msra.mxu0 0.0
        %2613 = vmatprep.subr.mxu0 0.0
        %2614 = vmatpush1.msra.mxu0 0.0
        %2615 = vmatprep.subr.mxu0 0.0
        %2616 = vmatpush1.msra.mxu0 0.0
        %2617 = vmatprep.subr.mxu0 0.0
        %2618 = vmatpush1.msra.mxu0 0.0
        %2619 = vmatprep.subr.mxu0 0.0
        %2620 = vmatpush1.msra.mxu0 0.0
        %2621 = vmatprep.subr.mxu0 0.0
        %2622 = vmatpush1.msra.mxu0 0.0
        %2623 = vmatprep.subr.mxu0 0.0
        %2624 = vmatpush1.msra.mxu0 0.0
        %2625 = vmatprep.subr.mxu0 0.0
        %2626 = vmatpush1.msra.mxu0 0.0
        %2627 = vmatprep.subr.mxu0 0.0
        %2628 = vmatpush1.msra.mxu0 0.0
        %2629 = vmatprep.subr.mxu0 0.0
        %2630 = vmatpush1.msra.mxu0 0.0
        %2631 = vmatprep.subr.mxu0 0.0
        %2632 = vmatpush1.msra.mxu0 0.0
        %2633 = vmatprep.subr.mxu0 0.0
        %2634 = vmatpush1.msra.mxu0 0.0
        %2635 = vmatprep.subr.mxu0 0.0
        %2636 = vmatpush1.msra.mxu0 0.0
        %2637 = vmatprep.subr.mxu0 0.0
        %2638 = vmatpush1.msra.mxu0 0.0
        %2639 = vmatprep.subr.mxu0 0.0
        %2640 = vmatpush1.msra.mxu0 0.0
        %2641 = vmatprep.subr.mxu0 0.0
        %2642 = vmatpush1.msra.mxu0 0.0
        %2643 = vmatprep.subr.mxu0 0.0
        %2644 = vmatpush1.msra.mxu0 0.0
        %2645 = vmatprep.subr.mxu0 0.0
        %2646 = vmatpush1.msra.mxu0 0.0
        %2647 = vmatprep.subr.mxu0 0.0
        %2648 = vmatpush1.msra.mxu0 0.0
        %2649 = vmatprep.subr.mxu0 0.0
        %2650 = vmatpush1.msra.mxu0 0.0
        %2651 = vmatprep.subr.mxu0 0.0
        %2652 = vmatpush1.msra.mxu0 0.0
        %2653 = vmatprep.subr.mxu0 0.0
        %2654 = vmatpush1.msra.mxu0 0.0
        %2655 = vmatprep.subr.mxu0 0.0
        %2656 = vmatpush1.msra.mxu0 0.0
        %2657 = vmatprep.subr.mxu0 0.0
        %2658 = vmatpush1.msra.mxu0 0.0
        %2659 = vmatprep.mubr.f32.mxu0 0.0
        %v2660 = vand.u32 %v2233, 4294901760
        %v2661 = vsub.f32 %v2233, %v2660
        %v2662 = vand.u32 %v2661, 4294901760
        %2663 = vmatmul.mubr.f32.gmra.mrb[0].mxu0 %v2662
        %v2664 = vpop.f32.mrb[0].mxu0
        %v2665 = vadd.f32 %v2556, %v2664
        %v2666 = vpop.f32.mrb[0].mxu0
        %2667 = vmatprep.mubr.f32.mxu0 0.0
        %v2668 = vand.u32 %v2236, 4294901760
        %v2669 = vsub.f32 %v2236, %v2668
        %v2670 = vand.u32 %v2669, 4294901760
        %2671 = vmatmul.mubr.f32.gmra.mrb[0].mxu0 %v2670
        %v2672 = vpop.f32.mrb[0].mxu0
        %v2673 = vadd.f32 %v2563, %v2672
        %v2674 = vpop.f32.mrb[0].mxu0
        %2675 = vmatprep.mubr.f32.mxu0 0.0
        %v2676 = vand.u32 %v2239, 4294901760
        %v2677 = vsub.f32 %v2239, %v2676
        %v2678 = vand.u32 %v2677, 4294901760
        %2679 = vmatmul.mubr.f32.gmra.mrb[0].mxu0 %v2678
        %v2680 = vpop.f32.mrb[0].mxu0
        %v2681 = vadd.f32 %v2570, %v2680
        %v2682 = vpop.f32.mrb[0].mxu0
        %2683 = vmatprep.mubr.f32.mxu0 0.0
        %v2684 = vand.u32 %v2242, 4294901760
        %v2685 = vsub.f32 %v2242, %v2684
        %v2686 = vand.u32 %v2685, 4294901760
        %2687 = vmatmul.mubr.f32.gmra.mrb[0].mxu0 %v2686
        %v2688 = vpop.f32.mrb[0].mxu0
        %v2689 = vadd.f32 %v2577, %v2688
        %v2690 = vpop.f32.mrb[0].mxu0
        %2691 = vmatprep.mubr.f32.mxu0 0.0
        %v2692 = vand.u32 %v2245, 4294901760
        %v2693 = vsub.f32 %v2245, %v2692
        %v2694 = vand.u32 %v2693, 4294901760
        %2695 = vmatmul.mubr.f32.gmra.mrb[0].mxu0 %v2694
        %v2696 = vpop.f32.mrb[0].mxu0
        %v2697 = vadd.f32 %v2584, %v2696
        %v2698 = vpop.f32.mrb[0].mxu0
        %2699 = vmatprep.mubr.f32.mxu0 0.0
        %v2700 = vand.u32 %v2248, 4294901760
        %v2701 = vsub.f32 %v2248, %v2700
        %v2702 = vand.u32 %v2701, 4294901760
        %2703 = vmatmul.mubr.f32.gmra.mrb[0].mxu0 %v2702
        %v2704 = vpop.f32.mrb[0].mxu0
        %v2705 = vadd.f32 %v2591, %v2704
        %v2706 = vpop.f32.mrb[0].mxu0
        %2707 = vdwg.mxu0
        %2708 = vmatprep.subr.mxu0 0.0
        %v2709 = vand.u32 %v2251, 4294901760
        %v2710 = vsub.f32 %v2251, %v2709
        %v2711 = vand.u32 %v2710, 4294901760
        %2712 = vmatpush1.msra.mxu0 %v2711
        %2713 = vmatprep.subr.mxu0 0.0
        %2714 = vmatpush1.msra.mxu0 0.0
        %2715 = vmatprep.subr.mxu0 0.0
        %2716 = vmatpush1.msra.mxu0 0.0
        %2717 = vmatprep.subr.mxu0 0.0
        %2718 = vmatpush1.msra.mxu0 0.0
        %2719 = vmatprep.subr.mxu0 0.0
        %2720 = vmatpush1.msra.mxu0 0.0
        %2721 = vmatprep.subr.mxu0 0.0
        %2722 = vmatpush1.msra.mxu0 0.0
        %2723 = vmatprep.subr.mxu0 0.0
        %2724 = vmatpush1.msra.mxu0 0.0
        %2725 = vmatprep.subr.mxu0 0.0
        %2726 = vmatpush1.msra.mxu0 0.0
        %2727 = vmatprep.subr.mxu0 0.0
        %2728 = vmatpush1.msra.mxu0 0.0
        %2729 = vmatprep.subr.mxu0 0.0
        %2730 = vmatpush1.msra.mxu0 0.0
        %2731 = vmatprep.subr.mxu0 0.0
        %2732 = vmatpush1.msra.mxu0 0.0
        %2733 = vmatprep.subr.mxu0 0.0
        %2734 = vmatpush1.msra.mxu0 0.0
        %2735 = vmatprep.subr.mxu0 0.0
        %2736 = vmatpush1.msra.mxu0 0.0
        %2737 = vmatprep.subr.mxu0 0.0
        %2738 = vmatpush1.msra.mxu0 0.0
        %2739 = vmatprep.subr.mxu0 0.0
        %2740 = vmatpush1.msra.mxu0 0.0
        %2741 = vmatprep.subr.mxu0 0.0
        %2742 = vmatpush1.msra.mxu0 0.0
        %2743 = vmatprep.subr.mxu0 0.0
        %2744 = vmatpush1.msra.mxu0 0.0
        %2745 = vmatprep.subr.mxu0 0.0
        %2746 = vmatpush1.msra.mxu0 0.0
        %2747 = vmatprep.subr.mxu0 0.0
        %2748 = vmatpush1.msra.mxu0 0.0
        %2749 = vmatprep.subr.mxu0 0.0
        %2750 = vmatpush1.msra.mxu0 0.0
        %2751 = vmatprep.subr.mxu0 0.0
        %2752 = vmatpush1.msra.mxu0 0.0
        %2753 = vmatprep.subr.mxu0 0.0
        %2754 = vmatpush1.msra.mxu0 0.0
        %2755 = vmatprep.subr.mxu0 0.0
        %2756 = vmatpush1.msra.mxu0 0.0
        %2757 = vmatprep.subr.mxu0 0.0
        %2758 = vmatpush1.msra.mxu0 0.0
        %2759 = vmatprep.subr.mxu0 0.0
        %2760 = vmatpush1.msra.mxu0 0.0
        %2761 = vmatprep.subr.mxu0 0.0
        %2762 = vmatpush1.msra.mxu0 0.0
        %2763 = vmatprep.subr.mxu0 0.0
        %2764 = vmatpush1.msra.mxu0 0.0
        %2765 = vmatprep.subr.mxu0 0.0
        %2766 = vmatpush1.msra.mxu0 0.0
        %2767 = vmatprep.subr.mxu0 0.0
        %2768 = vmatpush1.msra.mxu0 0.0
        %2769 = vmatprep.subr.mxu0 0.0
        %2770 = vmatpush1.msra.mxu0 0.0
        %2771 = vmatprep.subr.mxu0 0.0
        %2772 = vmatpush1.msra.mxu0 0.0
        %2773 = vmatprep.subr.mxu0 0.0
        %2774 = vmatpush1.msra.mxu0 0.0
        %2775 = vmatprep.mubr.f32.mxu0 0.0
        %v2776 = vand.u32 %v2233, 4294901760
        %2777 = vmatmul.mubr.f32.gmra.mrb[0].mxu0 %v2776
        %v2778 = vpop.f32.mrb[0].mxu0
        %v2779 = vadd.f32 %v2665, %v2778
        %v2780 = vpop.f32.mrb[0].mxu0
        %2781 = vmatprep.mubr.f32.mxu0 0.0
        %v2782 = vand.u32 %v2236, 4294901760
        %2783 = vmatmul.mubr.f32.gmra.mrb[0].mxu0 %v2782
        %v2784 = vpop.f32.mrb[0].mxu0
        %v2785 = vadd.f32 %v2673, %v2784
        %v2786 = vpop.f32.mrb[0].mxu0
        %2787 = vmatprep.mubr.f32.mxu0 0.0
        %v2788 = vand.u32 %v2239, 4294901760
        %2789 = vmatmul.mubr.f32.gmra.mrb[0].mxu0 %v2788
        %v2790 = vpop.f32.mrb[0].mxu0
        %v2791 = vadd.f32 %v2681, %v2790
        %v2792 = vpop.f32.mrb[0].mxu0
        %2793 = vmatprep.mubr.f32.mxu0 0.0
        %v2794 = vand.u32 %v2242, 4294901760
        %2795 = vmatmul.mubr.f32.gmra.mrb[0].mxu0 %v2794
        %v2796 = vpop.f32.mrb[0].mxu0
        %v2797 = vadd.f32 %v2689, %v2796
        %v2798 = vpop.f32.mrb[0].mxu0
        %2799 = vmatprep.mubr.f32.mxu0 0.0
        %v2800 = vand.u32 %v2245, 4294901760
        %2801 = vmatmul.mubr.f32.gmra.mrb[0].mxu0 %v2800
        %v2802 = vpop.f32.mrb[0].mxu0
        %v2803 = vadd.f32 %v2697, %v2802
        %v2804 = vpop.f32.mrb[0].mxu0
        %2805 = vmatprep.mubr.f32.mxu0 0.0
        %v2806 = vand.u32 %v2248, 4294901760
        %2807 = vmatmul.mubr.f32.gmra.mrb[0].mxu0 %v2806
        %v2808 = vpop.f32.mrb[0].mxu0
        %v2809 = vadd.f32 %v2705, %v2808
        %v2810 = vpop.f32.mrb[0].mxu0
        %2811 = vdwg.mxu0
        %2812 = vmatprep.subr.mxu0 0.0
        %v2813 = vand.u32 %v2251, 4294901760
        %2814 = vmatpush1.msra.mxu0 %v2813
        %2815 = vmatprep.subr.mxu0 0.0
        %2816 = vmatpush1.msra.mxu0 0.0
        %2817 = vmatprep.subr.mxu0 0.0
        %2818 = vmatpush1.msra.mxu0 0.0
        %2819 = vmatprep.subr.mxu0 0.0
        %2820 = vmatpush1.msra.mxu0 0.0
        %2821 = vmatprep.subr.mxu0 0.0
        %2822 = vmatpush1.msra.mxu0 0.0
        %2823 = vmatprep.subr.mxu0 0.0
        %2824 = vmatpush1.msra.mxu0 0.0
        %2825 = vmatprep.subr.mxu0 0.0
        %2826 = vmatpush1.msra.mxu0 0.0
        %2827 = vmatprep.subr.mxu0 0.0
        %2828 = vmatpush1.msra.mxu0 0.0
        %2829 = vmatprep.subr.mxu0 0.0
        %2830 = vmatpush1.msra.mxu0 0.0
        %2831 = vmatprep.subr.mxu0 0.0
        %2832 = vmatpush1.msra.mxu0 0.0
        %2833 = vmatprep.subr.mxu0 0.0
        %2834 = vmatpush1.msra.mxu0 0.0
        %2835 = vmatprep.subr.mxu0 0.0
        %2836 = vmatpush1.msra.mxu0 0.0
        %2837 = vmatprep.subr.mxu0 0.0
        %2838 = vmatpush1.msra.mxu0 0.0
        %2839 = vmatprep.subr.mxu0 0.0
        %2840 = vmatpush1.msra.mxu0 0.0
        %2841 = vmatprep.subr.mxu0 0.0
        %2842 = vmatpush1.msra.mxu0 0.0
        %2843 = vmatprep.subr.mxu0 0.0
        %2844 = vmatpush1.msra.mxu0 0.0
        %2845 = vmatprep.subr.mxu0 0.0
        %2846 = vmatpush1.msra.mxu0 0.0
        %2847 = vmatprep.subr.mxu0 0.0
        %2848 = vmatpush1.msra.mxu0 0.0
        %2849 = vmatprep.subr.mxu0 0.0
        %2850 = vmatpush1.msra.mxu0 0.0
        %2851 = vmatprep.subr.mxu0 0.0
        %2852 = vmatpush1.msra.mxu0 0.0
        %2853 = vmatprep.subr.mxu0 0.0
        %2854 = vmatpush1.msra.mxu0 0.0
        %2855 = vmatprep.subr.mxu0 0.0
        %2856 = vmatpush1.msra.mxu0 0.0
        %2857 = vmatprep.subr.mxu0 0.0
        %2858 = vmatpush1.msra.mxu0 0.0
        %2859 = vmatprep.subr.mxu0 0.0
        %2860 = vmatpush1.msra.mxu0 0.0
        %2861 = vmatprep.subr.mxu0 0.0
        %2862 = vmatpush1.msra.mxu0 0.0
        %2863 = vmatprep.subr.mxu0 0.0
        %2864 = vmatpush1.msra.mxu0 0.0
        %2865 = vmatprep.subr.mxu0 0.0
        %2866 = vmatpush1.msra.mxu0 0.0
        %2867 = vmatprep.subr.mxu0 0.0
        %2868 = vmatpush1.msra.mxu0 0.0
        %2869 = vmatprep.subr.mxu0 0.0
        %2870 = vmatpush1.msra.mxu0 0.0
        %2871 = vmatprep.subr.mxu0 0.0
        %2872 = vmatpush1.msra.mxu0 0.0
        %2873 = vmatprep.subr.mxu0 0.0
        %2874 = vmatpush1.msra.mxu0 0.0
        %2875 = vmatprep.subr.mxu0 0.0
        %2876 = vmatpush1.msra.mxu0 0.0
        %2877 = vmatprep.mubr.f32.mxu0 0.0
        %v2878 = vand.u32 %v2233, 4294901760
        %2879 = vmatmul.mubr.f32.gmra.mrb[0].mxu0 %v2878
        %v2880 = vpop.f32.mrb[0].mxu0
        %v2881 = vadd.f32 %v2779, %v2880
        %v2882 = vpop.f32.mrb[0].mxu0
        %2883 = vmatprep.mubr.f32.mxu0 0.0
        %v2884 = vand.u32 %v2236, 4294901760
        %2885 = vmatmul.mubr.f32.gmra.mrb[0].mxu0 %v2884
        %v2886 = vpop.f32.mrb[0].mxu0
        %v2887 = vadd.f32 %v2785, %v2886
        %v2888 = vpop.f32.mrb[0].mxu0
        %2889 = vmatprep.mubr.f32.mxu0 0.0
        %v2890 = vand.u32 %v2239, 4294901760
        %2891 = vmatmul.mubr.f32.gmra.mrb[0].mxu0 %v2890
        %v2892 = vpop.f32.mrb[0].mxu0
        %v2893 = vadd.f32 %v2791, %v2892
        %v2894 = vpop.f32.mrb[0].mxu0
        %2895 = vmatprep.mubr.f32.mxu0 0.0
        %v2896 = vand.u32 %v2242, 4294901760
        %2897 = vmatmul.mubr.f32.gmra.mrb[0].mxu0 %v2896
        %v2898 = vpop.f32.mrb[0].mxu0
        %v2899 = vadd.f32 %v2797, %v2898
        %v2900 = vpop.f32.mrb[0].mxu0
        %2901 = vmatprep.mubr.f32.mxu0 0.0
        %v2902 = vand.u32 %v2245, 4294901760
        %2903 = vmatmul.mubr.f32.gmra.mrb[0].mxu0 %v2902
        %v2904 = vpop.f32.mrb[0].mxu0
        %v2905 = vadd.f32 %v2803, %v2904
        %v2906 = vpop.f32.mrb[0].mxu0
        %2907 = vmatprep.mubr.f32.mxu0 0.0
        %v2908 = vand.u32 %v2248, 4294901760
        %2909 = vmatmul.mubr.f32.gmra.mrb[0].mxu0 %v2908
        %v2910 = vpop.f32.mrb[0].mxu0
        %v2911 = vadd.f32 %v2809, %v2910
        %v2912 = vpop.f32.mrb[0].mxu0
        %2913 = vdwg.mxu0
        %v2914 = vmul.f32 %v2881, %v2881
        %v2915 = vmul.f32 %v2887, %v2887
        %v2916 = vmul.f32 %v2893, %v2893
        %v2917 = vmul.f32 %v2899, %v2899
        %v2918 = vadd.f32 %v2914, %v2916
        %v2919 = vadd.f32 %v2915, %v2917
        %v2920 = vmul.f32 %v2905, %v2905
        %v2921 = vmul.f32 %v2911, %v2911
        %v2922 = vadd.f32 %v2918, %v2920
        %v2923 = vadd.f32 %v2919, %v2921
        %v2924 = vmax.f32 %v2922, 1e-08
        %v2925 = vmax.f32 %v2923, 1e-08
        %v2926 = vrsqrt.pop %v2924
        %v2927 = vmul.f32 %v2924, %v2926
        %vm2928 = vcmp.eq.f32.partialorder %v2924, inf
        %v2929 = vsel %vm2928, %v2924, %v2927
        %vm2930 = vcmp.eq.f32.partialorder %v2924, 0.0
        %v2931 = vand.u32 %v2924, 2147483648
        %v2932 = vsel %vm2930, %v2931, %v2929
        %v2933 = vrsqrt.pop %v2925
        %v2934 = vmul.f32 %v2925, %v2933
        %vm2935 = vcmp.eq.f32.partialorder %v2925, inf
        %v2936 = vsel %vm2935, %v2925, %v2934
        %vm2937 = vcmp.eq.f32.partialorder %v2925, 0.0
        %v2938 = vand.u32 %v2925, 2147483648
        %v2939 = vsel %vm2937, %v2938, %v2936
        %v2940 = vxor.u32 %v2932, 2147483648
        %v2941 = vxor.u32 %v2939, 2147483648
        %v2942 = vmul.f32 %v2940, 1.442695
        %v2943 = vpow.pop %v2942
        %v2944 = vmul.f32 %v2941, 1.442695
        %v2945 = vpow.pop %v2944
        %v2946 = vadd.f32 %v2943, 1.0
        %v2947 = vadd.f32 %v2945, 1.0
        %v2948 = vrcp.pop %v2946
        %v2949 = vmul.f32 1.0, %v2948
        %v2950 = vrcp.pop %v2947
        %v2951 = vmul.f32 1.0, %v2950
        %v2952 = vmul.f32 %v2881, %v2949
        %v2953 = vmul.f32 %v2887, %v2951
        %v2954 = vmul.f32 %v2893, %v2949
        %v2955 = vmul.f32 %v2899, %v2951
        %v2956 = vmul.f32 %v2905, %v2949
        %v2957 = vmul.f32 %v2911, %v2951
        %v2958 = vmax.f32 %v2229, 0.0
        %v2959 = vmax.f32 %v2230, 0.0
        %vm2960 = vcmask 130048
        %2961 = vst.msk [vmem:[%s465] sm:$0xff] %vm2960, %v2958
        %2962 = vst.msk [vmem:[%s465 + $0x8] sm:$0xff] %vm2960, %v2959
        %2963 = vst.msk [vmem:[%s471] sm:$0xff] %vm1222, %v2952
        %2964 = vst.msk [vmem:[%s471 + $0x8] sm:$0xff] %vm1222, %v2953
        %2965 = vst.msk [vmem:[%s471 + $0x10] sm:$0xff] %vm1222, %v2954
        %2966 = vst.msk [vmem:[%s471 + $0x18] sm:$0xff] %vm1222, %v2955
        %2967 = vst.msk [vmem:[%s471 + $0x20] sm:$0xff] %vm1222, %v2956
        %2968 = vst.msk [vmem:[%s471 + $0x28] sm:$0xff] %vm1222, %v2957
        %s2969 = sand.u32 %s185, 1
        %s2970 = sand.u32 %s185, 1
        %s2971 = smul.addr %s2970, 16
        %s2972 = scalar_lea.vmem [#allocation3], %s2971
        %s2973 = sand.u32 %s211, 1
        %s2974 = sand.u32 %s211, 1
        %s2975 = smul.addr %s2974, 48
        %s2976 = scalar_lea.vmem [#allocation4], %s2975
        // Predicated region
        $region101: #{tpu_custom_call.1} parent=95 // pred_check
          %p2977 = pneg %p195
        $region102: #{tpu_custom_call.1} parent=95 // pred_check_branch
          %2979 = sbr.rel (%p2977) target = $region104
        $region103: #{tpu_custom_call.1} parent=95 // pred_region
          %s2980 = smul.u32 2, %s20
          %s2981 = ssub.s32 3, %s2980
          %p2982 = scmp.lt.s32.totalorder %s2981, 2
          %s2983 = scalar_select %p2982, %s2981, 2
          %s2984 = smul.u32 128, %s2983
          %p2985 = scmp.ne.s32.totalorder 0, %s2984
          %s2986 = smul.addr %s2980, 8
          %s2987 = scalar_lea.vmem %s7, %s2986
          // Predicated region
          $region105: #{tpu_custom_call.1} parent=103 // pred_check
            %p2988 = pneg %p2985
          $region106: #{tpu_custom_call.1} parent=103 // pred_check_branch
            %2990 = sbr.rel (%p2988) target = $region108
          $region107: #{tpu_custom_call.1} parent=103 // pred_region
            // Predicated region
            $region109: #{tpu_custom_call.1} parent=107 // pred_check
              _
            $region110: #{tpu_custom_call.1} parent=107 // pred_check_branch
              %2992 = sbr.rel (0) target = $region112
            $region111: #{tpu_custom_call.1} parent=107 // pred_region
              // Predicated region
              $region131: #{tpu_custom_call.1} parent=111 // pred_check
                _
              $region132: #{tpu_custom_call.1} parent=111 // pred_check_branch
                %3043 = sbr.rel (0) target = $region134
              $region133: #{tpu_custom_call.1} parent=111 // pred_region
                %s3044 = sshrl.u32 %s2983, 1
                // While loop
                $region135: #{tpu_custom_call.1} parent=133 // loop_pre_header
                  _
                $region136: #{tpu_custom_call.1} parent=133 // loop_header
                  %s3046 = sphi 0, %s3048
                  %p3047 = scmp.ge.s32.totalorder %s3046, %s3044
                  %s3051 = sphi 0, %s3060
                  %s3052 = sphi %s2972, %s3063
                  %s3053 = sphi %s2987, %s3064
                $region137: #{tpu_custom_call.1} parent=133 // loop_header_branch
                  %3050 = sbr.rel (%p3047) target = $region141
                $region138: #{tpu_custom_call.1} parent=133 // loop_body
                  %v3054 = vld [vmem:[%s3052] sm:$0xff]
                  %3055 = vst [vmem:[%s3053] sm:$0xff] %v3054
                  %v3056 = vld [vmem:[%s3052 + $0x8] sm:$0xff]
                  %3057 = vst [vmem:[%s3053 + $0x8] sm:$0xff] %v3056
                  %s3058 = sadd.s32 1, %s3051
                  %p3059 = scmp.ge.s32.totalorder %s3058, %s3044
                  %s3060 = scalar_select %p3059, 0, %s3058
                  %s3061 = smul.u32 %s3060, 16
                  %s3062 = smul.u32 %s3060, 16
                  %s3063 = scalar_lea.vmem %s2972, %s3061 [#allocation3]
                  %s3064 = scalar_lea.vmem %s2987, %s3062
                $region139: #{tpu_custom_call.1} parent=133 // loop_footer
                  %s3048 = sadd.s32 %s3046, 1
                $region140: #{tpu_custom_call.1} parent=133 // loop_footer_branch
                  %3045 = sbr.rel target = $region136
                $region141: #{tpu_custom_call.1} parent=133 // loop_exit
                  _
                %s3065 = sshrl.u32 %s2983, 1
                %s3066 = sand.u32 %s2983, 1
                %s3067 = smul.u32 %s3065, 2
                %s3068 = smul.u32 8, %s3067
                %s3069 = scalar_lea.vmem %s2972, %s3068 [#allocation3]
                %s3070 = smul.u32 8, %s3067
                %s3071 = scalar_lea.vmem %s2987, %s3070
                // While loop
                $region142: #{tpu_custom_call.1} parent=133 // loop_pre_header
                  _
                $region143: #{tpu_custom_call.1} parent=133 // loop_header
                  %s3073 = sphi 0, %s3075
                  %p3074 = scmp.ge.s32.totalorder %s3073, %s3066
                  %s3078 = sphi 0, %s3085
                  %s3079 = sphi %s3069, %s3088
                  %s3080 = sphi %s3071, %s3089
                $region144: #{tpu_custom_call.1} parent=133 // loop_header_branch
                  %3077 = sbr.rel (%p3074) target = $region148
                $region145: #{tpu_custom_call.1} parent=133 // loop_body
                  %v3081 = vld [vmem:[%s3079] sm:$0xff]
                  %3082 = vst [vmem:[%s3080] sm:$0xff] %v3081
                  %s3083 = sadd.s32 1, %s3078
                  %p3084 = scmp.ge.s32.totalorder %s3083, %s3066
                  %s3085 = scalar_select %p3084, 0, %s3083
                  %s3086 = smul.u32 %s3085, 8
                  %s3087 = smul.u32 %s3085, 8
                  %s3088 = scalar_lea.vmem %s3069, %s3086 [#allocation3]
                  %s3089 = scalar_lea.vmem %s3071, %s3087
                $region146: #{tpu_custom_call.1} parent=133 // loop_footer
                  %s3075 = sadd.s32 %s3073, 1
                $region147: #{tpu_custom_call.1} parent=133 // loop_footer_branch
                  %3072 = sbr.rel target = $region143
                $region148: #{tpu_custom_call.1} parent=133 // loop_exit
                  _
              $region134: #{tpu_custom_call.1} parent=111 // pred_fallthru
                _
              // Predicated region
              $region149: #{tpu_custom_call.1} parent=111 // pred_check
                _
              $region150: #{tpu_custom_call.1} parent=111 // pred_check_branch
                %3091 = sbr.rel target = $region152
              $region151: #{tpu_custom_call.1} parent=111 // pred_region
                _
              $region152: #{tpu_custom_call.1} parent=111 // pred_fallthru
                _
            $region112: #{tpu_custom_call.1} parent=107 // pred_fallthru
              _
            // Predicated region
            $region113: #{tpu_custom_call.1} parent=107 // pred_check
              _
            $region114: #{tpu_custom_call.1} parent=107 // pred_check_branch
              %2994 = sbr.rel target = $region116
            $region115: #{tpu_custom_call.1} parent=107 // pred_region
              %s2996 = sshrl.u32 %s2983, 1
              // While loop
              $region117: #{tpu_custom_call.1} parent=115 // loop_pre_header
                _
              $region118: #{tpu_custom_call.1} parent=115 // loop_header
                %s2998 = sphi 0, %s3000
                %p2999 = scmp.ge.s32.totalorder %s2998, %s2996
                %s3003 = sphi 0, %s3012
                %s3004 = sphi %s2972, %s3015
                %s3005 = sphi %s2987, %s3016
              $region119: #{tpu_custom_call.1} parent=115 // loop_header_branch
                %3002 = sbr.rel (%p2999) target = $region123
              $region120: #{tpu_custom_call.1} parent=115 // loop_body
                %v3006 = vld [vmem:[%s3004] sm:$0xff]
                %3007 = vst [vmem:[%s3005] sm:$0xff] %v3006
                %v3008 = vld [vmem:[%s3004 + $0x8] sm:$0xff]
                %3009 = vst [vmem:[%s3005 + $0x8] sm:$0xff] %v3008
                %s3010 = sadd.s32 1, %s3003
                %p3011 = scmp.ge.s32.totalorder %s3010, %s2996
                %s3012 = scalar_select %p3011, 0, %s3010
                %s3013 = smul.u32 %s3012, 16
                %s3014 = smul.u32 %s3012, 16
                %s3015 = scalar_lea.vmem %s2972, %s3013 [#allocation3]
                %s3016 = scalar_lea.vmem %s2987, %s3014
              $region121: #{tpu_custom_call.1} parent=115 // loop_footer
                %s3000 = sadd.s32 %s2998, 1
              $region122: #{tpu_custom_call.1} parent=115 // loop_footer_branch
                %2997 = sbr.rel target = $region118
              $region123: #{tpu_custom_call.1} parent=115 // loop_exit
                _
              %s3017 = sshrl.u32 %s2983, 1
              %s3018 = sand.u32 %s2983, 1
              %s3019 = smul.u32 %s3017, 2
              %s3020 = smul.u32 8, %s3019
              %s3021 = scalar_lea.vmem %s2972, %s3020 [#allocation3]
              %s3022 = smul.u32 8, %s3019
              %s3023 = scalar_lea.vmem %s2987, %s3022
              // While loop
              $region124: #{tpu_custom_call.1} parent=115 // loop_pre_header
                _
              $region125: #{tpu_custom_call.1} parent=115 // loop_header
                %s3025 = sphi 0, %s3027
                %p3026 = scmp.ge.s32.totalorder %s3025, %s3018
                %s3030 = sphi 0, %s3037
                %s3031 = sphi %s3021, %s3040
                %s3032 = sphi %s3023, %s3041
              $region126: #{tpu_custom_call.1} parent=115 // loop_header_branch
                %3029 = sbr.rel (%p3026) target = $region130
              $region127: #{tpu_custom_call.1} parent=115 // loop_body
                %v3033 = vld [vmem:[%s3031] sm:$0xff]
                %3034 = vst [vmem:[%s3032] sm:$0xff] %v3033
                %s3035 = sadd.s32 1, %s3030
                %p3036 = scmp.ge.s32.totalorder %s3035, %s3018
                %s3037 = scalar_select %p3036, 0, %s3035
                %s3038 = smul.u32 %s3037, 8
                %s3039 = smul.u32 %s3037, 8
                %s3040 = scalar_lea.vmem %s3021, %s3038 [#allocation3]
                %s3041 = scalar_lea.vmem %s3023, %s3039
              $region128: #{tpu_custom_call.1} parent=115 // loop_footer
                %s3027 = sadd.s32 %s3025, 1
              $region129: #{tpu_custom_call.1} parent=115 // loop_footer_branch
                %3024 = sbr.rel target = $region125
              $region130: #{tpu_custom_call.1} parent=115 // loop_exit
                _
            $region116: #{tpu_custom_call.1} parent=107 // pred_fallthru
              _
          $region108: #{tpu_custom_call.1} parent=103 // pred_fallthru
            _
          %3092 = vnop
        $region104: #{tpu_custom_call.1} parent=95 // pred_fallthru
          _
        // Predicated region
        $region153: #{tpu_custom_call.1} parent=95 // pred_check
          %p3093 = pneg %p221
        $region154: #{tpu_custom_call.1} parent=95 // pred_check_branch
          %3095 = sbr.rel (%p3093) target = $region156
        $region155: #{tpu_custom_call.1} parent=95 // pred_region
          %s3096 = smul.u32 2, %s20
          %s3097 = ssub.s32 3, %s3096
          %p3098 = scmp.lt.s32.totalorder %s3097, 2
          %s3099 = scalar_select %p3098, %s3097, 2
          %s3100 = smul.u32 384, %s3099
          %p3101 = scmp.ne.s32.totalorder 0, %s3100
          %s3102 = smul.addr %s3096, 8
          %s3103 = scalar_lea.vmem %s8, %s3102
          // Predicated region
          $region157: #{tpu_custom_call.1} parent=155 // pred_check
            %p3104 = pneg %p3101
          $region158: #{tpu_custom_call.1} parent=155 // pred_check_branch
            %3106 = sbr.rel (%p3104) target = $region160
          $region159: #{tpu_custom_call.1} parent=155 // pred_region
            // Predicated region
            $region161: #{tpu_custom_call.1} parent=159 // pred_check
              _
            $region162: #{tpu_custom_call.1} parent=159 // pred_check_branch
              %3108 = sbr.rel (0) target = $region164
            $region163: #{tpu_custom_call.1} parent=159 // pred_region
              // Predicated region
              $region183: #{tpu_custom_call.1} parent=163 // pred_check
                _
              $region184: #{tpu_custom_call.1} parent=163 // pred_check_branch
                %3171 = sbr.rel (0) target = $region186
              $region185: #{tpu_custom_call.1} parent=163 // pred_region
                %s3172 = sshrl.u32 %s3099, 1
                // While loop
                $region187: #{tpu_custom_call.1} parent=185 // loop_pre_header
                  _
                $region188: #{tpu_custom_call.1} parent=185 // loop_header
                  %s3174 = sphi 0, %s3176
                  %p3175 = scmp.ge.s32.totalorder %s3174, %s3172
                  %s3179 = sphi 0, %s3196
                  %s3180 = sphi %s2976, %s3199
                  %s3181 = sphi %s3103, %s3200
                $region189: #{tpu_custom_call.1} parent=185 // loop_header_branch
                  %3178 = sbr.rel (%p3175) target = $region193
                $region190: #{tpu_custom_call.1} parent=185 // loop_body
                  %v3182 = vld [vmem:[%s3180] sm:$0xff]
                  %3183 = vst [vmem:[%s3181] sm:$0xff] %v3182
                  %v3184 = vld [vmem:[%s3180 + $0x8] sm:$0xff]
                  %3185 = vst [vmem:[%s3181 + $0x8] sm:$0xff] %v3184
                  %v3186 = vld [vmem:[%s3180 + $0x10] sm:$0xff]
                  %3187 = vst [vmem:[%s3181 + $0x18] sm:$0xff] %v3186
                  %v3188 = vld [vmem:[%s3180 + $0x18] sm:$0xff]
                  %3189 = vst [vmem:[%s3181 + $0x20] sm:$0xff] %v3188
                  %v3190 = vld [vmem:[%s3180 + $0x20] sm:$0xff]
                  %3191 = vst [vmem:[%s3181 + $0x30] sm:$0xff] %v3190
                  %v3192 = vld [vmem:[%s3180 + $0x28] sm:$0xff]
                  %3193 = vst [vmem:[%s3181 + $0x38] sm:$0xff] %v3192
                  %s3194 = sadd.s32 1, %s3179
                  %p3195 = scmp.ge.s32.totalorder %s3194, %s3172
                  %s3196 = scalar_select %p3195, 0, %s3194
                  %s3197 = smul.u32 %s3196, 16
                  %s3198 = smul.u32 %s3196, 16
                  %s3199 = scalar_lea.vmem %s2976, %s3197 [#allocation4]
                  %s3200 = scalar_lea.vmem %s3103, %s3198
                $region191: #{tpu_custom_call.1} parent=185 // loop_footer
                  %s3176 = sadd.s32 %s3174, 1
                $region192: #{tpu_custom_call.1} parent=185 // loop_footer_branch
                  %3173 = sbr.rel target = $region188
                $region193: #{tpu_custom_call.1} parent=185 // loop_exit
                  _
                %s3201 = sshrl.u32 %s3099, 1
                %s3202 = sand.u32 %s3099, 1
                %s3203 = smul.u32 %s3201, 2
                %s3204 = smul.u32 8, %s3203
                %s3205 = scalar_lea.vmem %s2976, %s3204 [#allocation4]
                %s3206 = smul.u32 8, %s3203
                %s3207 = scalar_lea.vmem %s3103, %s3206
                // While loop
                $region194: #{tpu_custom_call.1} parent=185 // loop_pre_header
                  _
                $region195: #{tpu_custom_call.1} parent=185 // loop_header
                  %s3209 = sphi 0, %s3211
                  %p3210 = scmp.ge.s32.totalorder %s3209, %s3202
                  %s3214 = sphi 0, %s3225
                  %s3215 = sphi %s3205, %s3228
                  %s3216 = sphi %s3207, %s3229
                $region196: #{tpu_custom_call.1} parent=185 // loop_header_branch
                  %3213 = sbr.rel (%p3210) target = $region200
                $region197: #{tpu_custom_call.1} parent=185 // loop_body
                  %v3217 = vld [vmem:[%s3215] sm:$0xff]
                  %3218 = vst [vmem:[%s3216] sm:$0xff] %v3217
                  %v3219 = vld [vmem:[%s3215 + $0x10] sm:$0xff]
                  %3220 = vst [vmem:[%s3216 + $0x18] sm:$0xff] %v3219
                  %v3221 = vld [vmem:[%s3215 + $0x20] sm:$0xff]
                  %3222 = vst [vmem:[%s3216 + $0x30] sm:$0xff] %v3221
                  %s3223 = sadd.s32 1, %s3214
                  %p3224 = scmp.ge.s32.totalorder %s3223, %s3202
                  %s3225 = scalar_select %p3224, 0, %s3223
                  %s3226 = smul.u32 %s3225, 8
                  %s3227 = smul.u32 %s3225, 8
                  %s3228 = scalar_lea.vmem %s3205, %s3226 [#allocation4]
                  %s3229 = scalar_lea.vmem %s3207, %s3227
                $region198: #{tpu_custom_call.1} parent=185 // loop_footer
                  %s3211 = sadd.s32 %s3209, 1
                $region199: #{tpu_custom_call.1} parent=185 // loop_footer_branch
                  %3208 = sbr.rel target = $region195
                $region200: #{tpu_custom_call.1} parent=185 // loop_exit
                  _
              $region186: #{tpu_custom_call.1} parent=163 // pred_fallthru
                _
              // Predicated region
              $region201: #{tpu_custom_call.1} parent=163 // pred_check
                _
              $region202: #{tpu_custom_call.1} parent=163 // pred_check_branch
                %3231 = sbr.rel target = $region204
              $region203: #{tpu_custom_call.1} parent=163 // pred_region
                _
              $region204: #{tpu_custom_call.1} parent=163 // pred_fallthru
                _
            $region164: #{tpu_custom_call.1} parent=159 // pred_fallthru
              _
            // Predicated region
            $region165: #{tpu_custom_call.1} parent=159 // pred_check
              _
            $region166: #{tpu_custom_call.1} parent=159 // pred_check_branch
              %3110 = sbr.rel target = $region168
            $region167: #{tpu_custom_call.1} parent=159 // pred_region
              %s3112 = sshrl.u32 %s3099, 1
              // While loop
              $region169: #{tpu_custom_call.1} parent=167 // loop_pre_header
                _
              $region170: #{tpu_custom_call.1} parent=167 // loop_header
                %s3114 = sphi 0, %s3116
                %p3115 = scmp.ge.s32.totalorder %s3114, %s3112
                %s3119 = sphi 0, %s3136
                %s3120 = sphi %s2976, %s3139
                %s3121 = sphi %s3103, %s3140
              $region171: #{tpu_custom_call.1} parent=167 // loop_header_branch
                %3118 = sbr.rel (%p3115) target = $region175
              $region172: #{tpu_custom_call.1} parent=167 // loop_body
                %v3122 = vld [vmem:[%s3120] sm:$0xff]
                %3123 = vst [vmem:[%s3121] sm:$0xff] %v3122
                %v3124 = vld [vmem:[%s3120 + $0x8] sm:$0xff]
                %3125 = vst [vmem:[%s3121 + $0x8] sm:$0xff] %v3124
                %v3126 = vld [vmem:[%s3120 + $0x10] sm:$0xff]
                %3127 = vst [vmem:[%s3121 + $0x18] sm:$0xff] %v3126
                %v3128 = vld [vmem:[%s3120 + $0x18] sm:$0xff]
                %3129 = vst [vmem:[%s3121 + $0x20] sm:$0xff] %v3128
                %v3130 = vld [vmem:[%s3120 + $0x20] sm:$0xff]
                %3131 = vst [vmem:[%s3121 + $0x30] sm:$0xff] %v3130
                %v3132 = vld [vmem:[%s3120 + $0x28] sm:$0xff]
                %3133 = vst [vmem:[%s3121 + $0x38] sm:$0xff] %v3132
                %s3134 = sadd.s32 1, %s3119
                %p3135 = scmp.ge.s32.totalorder %s3134, %s3112
                %s3136 = scalar_select %p3135, 0, %s3134
                %s3137 = smul.u32 %s3136, 16
                %s3138 = smul.u32 %s3136, 16
                %s3139 = scalar_lea.vmem %s2976, %s3137 [#allocation4]
                %s3140 = scalar_lea.vmem %s3103, %s3138
              $region173: #{tpu_custom_call.1} parent=167 // loop_footer
                %s3116 = sadd.s32 %s3114, 1
              $region174: #{tpu_custom_call.1} parent=167 // loop_footer_branch
                %3113 = sbr.rel target = $region170
              $region175: #{tpu_custom_call.1} parent=167 // loop_exit
                _
              %s3141 = sshrl.u32 %s3099, 1
              %s3142 = sand.u32 %s3099, 1
              %s3143 = smul.u32 %s3141, 2
              %s3144 = smul.u32 8, %s3143
              %s3145 = scalar_lea.vmem %s2976, %s3144 [#allocation4]
              %s3146 = smul.u32 8, %s3143
              %s3147 = scalar_lea.vmem %s3103, %s3146
              // While loop
              $region176: #{tpu_custom_call.1} parent=167 // loop_pre_header
                _
              $region177: #{tpu_custom_call.1} parent=167 // loop_header
                %s3149 = sphi 0, %s3151
                %p3150 = scmp.ge.s32.totalorder %s3149, %s3142
                %s3154 = sphi 0, %s3165
                %s3155 = sphi %s3145, %s3168
                %s3156 = sphi %s3147, %s3169
              $region178: #{tpu_custom_call.1} parent=167 // loop_header_branch
                %3153 = sbr.rel (%p3150) target = $region182
              $region179: #{tpu_custom_call.1} parent=167 // loop_body
                %v3157 = vld [vmem:[%s3155] sm:$0xff]
                %3158 = vst [vmem:[%s3156] sm:$0xff] %v3157
                %v3159 = vld [vmem:[%s3155 + $0x10] sm:$0xff]
                %3160 = vst [vmem:[%s3156 + $0x18] sm:$0xff] %v3159
                %v3161 = vld [vmem:[%s3155 + $0x20] sm:$0xff]
                %3162 = vst [vmem:[%s3156 + $0x30] sm:$0xff] %v3161
                %s3163 = sadd.s32 1, %s3154
                %p3164 = scmp.ge.s32.totalorder %s3163, %s3142
                %s3165 = scalar_select %p3164, 0, %s3163
                %s3166 = smul.u32 %s3165, 8
                %s3167 = smul.u32 %s3165, 8
                %s3168 = scalar_lea.vmem %s3145, %s3166 [#allocation4]
                %s3169 = scalar_lea.vmem %s3147, %s3167
              $region180: #{tpu_custom_call.1} parent=167 // loop_footer
                %s3151 = sadd.s32 %s3149, 1
              $region181: #{tpu_custom_call.1} parent=167 // loop_footer_branch
                %3148 = sbr.rel target = $region177
              $region182: #{tpu_custom_call.1} parent=167 // loop_exit
                _
            $region168: #{tpu_custom_call.1} parent=159 // pred_fallthru
              _
          $region160: #{tpu_custom_call.1} parent=155 // pred_fallthru
            _
          %3232 = vnop
        $region156: #{tpu_custom_call.1} parent=95 // pred_fallthru
          _
      $region96: #{tpu_custom_call.1} parent=5 // pred_fallthru
        _
      %p3233 = scmp.le.s32.totalorder 2, %s15
      // Predicated region
      $region205: #{tpu_custom_call.1} parent=5 // pred_check
        %p3234 = pneg %p3233
      $region206: #{tpu_custom_call.1} parent=5 // pred_check_branch
        %3236 = sbr.rel (%p3234) target = $region208
      $region207: #{tpu_custom_call.1} parent=5 // pred_region
        %s3237 = ssub.s32 %s15, 2
        // Predicated region
        $region209: #{tpu_custom_call.1} parent=207 // pred_check
          %p3238 = pneg %p201
        $region210: #{tpu_custom_call.1} parent=207 // pred_check_branch
          %3240 = sbr.rel (%p3238) target = $region212
        $region211: #{tpu_custom_call.1} parent=207 // pred_region
          %s3241 = sand.u32 %s186, 1
          %s3242 = sand.u32 %s186, 1
          %s3243 = smul.addr %s3242, 16
          %s3244 = scalar_lea.vmem [#allocation3], %s3243
        $region212: #{tpu_custom_call.1} parent=207 // pred_fallthru
          _
        // Predicated region
        $region213: #{tpu_custom_call.1} parent=207 // pred_check
          %p3245 = pneg %p227
        $region214: #{tpu_custom_call.1} parent=207 // pred_check_branch
          %3247 = sbr.rel (%p3245) target = $region216
        $region215: #{tpu_custom_call.1} parent=207 // pred_region
          %s3248 = sand.u32 %s212, 1
          %s3249 = sand.u32 %s212, 1
          %s3250 = smul.addr %s3249, 48
          %s3251 = scalar_lea.vmem [#allocation4], %s3250
        $region216: #{tpu_custom_call.1} parent=207 // pred_fallthru
          _
      $region208: #{tpu_custom_call.1} parent=5 // pred_fallthru
        _
    $region6: #{tpu_custom_call.1} parent=1 // loop_footer
      %s19 = sadd.s32 1, %s15
    $region7: #{tpu_custom_call.1} parent=1 // loop_footer_branch
      %14 = sbr.rel target = $region3
    $region8: #{tpu_custom_call.1} parent=1 // loop_exit
      _

</llo_original>
